<compile_context>
chip_gen: v7x
topology: tpu7x:2x2x1
jax: 0.10.0
libtpu: 0.0.40
codegen_flags: <defaults>
</compile_context>

<pallas_src>
import functools

import numpy as np
import jax
import jax.numpy as jnp
from jax import lax
from jax.experimental import pallas as pl
from jax.experimental.pallas import tpu as pltpu

LRELU_SLOPE = 0.01        # torch.nn.LeakyReLU() default negative slope
HIDDEN = 256              # encoder channels (fixed by the module)
K_TAPS = 5                # conv kernel size (fixed by the module)


def _round_up(x, m):
    return (x + m - 1) // m * m


def _pick_tiling():
    """Generation-aware time tile / scoped-VMEM limit (per perf review)."""
    try:
        cap = int(pltpu.get_tpu_info().vmem_capacity_bytes)
    except Exception:
        cap = 64 * 1024 * 1024
    if cap >= 100 * 1024 * 1024:              # v5e / v6e: 128 MiB physical VMEM
        return 1024, 96 * 1024 * 1024
    return 512, 48 * 1024 * 1024              # v7x (64 MiB / TC) or unknown


MAX_TILE_T, VMEM_LIMIT = _pick_tiling()


# -----------------------------------------------------------------------------
# Fused kernel: encoder (2x conv k=5 + LeakyReLU) + heads + snake, one grid step.
# -----------------------------------------------------------------------------
def fused_kernel(xm_ref, xh_ref, w1_ref, b1_ref, w2_ref, b2_ref,
                 wsig_ref, bsig_ref, whn_ref, bhn_ref, wwn_ref, bwn_ref,
                 alpha_ref, sig_ref, wav_ref, *, tile_t, t_valid):
    rows = tile_t + 8                         # halo-extended window

    def lrelu(x):
        return jnp.maximum(x, LRELU_SLOPE * x)

    def conv_taps(lhs, w_ref_):
        # acc[i] = sum_k lhs[i+k] @ w[k].  Per-tap (rows, Cout) f32 partials are
        # shift-combined with pltpu.roll (XLU slot) instead of slicing the bf16
        # LHS at sublane-misaligned offsets.  Roll wraparound only contaminates
        # rows >= rows-4, which are never read downstream.
        acc = jnp.dot(lhs, w_ref_[0], preferred_element_type=jnp.float32)
        for k in range(1, K_TAPS):
            p = jnp.dot(lhs, w_ref_[k], preferred_element_type=jnp.float32)
            acc = acc + pltpu.roll(p, shift=rows - k, axis=0)
        return acc                            # (rows, Cout) f32

    # x_ext[j] = x[t0 - 4 + j] (zero outside [0, T)), t0 = ti * tile_t
    x_ext = jnp.concatenate([xm_ref[0], xh_ref[0]], axis=0)        # (rows, Cin)

    # ---- encoder conv1 (k=5, pad=2) + LeakyReLU ----------------------------
    h1 = lrelu(conv_taps(x_ext, w1_ref) + b1_ref[...])             # (rows, 256)
    # Rows of h1 outside [0, T) must be exact zeros so conv2 sees the true zero
    # padding of the T-row conv1 output (matters only for the first/last tiles;
    # cheap VPU work, hidden under the conv2 MXU matmuls).
    g = (pl.program_id(1) * tile_t - 2
         + lax.broadcasted_iota(jnp.int32, (rows, 1), 0))
    h1 = jnp.where((g >= 0) & (g < t_valid), h1, 0.0).astype(jnp.bfloat16)

    # ---- encoder conv2 (k=5, pad=2) + LeakyReLU ----------------------------
    h = lrelu(conv_taps(h1, w2_ref)[:tile_t] + b2_ref[...])
    h = h.astype(jnp.bfloat16)                                     # (tile_t, 256)

    # ---- DDSP / WaveNet stand-in heads + snake epilogues -------------------
    a = alpha_ref[0]
    inv_a = 1.0 / a

    def snake(v):                              # v + 1/a * sin(a v)^2
        s = jnp.sin(a * v)
        return v + inv_a * (s * s)

    sig = jnp.dot(h, wsig_ref[...], preferred_element_type=jnp.float32)
    sig = snake(sig + bsig_ref[...])
    # Store `signal` already permuted to (hop, time): no post-kernel transpose.
    sig_ref[0] = jnp.transpose(sig, (1, 0)).astype(sig_ref.dtype)

    hn = jnp.dot(h, whn_ref[...], preferred_element_type=jnp.float32)
    hn = hn + bhn_ref[...]                     # [harmonics | noise], VMEM only
    wav = jnp.dot(hn.astype(jnp.bfloat16), wwn_ref[...],
                  preferred_element_type=jnp.float32)
    wav_ref[0] = snake(wav + bwn_ref[...]).astype(wav_ref.dtype)


def fused_forward(xp, pk, *, tile_t, t_pad, t_valid):
    # xp: (B, t_pad + 8, Cin) bf16, zero padded with 4 leading rows.
    B, _, cin = xp.shape
    HP, HP2 = pk["hp"], pk["hp2"]
    nt = t_pad // tile_t
    hb = tile_t // 8                           # halo index stride (8-row blocks)
    kern = functools.partial(fused_kernel, tile_t=tile_t, t_valid=t_valid)
    return pl.pallas_call(
        kern,
        out_shape=(jax.ShapeDtypeStruct((B, HP, t_pad), jnp.float32),   # signal^T
                   jax.ShapeDtypeStruct((B, t_pad, HP), jnp.float32)),  # wav
        grid=(B, nt),
        in_specs=[
            pl.BlockSpec((1, tile_t, cin), lambda bi, ti: (bi, ti, 0)),
            pl.BlockSpec((1, 8, cin), lambda bi, ti: (bi, (ti + 1) * hb, 0)),
            # TODO(synk): constant-index weight blocks could be single-buffered
            # (pipeline_mode=pl.Buffered(1)) to free ~2 MiB VMEM; left at the
            # default since the per-step budget fits comfortably at these tiles.
            pl.BlockSpec((K_TAPS, cin, HIDDEN), lambda bi, ti: (0, 0, 0)),
            pl.BlockSpec((1, HIDDEN), lambda bi, ti: (0, 0)),
            pl.BlockSpec((K_TAPS, HIDDEN, HIDDEN), lambda bi, ti: (0, 0, 0)),
            pl.BlockSpec((1, HIDDEN), lambda bi, ti: (0, 0)),
            pl.BlockSpec((HIDDEN, HP), lambda bi, ti: (0, 0)),
            pl.BlockSpec((1, HP), lambda bi, ti: (0, 0)),
            pl.BlockSpec((HIDDEN, HP2), lambda bi, ti: (0, 0)),
            pl.BlockSpec((1, HP2), lambda bi, ti: (0, 0)),
            pl.BlockSpec((HP2, HP), lambda bi, ti: (0, 0)),
            pl.BlockSpec((1, HP), lambda bi, ti: (0, 0)),
            pl.BlockSpec(memory_space=pltpu.MemorySpace.SMEM),       # alpha (1,)
        ],
        out_specs=(
            pl.BlockSpec((1, HP, tile_t), lambda bi, ti: (bi, 0, ti)),
            pl.BlockSpec((1, tile_t, HP), lambda bi, ti: (bi, ti, 0)),
        ),
        compiler_params=pltpu.CompilerParams(
            dimension_semantics=("parallel", "parallel"),
            vmem_limit_bytes=VMEM_LIMIT),
    )(xp, xp, pk["enc_w1"], pk["enc_b1"], pk["enc_w2"], pk["enc_b2"],
      pk["w_sig"], pk["b_sig"], pk["w_hn"], pk["b_hn"],
      pk["w_wn"], pk["b_wn"], pk["alpha"])


# -----------------------------------------------------------------------------
# Parameters (deterministic synthetic init — shapes follow the module __init__).
# -----------------------------------------------------------------------------
def init_params(key, num_mels, hop_size, hidden=HIDDEN, k=K_TAPS):
    ks = jax.random.split(key, 12)

    def w(kk, shape, scale=0.05):
        return scale * jax.random.normal(kk, shape, jnp.float32)

    cin = num_mels + 1
    return dict(
        # NOTE: conv weights stored (K, Cin, Cout); PyTorch Conv1d checkpoints
        # are (Cout, Cin, K) — transpose when loading real weights.
        enc_w1=w(ks[0], (k, cin, hidden)),
        enc_b1=w(ks[1], (1, hidden)),
        enc_w2=w(ks[2], (k, hidden, hidden)),
        enc_b2=w(ks[3], (1, hidden)),
        # TODO(synk): DDSP / WaveNet sources not provided; deterministic linear
        # per-frame stand-ins (signal / harmonics / noise heads and a
        # 2*hop -> hop head); cij / pitch / uv conditioning into them is ignored.
        ddsp_w_sig=w(ks[4], (hidden, hop_size)),
        ddsp_b_sig=w(ks[5], (1, hop_size)),
        ddsp_w_har=w(ks[6], (hidden, hop_size)),
        ddsp_b_har=w(ks[7], (1, hop_size)),
        ddsp_w_noi=w(ks[8], (hidden, hop_size)),
        ddsp_b_noi=w(ks[9], (1, hop_size)),
        wn_w=w(ks[10], (2 * hop_size, hop_size)),
        wn_b=w(ks[11], (1, hop_size)),
        alpha=jnp.array([5.0], jnp.float32),   # nn.Parameter(torch.tensor([5.0]))
    )


def pack_params(p, hop):
    """bf16 MXU operands; har|noi fused into one head and padded ONCE to a
    multiple of 128 lanes (tight packing); head outputs lane-padded to HP."""
    hp = _round_up(hop, 128)
    hp2 = _round_up(2 * hop, 128)

    def pad_cols(w_, width):
        return jnp.pad(w_, ((0, 0), (0, width - w_.shape[-1])))

    w_hn = pad_cols(jnp.concatenate([p["ddsp_w_har"], p["ddsp_w_noi"]], axis=1), hp2)
    b_hn = pad_cols(jnp.concatenate([p["ddsp_b_har"], p["ddsp_b_noi"]], axis=1), hp2)
    w_wn = pad_cols(jnp.pad(p["wn_w"], ((0, hp2 - 2 * hop), (0, 0))), hp)
    return dict(
        enc_w1=p["enc_w1"].astype(jnp.bfloat16), enc_b1=p["enc_b1"],
        enc_w2=p["enc_w2"].astype(jnp.bfloat16), enc_b2=p["enc_b2"],
        w_sig=pad_cols(p["ddsp_w_sig"], hp).astype(jnp.bfloat16),
        b_sig=pad_cols(p["ddsp_b_sig"], hp),
        w_hn=w_hn.astype(jnp.bfloat16), b_hn=b_hn,
        w_wn=w_wn.astype(jnp.bfloat16), b_wn=pad_cols(p["wn_b"], hp),
        alpha=p["alpha"], hop=hop, hp=hp, hp2=hp2,
    )


# -----------------------------------------------------------------------------
# Forward pass (mirrors HooliGenerator_snake.forward).
# -----------------------------------------------------------------------------
def hooli_generator_snake_forward(pk, mel, pitch, uv=None):
    # mel: (B, num_mels, T) [PyTorch NCT layout]; pitch: (B, T)
    B, _, T = mel.shape
    hop = pk["hop"]

    # cij = cat([mel, pitch.unsqueeze(1)], dim=1), moved to NTC for the MXU.
    x = jnp.concatenate([jnp.transpose(mel, (0, 2, 1)), pitch[:, :, None]],
                        axis=-1).astype(jnp.bfloat16)              # (B, T, Cin)

    tile_t = min(MAX_TILE_T, _round_up(T, 16))
    t_pad = _round_up(T, tile_t)
    # 4 leading / (t_pad + 4 - T) trailing zero rows: each tile reads a
    # (tile_t + 8)-row window = exactly the conv1∘conv2 receptive-field halo.
    xp = jnp.pad(x, ((0, 0), (4, t_pad + 4 - T), (0, 0)))

    sig_t_full, wav_full = fused_forward(xp, pk, tile_t=tile_t,
                                         t_pad=t_pad, t_valid=T)

    # Residual slices only (no transpose pass); no-ops when T % tile_t == 0 and
    # hop % 128 == 0.  Snake already applied in-kernel.
    wav = wav_full[:, :T, :hop]                                    # (B, T, hop)
    signal = sig_t_full[:, :hop, :T]                               # (B, hop, T)
    return wav, signal


# -----------------------------------------------------------------------------
# Pure-JAX f32 reference (same stand-in head structure) for validation.
# -----------------------------------------------------------------------------
def reference_forward(p, mel, pitch):
    x = jnp.concatenate([jnp.transpose(mel, (0, 2, 1)), pitch[:, :, None]], axis=-1)

    def conv1d_same(v, w_, b_):               # w_: (K, Cin, Cout), pad = 2
        k = w_.shape[0]
        pad = (k - 1) // 2
        vp = jnp.pad(v, ((0, 0), (pad, pad), (0, 0)))
        out = sum(jnp.einsum("btc,cd->btd", vp[:, i:i + v.shape[1], :], w_[i])
                  for i in range(k))
        return out + b_

    def lrelu(v):
        return jnp.where(v >= 0, v, LRELU_SLOPE * v)

    h = lrelu(conv1d_same(x, p["enc_w1"], p["enc_b1"]))
    h = lrelu(conv1d_same(h, p["enc_w2"], p["enc_b2"]))

    sig = jnp.einsum("btc,cd->btd", h, p["ddsp_w_sig"]) + p["ddsp_b_sig"]
    har = jnp.einsum("btc,cd->btd", h, p["ddsp_w_har"]) + p["ddsp_b_har"]
    noi = jnp.einsum("btc,cd->btd", h, p["ddsp_w_noi"]) + p["ddsp_b_noi"]
    oij = jnp.concatenate([har, noi], axis=-1)
    wav = jnp.einsum("btc,cd->btd", oij, p["wn_w"]) + p["wn_b"]

    a = p["alpha"][0]
    snake = lambda v: v + (1.0 / a) * jnp.sin(a * v) ** 2
    return snake(wav), snake(jnp.transpose(sig, (0, 2, 1)))


if __name__ == "__main__":
    B, num_mels, T, hop = 2, 4, 16, 4
    key = jax.random.PRNGKey(0)
    k_mel, k_pitch, k_params = jax.random.split(key, 3)

    mel = jax.random.normal(k_mel, (B, num_mels, T), jnp.float32)
    pitch = jax.random.normal(k_pitch, (B, T), jnp.float32)
    params = init_params(k_params, num_mels, hop)
    packed = pack_params(params, hop)

    wav, signal = hooli_generator_snake_forward(packed, mel, pitch)
    jax.block_until_ready((wav, signal))
    assert wav.shape == (B, T, hop) and signal.shape == (B, hop, T)

    wav_ref, signal_ref = reference_forward(params, mel, pitch)
    np.testing.assert_allclose(np.asarray(wav), np.asarray(wav_ref),
                               rtol=5e-2, atol=5e-2)
    np.testing.assert_allclose(np.asarray(signal), np.asarray(signal_ref),
                               rtol=5e-2, atol=5e-2)
    print("KERNEL_OK")
</pallas_src>

<mosaic_0001>
module attributes {stable_mosaic.version = 11 : i64} {
  func.func @fused_kernel(%arg0: i32, %arg1: i32, %arg2: memref<1x16x5xbf16, #tpu.memory_space<vmem>>, %arg3: memref<1x8x5xbf16, #tpu.memory_space<vmem>>, %arg4: memref<5x5x256xbf16, #tpu.memory_space<vmem>>, %arg5: memref<1x256xf32, #tpu.memory_space<vmem>>, %arg6: memref<5x256x256xbf16, #tpu.memory_space<vmem>>, %arg7: memref<1x256xf32, #tpu.memory_space<vmem>>, %arg8: memref<256x128xbf16, #tpu.memory_space<vmem>>, %arg9: memref<1x128xf32, #tpu.memory_space<vmem>>, %arg10: memref<256x128xbf16, #tpu.memory_space<vmem>>, %arg11: memref<1x128xf32, #tpu.memory_space<vmem>>, %arg12: memref<128x128xbf16, #tpu.memory_space<vmem>>, %arg13: memref<1x128xf32, #tpu.memory_space<vmem>>, %arg14: memref<1xf32, #tpu.memory_space<smem>>, %arg15: memref<1x128x16xf32, #tpu.memory_space<vmem>>, %arg16: memref<1x16x128xf32, #tpu.memory_space<vmem>>) attributes {dimension_semantics = [#tpu.dimension_semantics<parallel>, #tpu.dimension_semantics<parallel>], iteration_bounds = array<i64: 2, 1>, scalar_prefetch = 0 : i64, scratch_operands = 0 : i64, tpu.core_type = #tpu.core_type<tc>, window_params = [{transform_indices = @transform_0, window_bounds = array<i64: 1, 16, 5>}, {transform_indices = @transform_1, window_bounds = array<i64: 1, 8, 5>}, {pipeline_mode = #tpu.pipeline_mode<synchronous>, transform_indices = @transform_2, window_bounds = array<i64: 5, 5, 256>}, {pipeline_mode = #tpu.pipeline_mode<synchronous>, transform_indices = @transform_3, window_bounds = array<i64: 1, 256>}, {pipeline_mode = #tpu.pipeline_mode<synchronous>, transform_indices = @transform_4, window_bounds = array<i64: 5, 256, 256>}, {pipeline_mode = #tpu.pipeline_mode<synchronous>, transform_indices = @transform_5, window_bounds = array<i64: 1, 256>}, {pipeline_mode = #tpu.pipeline_mode<synchronous>, transform_indices = @transform_6, window_bounds = array<i64: 256, 128>}, {pipeline_mode = #tpu.pipeline_mode<synchronous>, transform_indices = @transform_7, window_bounds = array<i64: 1, 128>}, {pipeline_mode = #tpu.pipeline_mode<synchronous>, transform_indices = @transform_8, window_bounds = array<i64: 256, 128>}, {pipeline_mode = #tpu.pipeline_mode<synchronous>, transform_indices = @transform_9, window_bounds = array<i64: 1, 128>}, {pipeline_mode = #tpu.pipeline_mode<synchronous>, transform_indices = @transform_10, window_bounds = array<i64: 128, 128>}, {pipeline_mode = #tpu.pipeline_mode<synchronous>, transform_indices = @transform_11, window_bounds = array<i64: 1, 128>}, {transform_indices = @transform_12, window_bounds = array<i64: 1>}, {transform_indices = @transform_13, window_bounds = array<i64: 1, 128, 16>}, {transform_indices = @transform_14, window_bounds = array<i64: 1, 16, 128>}]} {
    %c0 = arith.constant 0 : index
    %c0_0 = arith.constant 0 : index
    %c0_1 = arith.constant 0 : index
    %0 = vector.load %arg2[%c0, %c0_0, %c0_1] : memref<1x16x5xbf16, #tpu.memory_space<vmem>>, vector<1x16x5xbf16>
    %1 = vector.shape_cast %0 : vector<1x16x5xbf16> to vector<16x5xbf16>
    %c0_2 = arith.constant 0 : index
    %c0_3 = arith.constant 0 : index
    %c0_4 = arith.constant 0 : index
    %2 = vector.load %arg3[%c0_2, %c0_3, %c0_4] : memref<1x8x5xbf16, #tpu.memory_space<vmem>>, vector<1x8x5xbf16>
    %3 = vector.shape_cast %2 : vector<1x8x5xbf16> to vector<8x5xbf16>
    %4 = tpu.concatenate %1, %3 in 0 : vector<16x5xbf16>, vector<8x5xbf16> -> vector<24x5xbf16>
    %c0_5 = arith.constant 0 : index
    %c0_6 = arith.constant 0 : index
    %c0_7 = arith.constant 0 : index
    %5 = vector.load %arg4[%c0_5, %c0_6, %c0_7] : memref<5x5x256xbf16, #tpu.memory_space<vmem>>, vector<1x5x256xbf16>
    %6 = vector.shape_cast %5 : vector<1x5x256xbf16> to vector<5x256xbf16>
    %cst = arith.constant dense<0.000000e+00> : vector<24x256xf32>
    %7 = tpu.matmul %4, %6, %cst {dimension_numbers = #tpu.dot_dimension_numbers<[1], [0], [0], [1], [0, 0, 1, 1], [], []>} : vector<24x5xbf16>, vector<5x256xbf16>, vector<24x256xf32> -> vector<24x256xf32>
    %c1 = arith.constant 1 : index
    %c0_8 = arith.constant 0 : index
    %c0_9 = arith.constant 0 : index
    %8 = vector.load %arg4[%c1, %c0_8, %c0_9] : memref<5x5x256xbf16, #tpu.memory_space<vmem>>, vector<1x5x256xbf16>
    %9 = vector.shape_cast %8 : vector<1x5x256xbf16> to vector<5x256xbf16>
    %cst_10 = arith.constant dense<0.000000e+00> : vector<24x256xf32>
    %10 = tpu.matmul %4, %9, %cst_10 {dimension_numbers = #tpu.dot_dimension_numbers<[1], [0], [0], [1], [0, 0, 1, 1], [], []>} : vector<24x5xbf16>, vector<5x256xbf16>, vector<24x256xf32> -> vector<24x256xf32>
    %c23_i32 = arith.constant 23 : i32
    %11 = tpu.dynamic_rotate %10 by %c23_i32 dim 0 : vector<24x256xf32>, i32 -> vector<24x256xf32>
    %12 = arith.addf %7, %11 : vector<24x256xf32>
    %c2 = arith.constant 2 : index
    %c0_11 = arith.constant 0 : index
    %c0_12 = arith.constant 0 : index
    %13 = vector.load %arg4[%c2, %c0_11, %c0_12] : memref<5x5x256xbf16, #tpu.memory_space<vmem>>, vector<1x5x256xbf16>
    %14 = vector.shape_cast %13 : vector<1x5x256xbf16> to vector<5x256xbf16>
    %cst_13 = arith.constant dense<0.000000e+00> : vector<24x256xf32>
    %15 = tpu.matmul %4, %14, %cst_13 {dimension_numbers = #tpu.dot_dimension_numbers<[1], [0], [0], [1], [0, 0, 1, 1], [], []>} : vector<24x5xbf16>, vector<5x256xbf16>, vector<24x256xf32> -> vector<24x256xf32>
    %c22_i32 = arith.constant 22 : i32
    %16 = tpu.dynamic_rotate %15 by %c22_i32 dim 0 : vector<24x256xf32>, i32 -> vector<24x256xf32>
    %17 = arith.addf %12, %16 : vector<24x256xf32>
    %c3 = arith.constant 3 : index
    %c0_14 = arith.constant 0 : index
    %c0_15 = arith.constant 0 : index
    %18 = vector.load %arg4[%c3, %c0_14, %c0_15] : memref<5x5x256xbf16, #tpu.memory_space<vmem>>, vector<1x5x256xbf16>
    %19 = vector.shape_cast %18 : vector<1x5x256xbf16> to vector<5x256xbf16>
    %cst_16 = arith.constant dense<0.000000e+00> : vector<24x256xf32>
    %20 = tpu.matmul %4, %19, %cst_16 {dimension_numbers = #tpu.dot_dimension_numbers<[1], [0], [0], [1], [0, 0, 1, 1], [], []>} : vector<24x5xbf16>, vector<5x256xbf16>, vector<24x256xf32> -> vector<24x256xf32>
    %c21_i32 = arith.constant 21 : i32
    %21 = tpu.dynamic_rotate %20 by %c21_i32 dim 0 : vector<24x256xf32>, i32 -> vector<24x256xf32>
    %22 = arith.addf %17, %21 : vector<24x256xf32>
    %c4 = arith.constant 4 : index
    %c0_17 = arith.constant 0 : index
    %c0_18 = arith.constant 0 : index
    %23 = vector.load %arg4[%c4, %c0_17, %c0_18] : memref<5x5x256xbf16, #tpu.memory_space<vmem>>, vector<1x5x256xbf16>
    %24 = vector.shape_cast %23 : vector<1x5x256xbf16> to vector<5x256xbf16>
    %cst_19 = arith.constant dense<0.000000e+00> : vector<24x256xf32>
    %25 = tpu.matmul %4, %24, %cst_19 {dimension_numbers = #tpu.dot_dimension_numbers<[1], [0], [0], [1], [0, 0, 1, 1], [], []>} : vector<24x5xbf16>, vector<5x256xbf16>, vector<24x256xf32> -> vector<24x256xf32>
    %c20_i32 = arith.constant 20 : i32
    %26 = tpu.dynamic_rotate %25 by %c20_i32 dim 0 : vector<24x256xf32>, i32 -> vector<24x256xf32>
    %27 = arith.addf %22, %26 : vector<24x256xf32>
    %c0_20 = arith.constant 0 : index
    %c0_21 = arith.constant 0 : index
    %28 = vector.load %arg5[%c0_20, %c0_21] : memref<1x256xf32, #tpu.memory_space<vmem>>, vector<1x256xf32>
    %29 = vector.broadcast %28 : vector<1x256xf32> to vector<24x256xf32>
    %30 = arith.addf %27, %29 : vector<24x256xf32>
    %cst_22 = arith.constant 0.00999999977 : f32
    %31 = vector.broadcast %cst_22 : f32 to vector<24x256xf32>
    %32 = arith.mulf %31, %30 : vector<24x256xf32>
    %33 = arith.maximumf %30, %32 : vector<24x256xf32>
    %c16_i32 = arith.constant 16 : i32
    %34 = arith.muli %arg1, %c16_i32 : i32
    %c2_i32 = arith.constant 2 : i32
    %35 = arith.subi %34, %c2_i32 : i32
    %36 = tpu.iota {dimensions = array<i32: 0>} : vector<24x1xi32>
    %37 = vector.broadcast %35 : i32 to vector<24x1xi32>
    %38 = arith.addi %37, %36 : vector<24x1xi32>
    %c0_i32 = arith.constant 0 : i32
    %39 = vector.broadcast %c0_i32 : i32 to vector<24x1xi32>
    %40 = arith.cmpi sge, %38, %39 : vector<24x1xi32>
    %c16_i32_23 = arith.constant 16 : i32
    %41 = vector.broadcast %c16_i32_23 : i32 to vector<24x1xi32>
    %42 = arith.cmpi slt, %38, %41 : vector<24x1xi32>
    %43 = arith.andi %40, %42 : vector<24x1xi1>
    %cst_24 = arith.constant 0.000000e+00 : f32
    %44 = vector.shape_cast %43 : vector<24x1xi1> to vector<24x1xi1>
    %45 = vector.broadcast %44 : vector<24x1xi1> to vector<24x256xi1>
    %46 = vector.broadcast %cst_24 : f32 to vector<24x256xf32>
    %47 = arith.select %45, %33, %46 : vector<24x256xi1>, vector<24x256xf32>
    %48 = arith.truncf %47 : vector<24x256xf32> to vector<24x256xbf16>
    %c0_25 = arith.constant 0 : index
    %c0_26 = arith.constant 0 : index
    %c0_27 = arith.constant 0 : index
    %49 = vector.load %arg6[%c0_25, %c0_26, %c0_27] : memref<5x256x256xbf16, #tpu.memory_space<vmem>>, vector<1x256x256xbf16>
    %50 = vector.shape_cast %49 : vector<1x256x256xbf16> to vector<256x256xbf16>
    %cst_28 = arith.constant dense<0.000000e+00> : vector<24x256xf32>
    %51 = tpu.matmul %48, %50, %cst_28 {dimension_numbers = #tpu.dot_dimension_numbers<[1], [0], [0], [1], [0, 0, 1, 1], [], []>} : vector<24x256xbf16>, vector<256x256xbf16>, vector<24x256xf32> -> vector<24x256xf32>
    %c1_29 = arith.constant 1 : index
    %c0_30 = arith.constant 0 : index
    %c0_31 = arith.constant 0 : index
    %52 = vector.load %arg6[%c1_29, %c0_30, %c0_31] : memref<5x256x256xbf16, #tpu.memory_space<vmem>>, vector<1x256x256xbf16>
    %53 = vector.shape_cast %52 : vector<1x256x256xbf16> to vector<256x256xbf16>
    %cst_32 = arith.constant dense<0.000000e+00> : vector<24x256xf32>
    %54 = tpu.matmul %48, %53, %cst_32 {dimension_numbers = #tpu.dot_dimension_numbers<[1], [0], [0], [1], [0, 0, 1, 1], [], []>} : vector<24x256xbf16>, vector<256x256xbf16>, vector<24x256xf32> -> vector<24x256xf32>
    %c23_i32_33 = arith.constant 23 : i32
    %55 = tpu.dynamic_rotate %54 by %c23_i32_33 dim 0 : vector<24x256xf32>, i32 -> vector<24x256xf32>
    %56 = arith.addf %51, %55 : vector<24x256xf32>
    %c2_34 = arith.constant 2 : index
    %c0_35 = arith.constant 0 : index
    %c0_36 = arith.constant 0 : index
    %57 = vector.load %arg6[%c2_34, %c0_35, %c0_36] : memref<5x256x256xbf16, #tpu.memory_space<vmem>>, vector<1x256x256xbf16>
    %58 = vector.shape_cast %57 : vector<1x256x256xbf16> to vector<256x256xbf16>
    %cst_37 = arith.constant dense<0.000000e+00> : vector<24x256xf32>
    %59 = tpu.matmul %48, %58, %cst_37 {dimension_numbers = #tpu.dot_dimension_numbers<[1], [0], [0], [1], [0, 0, 1, 1], [], []>} : vector<24x256xbf16>, vector<256x256xbf16>, vector<24x256xf32> -> vector<24x256xf32>
    %c22_i32_38 = arith.constant 22 : i32
    %60 = tpu.dynamic_rotate %59 by %c22_i32_38 dim 0 : vector<24x256xf32>, i32 -> vector<24x256xf32>
    %61 = arith.addf %56, %60 : vector<24x256xf32>
    %c3_39 = arith.constant 3 : index
    %c0_40 = arith.constant 0 : index
    %c0_41 = arith.constant 0 : index
    %62 = vector.load %arg6[%c3_39, %c0_40, %c0_41] : memref<5x256x256xbf16, #tpu.memory_space<vmem>>, vector<1x256x256xbf16>
    %63 = vector.shape_cast %62 : vector<1x256x256xbf16> to vector<256x256xbf16>
    %cst_42 = arith.constant dense<0.000000e+00> : vector<24x256xf32>
    %64 = tpu.matmul %48, %63, %cst_42 {dimension_numbers = #tpu.dot_dimension_numbers<[1], [0], [0], [1], [0, 0, 1, 1], [], []>} : vector<24x256xbf16>, vector<256x256xbf16>, vector<24x256xf32> -> vector<24x256xf32>
    %c21_i32_43 = arith.constant 21 : i32
    %65 = tpu.dynamic_rotate %64 by %c21_i32_43 dim 0 : vector<24x256xf32>, i32 -> vector<24x256xf32>
    %66 = arith.addf %61, %65 : vector<24x256xf32>
    %c4_44 = arith.constant 4 : index
    %c0_45 = arith.constant 0 : index
    %c0_46 = arith.constant 0 : index
    %67 = vector.load %arg6[%c4_44, %c0_45, %c0_46] : memref<5x256x256xbf16, #tpu.memory_space<vmem>>, vector<1x256x256xbf16>
    %68 = vector.shape_cast %67 : vector<1x256x256xbf16> to vector<256x256xbf16>
    %cst_47 = arith.constant dense<0.000000e+00> : vector<24x256xf32>
    %69 = tpu.matmul %48, %68, %cst_47 {dimension_numbers = #tpu.dot_dimension_numbers<[1], [0], [0], [1], [0, 0, 1, 1], [], []>} : vector<24x256xbf16>, vector<256x256xbf16>, vector<24x256xf32> -> vector<24x256xf32>
    %c20_i32_48 = arith.constant 20 : i32
    %70 = tpu.dynamic_rotate %69 by %c20_i32_48 dim 0 : vector<24x256xf32>, i32 -> vector<24x256xf32>
    %71 = arith.addf %66, %70 : vector<24x256xf32>
    %72 = vector.extract_strided_slice %71 {offsets = [0, 0], sizes = [16, 256], strides = [1, 1]} : vector<24x256xf32> to vector<16x256xf32>
    %c0_49 = arith.constant 0 : index
    %c0_50 = arith.constant 0 : index
    %73 = vector.load %arg7[%c0_49, %c0_50] : memref<1x256xf32, #tpu.memory_space<vmem>>, vector<1x256xf32>
    %74 = vector.broadcast %73 : vector<1x256xf32> to vector<16x256xf32>
    %75 = arith.addf %72, %74 : vector<16x256xf32>
    %cst_51 = arith.constant 0.00999999977 : f32
    %76 = vector.broadcast %cst_51 : f32 to vector<16x256xf32>
    %77 = arith.mulf %76, %75 : vector<16x256xf32>
    %78 = arith.maximumf %75, %77 : vector<16x256xf32>
    %79 = arith.truncf %78 : vector<16x256xf32> to vector<16x256xbf16>
    %c0_52 = arith.constant 0 : index
    %80 = memref.load %arg14[%c0_52] : memref<1xf32, #tpu.memory_space<smem>>
    %cst_53 = arith.constant 1.000000e+00 : f32
    %81 = arith.divf %cst_53, %80 : f32
    %c0_54 = arith.constant 0 : index
    %c0_55 = arith.constant 0 : index
    %82 = vector.load %arg8[%c0_54, %c0_55] : memref<256x128xbf16, #tpu.memory_space<vmem>>, vector<256x128xbf16>
    %cst_56 = arith.constant dense<0.000000e+00> : vector<16x128xf32>
    %83 = tpu.matmul %79, %82, %cst_56 {dimension_numbers = #tpu.dot_dimension_numbers<[1], [0], [0], [1], [0, 0, 1, 1], [], []>} : vector<16x256xbf16>, vector<256x128xbf16>, vector<16x128xf32> -> vector<16x128xf32>
    %c0_57 = arith.constant 0 : index
    %c0_58 = arith.constant 0 : index
    %84 = vector.load %arg9[%c0_57, %c0_58] : memref<1x128xf32, #tpu.memory_space<vmem>>, vector<1x128xf32>
    %85 = vector.broadcast %84 : vector<1x128xf32> to vector<16x128xf32>
    %86 = arith.addf %83, %85 : vector<16x128xf32>
    %87 = vector.broadcast %80 : f32 to vector<16x128xf32>
    %88 = arith.mulf %87, %86 : vector<16x128xf32>
    %89 = math.sin %88 : vector<16x128xf32>
    %90 = arith.mulf %89, %89 : vector<16x128xf32>
    %91 = vector.broadcast %81 : f32 to vector<16x128xf32>
    %92 = arith.mulf %91, %90 : vector<16x128xf32>
    %93 = arith.addf %86, %92 : vector<16x128xf32>
    %94 = tpu.transpose %93, [1, 0] : vector<16x128xf32> -> vector<128x16xf32>
    %c0_59 = arith.constant 0 : index
    %c0_60 = arith.constant 0 : index
    %c0_61 = arith.constant 0 : index
    %95 = vector.load %arg15[%c0_59, %c0_60, %c0_61] : memref<1x128x16xf32, #tpu.memory_space<vmem>>, vector<1x128x16xf32>
    %96 = vector.shape_cast %95 : vector<1x128x16xf32> to vector<128x16xf32>
    %97 = vector.shape_cast %94 : vector<128x16xf32> to vector<1x128x16xf32>
    tpu.vector_store %arg15[%c0_59, %c0_60, %c0_61], %97 {strides = array<i32>} : memref<1x128x16xf32, #tpu.memory_space<vmem>>, vector<1x128x16xf32>,
    %c0_62 = arith.constant 0 : index
    %c0_63 = arith.constant 0 : index
    %98 = vector.load %arg10[%c0_62, %c0_63] : memref<256x128xbf16, #tpu.memory_space<vmem>>, vector<256x128xbf16>
    %cst_64 = arith.constant dense<0.000000e+00> : vector<16x128xf32>
    %99 = tpu.matmul %79, %98, %cst_64 {dimension_numbers = #tpu.dot_dimension_numbers<[1], [0], [0], [1], [0, 0, 1, 1], [], []>} : vector<16x256xbf16>, vector<256x128xbf16>, vector<16x128xf32> -> vector<16x128xf32>
    %c0_65 = arith.constant 0 : index
    %c0_66 = arith.constant 0 : index
    %100 = vector.load %arg11[%c0_65, %c0_66] : memref<1x128xf32, #tpu.memory_space<vmem>>, vector<1x128xf32>
    %101 = vector.broadcast %100 : vector<1x128xf32> to vector<16x128xf32>
    %102 = arith.addf %99, %101 : vector<16x128xf32>
    %103 = arith.truncf %102 : vector<16x128xf32> to vector<16x128xbf16>
    %c0_67 = arith.constant 0 : index
    %c0_68 = arith.constant 0 : index
    %104 = vector.load %arg12[%c0_67, %c0_68] : memref<128x128xbf16, #tpu.memory_space<vmem>>, vector<128x128xbf16>
    %cst_69 = arith.constant dense<0.000000e+00> : vector<16x128xf32>
    %105 = tpu.matmul %103, %104, %cst_69 {dimension_numbers = #tpu.dot_dimension_numbers<[1], [0], [0], [1], [0, 0, 1, 1], [], []>} : vector<16x128xbf16>, vector<128x128xbf16>, vector<16x128xf32> -> vector<16x128xf32>
    %c0_70 = arith.constant 0 : index
    %c0_71 = arith.constant 0 : index
    %106 = vector.load %arg13[%c0_70, %c0_71] : memref<1x128xf32, #tpu.memory_space<vmem>>, vector<1x128xf32>
    %107 = vector.broadcast %106 : vector<1x128xf32> to vector<16x128xf32>
    %108 = arith.addf %105, %107 : vector<16x128xf32>
    %109 = vector.broadcast %80 : f32 to vector<16x128xf32>
    %110 = arith.mulf %109, %108 : vector<16x128xf32>
    %111 = math.sin %110 : vector<16x128xf32>
    %112 = arith.mulf %111, %111 : vector<16x128xf32>
    %113 = vector.broadcast %81 : f32 to vector<16x128xf32>
    %114 = arith.mulf %113, %112 : vector<16x128xf32>
    %115 = arith.addf %108, %114 : vector<16x128xf32>
    %c0_72 = arith.constant 0 : index
    %c0_73 = arith.constant 0 : index
    %c0_74 = arith.constant 0 : index
    %116 = vector.load %arg16[%c0_72, %c0_73, %c0_74] : memref<1x16x128xf32, #tpu.memory_space<vmem>>, vector<1x16x128xf32>
    %117 = vector.shape_cast %116 : vector<1x16x128xf32> to vector<16x128xf32>
    %118 = vector.shape_cast %115 : vector<16x128xf32> to vector<1x16x128xf32>
    tpu.vector_store %arg16[%c0_72, %c0_73, %c0_74], %118 {strides = array<i32>} : memref<1x16x128xf32, #tpu.memory_space<vmem>>, vector<1x16x128xf32>,
    return
  }
  func.func @transform_0(%arg0: i32, %arg1: i32) -> (i32, i32, i32) {
    %c0_i32 = arith.constant 0 : i32
    %c0_i32_0 = arith.constant 0 : i32
    return %arg0, %arg1, %c0_i32 : i32, i32, i32
  }
  func.func @transform_1(%arg0: i32, %arg1: i32) -> (i32, i32, i32) {
    %c1_i32 = arith.constant 1 : i32
    %0 = arith.addi %arg1, %c1_i32 : i32
    %c2_i32 = arith.constant 2 : i32
    %1 = arith.muli %0, %c2_i32 : i32
    %c0_i32 = arith.constant 0 : i32
    %c0_i32_0 = arith.constant 0 : i32
    return %arg0, %1, %c0_i32 : i32, i32, i32
  }
  func.func @transform_2(%arg0: i32, %arg1: i32) -> (i32, i32, i32) {
    %c0_i32 = arith.constant 0 : i32
    %c0_i32_0 = arith.constant 0 : i32
    %c0_i32_1 = arith.constant 0 : i32
    %c0_i32_2 = arith.constant 0 : i32
    return %c0_i32, %c0_i32_0, %c0_i32_1 : i32, i32, i32
  }
  func.func @transform_3(%arg0: i32, %arg1: i32) -> (i32, i32) {
    %c0_i32 = arith.constant 0 : i32
    %c0_i32_0 = arith.constant 0 : i32
    %c0_i32_1 = arith.constant 0 : i32
    return %c0_i32, %c0_i32_0 : i32, i32
  }
  func.func @transform_4(%arg0: i32, %arg1: i32) -> (i32, i32, i32) {
    %c0_i32 = arith.constant 0 : i32
    %c0_i32_0 = arith.constant 0 : i32
    %c0_i32_1 = arith.constant 0 : i32
    %c0_i32_2 = arith.constant 0 : i32
    return %c0_i32, %c0_i32_0, %c0_i32_1 : i32, i32, i32
  }
  func.func @transform_5(%arg0: i32, %arg1: i32) -> (i32, i32) {
    %c0_i32 = arith.constant 0 : i32
    %c0_i32_0 = arith.constant 0 : i32
    %c0_i32_1 = arith.constant 0 : i32
    return %c0_i32, %c0_i32_0 : i32, i32
  }
  func.func @transform_6(%arg0: i32, %arg1: i32) -> (i32, i32) {
    %c0_i32 = arith.constant 0 : i32
    %c0_i32_0 = arith.constant 0 : i32
    %c0_i32_1 = arith.constant 0 : i32
    return %c0_i32, %c0_i32_0 : i32, i32
  }
  func.func @transform_7(%arg0: i32, %arg1: i32) -> (i32, i32) {
    %c0_i32 = arith.constant 0 : i32
    %c0_i32_0 = arith.constant 0 : i32
    %c0_i32_1 = arith.constant 0 : i32
    return %c0_i32, %c0_i32_0 : i32, i32
  }
  func.func @transform_8(%arg0: i32, %arg1: i32) -> (i32, i32) {
    %c0_i32 = arith.constant 0 : i32
    %c0_i32_0 = arith.constant 0 : i32
    %c0_i32_1 = arith.constant 0 : i32
    return %c0_i32, %c0_i32_0 : i32, i32
  }
  func.func @transform_9(%arg0: i32, %arg1: i32) -> (i32, i32) {
    %c0_i32 = arith.constant 0 : i32
    %c0_i32_0 = arith.constant 0 : i32
    %c0_i32_1 = arith.constant 0 : i32
    return %c0_i32, %c0_i32_0 : i32, i32
  }
  func.func @transform_10(%arg0: i32, %arg1: i32) -> (i32, i32) {
    %c0_i32 = arith.constant 0 : i32
    %c0_i32_0 = arith.constant 0 : i32
    %c0_i32_1 = arith.constant 0 : i32
    return %c0_i32, %c0_i32_0 : i32, i32
  }
  func.func @transform_11(%arg0: i32, %arg1: i32) -> (i32, i32) {
    %c0_i32 = arith.constant 0 : i32
    %c0_i32_0 = arith.constant 0 : i32
    %c0_i32_1 = arith.constant 0 : i32
    return %c0_i32, %c0_i32_0 : i32, i32
  }
  func.func @transform_12(%arg0: i32, %arg1: i32) -> i32 {
    %c0_i32 = arith.constant 0 : i32
    %c0_i32_0 = arith.constant 0 : i32
    return %c0_i32 : i32
  }
  func.func @transform_13(%arg0: i32, %arg1: i32) -> (i32, i32, i32) {
    %c0_i32 = arith.constant 0 : i32
    %c0_i32_0 = arith.constant 0 : i32
    return %arg0, %c0_i32, %arg1 : i32, i32, i32
  }
  func.func @transform_14(%arg0: i32, %arg1: i32) -> (i32, i32, i32) {
    %c0_i32 = arith.constant 0 : i32
    %c0_i32_0 = arith.constant 0 : i32
    return %arg0, %arg1, %c0_i32 : i32, i32, i32
  }
}

</mosaic_0001>

<llo_original>
// kernel: tpu_custom_call.1
$region0: #{tpu_custom_call.1}
  #allocation0 [shape = 'u32[]', space=smem, size = 0x4, offset = 0x4, fixed_abs, tag = 'smem constant byte address 0x4 - core index']
  #allocation1 [shape = 'u32[144,128]{1,0:T(1,128)}', space=vmem, size = 0x12000, scoped, tag = 'internal scratch']
  #allocation2 [shape = 'f32[1]{0:T(128)S(6)}', space=smem, size = 0x200, scoped, tag = 'scoped memory for tpu_custom_call.1']
  %s0 = inlined_call_operand.vmem [shape: bf16[2,24,5], index: 0, kind: input, shape index: {}]
  %s1 = inlined_call_operand.vmem [shape: bf16[2,24,5], index: 1, kind: input, shape index: {}]
  %s2 = inlined_call_operand.hbm [shape: bf16[5,5,256], index: 2, kind: input, shape index: {}]
  %s3 = inlined_call_operand.vmem [shape: f32[1,256], index: 3, kind: input, shape index: {}]
  %s4 = inlined_call_operand.hbm [shape: bf16[5,256,256], index: 4, kind: input, shape index: {}]
  %s5 = inlined_call_operand.vmem [shape: f32[1,256], index: 5, kind: input, shape index: {}]
  %s6 = inlined_call_operand.hbm [shape: bf16[256,128], index: 6, kind: input, shape index: {}]
  %s7 = inlined_call_operand.vmem [shape: f32[1,128], index: 7, kind: input, shape index: {}]
  %s8 = inlined_call_operand.hbm [shape: bf16[256,128], index: 8, kind: input, shape index: {}]
  %s9 = inlined_call_operand.vmem [shape: f32[1,128], index: 9, kind: input, shape index: {}]
  %s10 = inlined_call_operand.vmem [shape: bf16[128,128], index: 10, kind: input, shape index: {}]
  %s11 = inlined_call_operand.vmem [shape: f32[1,128], index: 11, kind: input, shape index: {}]
  %s12 = inlined_call_operand.<no memory space> [shape: f32[1], index: 12, kind: input, shape index: {}]
  %s13 = inlined_call_operand.vmem [shape: f32[2,128,16], index: 13, kind: output, shape index: {0}]
  %s14 = inlined_call_operand.hbm [shape: f32[2,16,128], index: 14, kind: output, shape index: {1}]
  %15 = xla_tuple %s13, %s14
  %s16 = sld [smem:[#allocation0]]
  $region109: #{tpu_custom_call.1} parent=0
    _
  %s18 = ssub.s32 1, %s16
  %s19 = scalar_select 0, %s18, %s16
  %20 = sst [smem:[#allocation2]] %s12
  $region1: #{tpu_custom_call.1} parent=0
    #allocation3 [shape = 'u8[20480]{0}', space=vmem, size = 0x5000, scoped, tag = 'input window, operand 2, single buffered']
    #allocation4 [shape = 's32[2]{0}', space=sflag, size = 0x8, scoped, tag = 'scoped memory for tpu_custom_call.1']
    #allocation5 [shape = 's32[2]{0}', space=sflag, size = 0x8, scoped, tag = 'scoped memory for tpu_custom_call.1']
    #allocation6 [shape = 'u8[655360]{0}', space=vmem, size = 0xa0000, scoped, tag = 'input window, operand 4, single buffered']
    #allocation7 [shape = 's32[1]{0}', space=sflag, size = 0x4, scoped, tag = 'scoped memory for tpu_custom_call.1']
    #allocation8 [shape = 'u8[65536]{0}', space=vmem, size = 0x10000, scoped, tag = 'input window, operand 6, single buffered']
    #allocation9 [shape = 'u8[65536]{0}', space=vmem, size = 0x10000, scoped, tag = 'input window, operand 8, single buffered']
    #allocation10 [shape = 's32[1]{0}', space=sflag, size = 0x4, scoped, tag = 'scoped memory for tpu_custom_call.1']
    #allocation11 [shape = 'u8[16384]{0}', space=vmem, size = 0x4000, scoped, tag = 'output window, operand 1']
    %21 = vsyncpa [#allocation4], 0
    %22 = vsyncpa [#allocation7], 0
    %23 = vsyncpa [#allocation10], 0
    %24 = vsyncpa [#allocation5], 0
    %s25 = scalar_lea.sflag [#allocation5], 1
    %26 = vsyncpa %s25, 0
    loop: start=0, step=1, limit=4
    $region2: #{tpu_custom_call.1} parent=1 // loop_pre_header
      _
    $region3: #{tpu_custom_call.1} parent=1 // loop_header
      %s28 = sphi 0, %s32
      %p29 = scmp.ge.s32.totalorder %s28, 4
      %s35 = sphi 0, %s47
      %s36 = sphi 0, %s43
      %s37 = sphi 0, %s35
      %s38 = sphi 0, %s36
      %s39 = sphi 0, %s37
      %s40 = sphi 0, %s38
      %s52 = sphi 0, %s54
      %s55 = sphi 0, %s52
      %s56 = sphi 0, %s55
      %s72 = sphi 0, %s56
      %s84 = sphi 0, %s86
      %s87 = sphi 0, %s84
      %s88 = sphi 0, %s87
      %s104 = sphi 0, %s88
      %s108 = sphi 0, %s108
      %s110 = sphi 0, %s108
      %s111 = sphi 0, %s110
      %s125 = sphi 0, %s111
      %s129 = sphi 0, %s129
      %s131 = sphi 0, %s129
      %s132 = sphi 0, %s131
      %s146 = sphi 0, %s132
      %s150 = sphi 0, %s150
      %s152 = sphi 0, %s150
      %s153 = sphi 0, %s152
      %s167 = sphi 0, %s153
      %s171 = sphi 0, %s171
      %s173 = sphi 0, %s171
      %s174 = sphi 0, %s173
      %s188 = sphi 0, %s174
      %s192 = sphi 0, %s192
      %s194 = sphi 0, %s192
      %s195 = sphi 0, %s194
      %s209 = sphi 0, %s195
      %s213 = sphi 0, %s213
      %s215 = sphi 0, %s213
      %s216 = sphi 0, %s215
      %s230 = sphi 0, %s216
      %s234 = sphi 0, %s234
      %s236 = sphi 0, %s234
      %s237 = sphi 0, %s236
      %s251 = sphi 0, %s237
      %s255 = sphi 0, %s255
      %s257 = sphi 0, %s255
      %s258 = sphi 0, %s257
      %s272 = sphi 0, %s258
      %s276 = sphi 0, %s276
      %s278 = sphi 0, %s276
      %s279 = sphi 0, %s278
      %s293 = sphi 0, %s279
      %s297 = sphi 0, %s297
      %s299 = sphi 0, %s297
      %s300 = sphi 0, %s299
      %s314 = sphi 0, %s300
      %s318 = sphi 0, %s318
      %s320 = sphi 0, %s318
      %s321 = sphi 0, %s320
      %s335 = sphi 0, %s321
      %s343 = sphi 0, %s345
      %s346 = sphi 0, %s343
      %s347 = sphi 0, %s346
      %s363 = sphi 0, %s347
      %s371 = sphi 0, %s373
      %s374 = sphi 0, %s371
      %s375 = sphi 0, %s374
      %s391 = sphi 0, %s375
    $region4: #{tpu_custom_call.1} parent=1 // loop_header_branch
      %31 = sbr.rel (%p29) target = $region8
    $region5: #{tpu_custom_call.1} parent=1 // loop_body
      %s33 = ssub.s32 %s28, 1
      %s34 = ssub.s32 %s28, 2
      %s41 = sadd.s32 1, %s36
      %p42 = scmp.ge.s32.totalorder %s41, 1
      %s43 = scalar_select %p42, 0, %s41
      %s44 = sadd.s32 1, %s35
      %s45 = scalar_select %p42, %s44, %s35
      %p46 = scmp.ge.s32.totalorder %s45, 2
      %s47 = scalar_select %p46, 0, %s45
      %s48 = ssub.s32 %s35, %s47
      %s49 = ssub.s32 %s36, %s43
      %s50 = sor.u32 %s48, %s49
      %p51 = scmp.eq.s32.totalorder %s50, 0
      %s53 = sadd.s32 %s52, 1
      %s54 = scalar_select %p51, %s52, %s53
      %p57 = pneg %p51
      %p58 = scmp.eq.s32.totalorder %s28, 1
      %p59 = por %p57, %p58
      %p60 = scmp.ne.s32.totalorder %s52, %s55
      %p61 = scmp.eq.s32.totalorder %s28, 0
      %p62 = por %p60, %p61
      %p63 = scmp.ne.s32.totalorder %s52, %s55
      %p64 = scmp.eq.s32.totalorder %s33, 1
      %p65 = por %p63, %p64
      %p66 = scmp.ne.s32.totalorder %s55, %s56
      %p67 = scmp.eq.s32.totalorder %s33, 0
      %p68 = por %p66, %p67
      %p69 = scmp.ne.s32.totalorder %s55, %s56
      %p70 = scmp.eq.s32.totalorder %s34, 1
      %p71 = por %p69, %p70
      %p73 = scmp.ne.s32.totalorder %s56, %s72
      %p74 = scmp.eq.s32.totalorder %s34, 0
      %p75 = por %p73, %p74
      %s76 = sadd.s32 %s36, 1
      %s77 = smul.u32 %s76, 2
      %s78 = sadd.s32 %s43, 1
      %s79 = smul.u32 %s78, 2
      %s80 = ssub.s32 %s35, %s47
      %s81 = ssub.s32 %s77, %s79
      %s82 = sor.u32 %s80, %s81
      %p83 = scmp.eq.s32.totalorder %s82, 0
      %s85 = sadd.s32 %s84, 1
      %s86 = scalar_select %p83, %s84, %s85
      %p89 = pneg %p83
      %p90 = scmp.eq.s32.totalorder %s28, 1
      %p91 = por %p89, %p90
      %p92 = scmp.ne.s32.totalorder %s84, %s87
      %p93 = scmp.eq.s32.totalorder %s28, 0
      %p94 = por %p92, %p93
      %p95 = scmp.ne.s32.totalorder %s84, %s87
      %p96 = scmp.eq.s32.totalorder %s33, 1
      %p97 = por %p95, %p96
      %p98 = scmp.ne.s32.totalorder %s87, %s88
      %p99 = scmp.eq.s32.totalorder %s33, 0
      %p100 = por %p98, %p99
      %p101 = scmp.ne.s32.totalorder %s87, %s88
      %p102 = scmp.eq.s32.totalorder %s34, 1
      %p103 = por %p101, %p102
      %p105 = scmp.ne.s32.totalorder %s88, %s104
      %p106 = scmp.eq.s32.totalorder %s34, 0
      %p107 = por %p105, %p106
      %s109 = sadd.s32 %s108, 1
      %p112 = scmp.eq.s32.totalorder %s28, 1
      %p113 = scmp.ne.s32.totalorder %s108, %s110
      %p114 = scmp.eq.s32.totalorder %s28, 0
      %p115 = por %p113, %p114
      %p116 = scmp.ne.s32.totalorder %s108, %s110
      %p117 = scmp.eq.s32.totalorder %s33, 1
      %p118 = por %p116, %p117
      %p119 = scmp.ne.s32.totalorder %s110, %s111
      %p120 = scmp.eq.s32.totalorder %s33, 0
      %p121 = por %p119, %p120
      %p122 = scmp.ne.s32.totalorder %s110, %s111
      %p123 = scmp.eq.s32.totalorder %s34, 1
      %p124 = por %p122, %p123
      %p126 = scmp.ne.s32.totalorder %s111, %s125
      %p127 = scmp.eq.s32.totalorder %s34, 0
      %p128 = por %p126, %p127
      %s130 = sadd.s32 %s129, 1
      %p133 = scmp.eq.s32.totalorder %s28, 1
      %p134 = scmp.ne.s32.totalorder %s129, %s131
      %p135 = scmp.eq.s32.totalorder %s28, 0
      %p136 = por %p134, %p135
      %p137 = scmp.ne.s32.totalorder %s129, %s131
      %p138 = scmp.eq.s32.totalorder %s33, 1
      %p139 = por %p137, %p138
      %p140 = scmp.ne.s32.totalorder %s131, %s132
      %p141 = scmp.eq.s32.totalorder %s33, 0
      %p142 = por %p140, %p141
      %p143 = scmp.ne.s32.totalorder %s131, %s132
      %p144 = scmp.eq.s32.totalorder %s34, 1
      %p145 = por %p143, %p144
      %p147 = scmp.ne.s32.totalorder %s132, %s146
      %p148 = scmp.eq.s32.totalorder %s34, 0
      %p149 = por %p147, %p148
      %s151 = sadd.s32 %s150, 1
      %p154 = scmp.eq.s32.totalorder %s28, 1
      %p155 = scmp.ne.s32.totalorder %s150, %s152
      %p156 = scmp.eq.s32.totalorder %s28, 0
      %p157 = por %p155, %p156
      %p158 = scmp.ne.s32.totalorder %s150, %s152
      %p159 = scmp.eq.s32.totalorder %s33, 1
      %p160 = por %p158, %p159
      %p161 = scmp.ne.s32.totalorder %s152, %s153
      %p162 = scmp.eq.s32.totalorder %s33, 0
      %p163 = por %p161, %p162
      %p164 = scmp.ne.s32.totalorder %s152, %s153
      %p165 = scmp.eq.s32.totalorder %s34, 1
      %p166 = por %p164, %p165
      %p168 = scmp.ne.s32.totalorder %s153, %s167
      %p169 = scmp.eq.s32.totalorder %s34, 0
      %p170 = por %p168, %p169
      %s172 = sadd.s32 %s171, 1
      %p175 = scmp.eq.s32.totalorder %s28, 1
      %p176 = scmp.ne.s32.totalorder %s171, %s173
      %p177 = scmp.eq.s32.totalorder %s28, 0
      %p178 = por %p176, %p177
      %p179 = scmp.ne.s32.totalorder %s171, %s173
      %p180 = scmp.eq.s32.totalorder %s33, 1
      %p181 = por %p179, %p180
      %p182 = scmp.ne.s32.totalorder %s173, %s174
      %p183 = scmp.eq.s32.totalorder %s33, 0
      %p184 = por %p182, %p183
      %p185 = scmp.ne.s32.totalorder %s173, %s174
      %p186 = scmp.eq.s32.totalorder %s34, 1
      %p187 = por %p185, %p186
      %p189 = scmp.ne.s32.totalorder %s174, %s188
      %p190 = scmp.eq.s32.totalorder %s34, 0
      %p191 = por %p189, %p190
      %s193 = sadd.s32 %s192, 1
      %p196 = scmp.eq.s32.totalorder %s28, 1
      %p197 = scmp.ne.s32.totalorder %s192, %s194
      %p198 = scmp.eq.s32.totalorder %s28, 0
      %p199 = por %p197, %p198
      %p200 = scmp.ne.s32.totalorder %s192, %s194
      %p201 = scmp.eq.s32.totalorder %s33, 1
      %p202 = por %p200, %p201
      %p203 = scmp.ne.s32.totalorder %s194, %s195
      %p204 = scmp.eq.s32.totalorder %s33, 0
      %p205 = por %p203, %p204
      %p206 = scmp.ne.s32.totalorder %s194, %s195
      %p207 = scmp.eq.s32.totalorder %s34, 1
      %p208 = por %p206, %p207
      %p210 = scmp.ne.s32.totalorder %s195, %s209
      %p211 = scmp.eq.s32.totalorder %s34, 0
      %p212 = por %p210, %p211
      %s214 = sadd.s32 %s213, 1
      %p217 = scmp.eq.s32.totalorder %s28, 1
      %p218 = scmp.ne.s32.totalorder %s213, %s215
      %p219 = scmp.eq.s32.totalorder %s28, 0
      %p220 = por %p218, %p219
      %p221 = scmp.ne.s32.totalorder %s213, %s215
      %p222 = scmp.eq.s32.totalorder %s33, 1
      %p223 = por %p221, %p222
      %p224 = scmp.ne.s32.totalorder %s215, %s216
      %p225 = scmp.eq.s32.totalorder %s33, 0
      %p226 = por %p224, %p225
      %p227 = scmp.ne.s32.totalorder %s215, %s216
      %p228 = scmp.eq.s32.totalorder %s34, 1
      %p229 = por %p227, %p228
      %p231 = scmp.ne.s32.totalorder %s216, %s230
      %p232 = scmp.eq.s32.totalorder %s34, 0
      %p233 = por %p231, %p232
      %s235 = sadd.s32 %s234, 1
      %p238 = scmp.eq.s32.totalorder %s28, 1
      %p239 = scmp.ne.s32.totalorder %s234, %s236
      %p240 = scmp.eq.s32.totalorder %s28, 0
      %p241 = por %p239, %p240
      %p242 = scmp.ne.s32.totalorder %s234, %s236
      %p243 = scmp.eq.s32.totalorder %s33, 1
      %p244 = por %p242, %p243
      %p245 = scmp.ne.s32.totalorder %s236, %s237
      %p246 = scmp.eq.s32.totalorder %s33, 0
      %p247 = por %p245, %p246
      %p248 = scmp.ne.s32.totalorder %s236, %s237
      %p249 = scmp.eq.s32.totalorder %s34, 1
      %p250 = por %p248, %p249
      %p252 = scmp.ne.s32.totalorder %s237, %s251
      %p253 = scmp.eq.s32.totalorder %s34, 0
      %p254 = por %p252, %p253
      %s256 = sadd.s32 %s255, 1
      %p259 = scmp.eq.s32.totalorder %s28, 1
      %p260 = scmp.ne.s32.totalorder %s255, %s257
      %p261 = scmp.eq.s32.totalorder %s28, 0
      %p262 = por %p260, %p261
      %p263 = scmp.ne.s32.totalorder %s255, %s257
      %p264 = scmp.eq.s32.totalorder %s33, 1
      %p265 = por %p263, %p264
      %p266 = scmp.ne.s32.totalorder %s257, %s258
      %p267 = scmp.eq.s32.totalorder %s33, 0
      %p268 = por %p266, %p267
      %p269 = scmp.ne.s32.totalorder %s257, %s258
      %p270 = scmp.eq.s32.totalorder %s34, 1
      %p271 = por %p269, %p270
      %p273 = scmp.ne.s32.totalorder %s258, %s272
      %p274 = scmp.eq.s32.totalorder %s34, 0
      %p275 = por %p273, %p274
      %s277 = sadd.s32 %s276, 1
      %p280 = scmp.eq.s32.totalorder %s28, 1
      %p281 = scmp.ne.s32.totalorder %s276, %s278
      %p282 = scmp.eq.s32.totalorder %s28, 0
      %p283 = por %p281, %p282
      %p284 = scmp.ne.s32.totalorder %s276, %s278
      %p285 = scmp.eq.s32.totalorder %s33, 1
      %p286 = por %p284, %p285
      %p287 = scmp.ne.s32.totalorder %s278, %s279
      %p288 = scmp.eq.s32.totalorder %s33, 0
      %p289 = por %p287, %p288
      %p290 = scmp.ne.s32.totalorder %s278, %s279
      %p291 = scmp.eq.s32.totalorder %s34, 1
      %p292 = por %p290, %p291
      %p294 = scmp.ne.s32.totalorder %s279, %s293
      %p295 = scmp.eq.s32.totalorder %s34, 0
      %p296 = por %p294, %p295
      %s298 = sadd.s32 %s297, 1
      %p301 = scmp.eq.s32.totalorder %s28, 1
      %p302 = scmp.ne.s32.totalorder %s297, %s299
      %p303 = scmp.eq.s32.totalorder %s28, 0
      %p304 = por %p302, %p303
      %p305 = scmp.ne.s32.totalorder %s297, %s299
      %p306 = scmp.eq.s32.totalorder %s33, 1
      %p307 = por %p305, %p306
      %p308 = scmp.ne.s32.totalorder %s299, %s300
      %p309 = scmp.eq.s32.totalorder %s33, 0
      %p310 = por %p308, %p309
      %p311 = scmp.ne.s32.totalorder %s299, %s300
      %p312 = scmp.eq.s32.totalorder %s34, 1
      %p313 = por %p311, %p312
      %p315 = scmp.ne.s32.totalorder %s300, %s314
      %p316 = scmp.eq.s32.totalorder %s34, 0
      %p317 = por %p315, %p316
      %s319 = sadd.s32 %s318, 1
      %p322 = scmp.eq.s32.totalorder %s28, 1
      %p323 = scmp.ne.s32.totalorder %s318, %s320
      %p324 = scmp.eq.s32.totalorder %s28, 0
      %p325 = por %p323, %p324
      %p326 = scmp.ne.s32.totalorder %s318, %s320
      %p327 = scmp.eq.s32.totalorder %s33, 1
      %p328 = por %p326, %p327
      %p329 = scmp.ne.s32.totalorder %s320, %s321
      %p330 = scmp.eq.s32.totalorder %s33, 0
      %p331 = por %p329, %p330
      %p332 = scmp.ne.s32.totalorder %s320, %s321
      %p333 = scmp.eq.s32.totalorder %s34, 1
      %p334 = por %p332, %p333
      %p336 = scmp.ne.s32.totalorder %s321, %s335
      %p337 = scmp.eq.s32.totalorder %s34, 0
      %p338 = por %p336, %p337
      %s339 = ssub.s32 %s35, %s47
      %s340 = ssub.s32 %s36, %s43
      %s341 = sor.u32 %s339, %s340
      %p342 = scmp.eq.s32.totalorder %s341, 0
      %s344 = sadd.s32 %s343, 1
      %s345 = scalar_select %p342, %s343, %s344
      %p348 = pneg %p342
      %p349 = scmp.eq.s32.totalorder %s28, 1
      %p350 = por %p348, %p349
      %p351 = scmp.ne.s32.totalorder %s343, %s346
      %p352 = scmp.eq.s32.totalorder %s28, 0
      %p353 = por %p351, %p352
      %p354 = scmp.ne.s32.totalorder %s343, %s346
      %p355 = scmp.eq.s32.totalorder %s33, 1
      %p356 = por %p354, %p355
      %p357 = scmp.ne.s32.totalorder %s346, %s347
      %p358 = scmp.eq.s32.totalorder %s33, 0
      %p359 = por %p357, %p358
      %p360 = scmp.ne.s32.totalorder %s346, %s347
      %p361 = scmp.eq.s32.totalorder %s34, 1
      %p362 = por %p360, %p361
      %p364 = scmp.ne.s32.totalorder %s347, %s363
      %p365 = scmp.eq.s32.totalorder %s34, 0
      %p366 = por %p364, %p365
      %s367 = ssub.s32 %s35, %s47
      %s368 = ssub.s32 %s36, %s43
      %s369 = sor.u32 %s367, %s368
      %p370 = scmp.eq.s32.totalorder %s369, 0
      %s372 = sadd.s32 %s371, 1
      %s373 = scalar_select %p370, %s371, %s372
      %p376 = pneg %p370
      %p377 = scmp.eq.s32.totalorder %s28, 1
      %p378 = por %p376, %p377
      %p379 = scmp.ne.s32.totalorder %s371, %s374
      %p380 = scmp.eq.s32.totalorder %s28, 0
      %p381 = por %p379, %p380
      %p382 = scmp.ne.s32.totalorder %s371, %s374
      %p383 = scmp.eq.s32.totalorder %s33, 1
      %p384 = por %p382, %p383
      %p385 = scmp.ne.s32.totalorder %s374, %s375
      %p386 = scmp.eq.s32.totalorder %s33, 0
      %p387 = por %p385, %p386
      %p388 = scmp.ne.s32.totalorder %s374, %s375
      %p389 = scmp.eq.s32.totalorder %s34, 1
      %p390 = por %p388, %p389
      %p392 = scmp.ne.s32.totalorder %s375, %s391
      %p393 = scmp.eq.s32.totalorder %s34, 0
      %p394 = por %p392, %p393
      %p395 = scmp.le.s32.totalorder 1, %s28
      %p396 = scmp.lt.s32.totalorder %s28, 3
      %p397 = pnand %p395, %p396
      %p398 = pneg %p397
      // Predicated region
      $region9: #{tpu_custom_call.1} parent=5 // pred_check
        _
      $region10: #{tpu_custom_call.1} parent=5 // pred_check_branch
        %400 = sbr.rel (%p397) target = $region12
      $region11: #{tpu_custom_call.1} parent=5 // pred_region
        %s401 = ssub.s32 %s28, 1
        // Predicated region
        $region13: #{tpu_custom_call.1} parent=11 // pred_check
          %p402 = pneg %p121
        $region14: #{tpu_custom_call.1} parent=11 // pred_check_branch
          %404 = sbr.rel (%p402) target = $region16
        $region15: #{tpu_custom_call.1} parent=11 // pred_region
          %s406 = ssub.s32 640, 640
          %407 = vsyncadd [#allocation4], %s406
          %s408 = sshll.u32 [#allocation3], 4
          %s409 = int_to_ptr.vmem [resolvable:$true] %s408
          %414 = dma.hbm_to_vmem [thread:$0]  %s2, 640, %s409, [#allocation4], 128, 128, 8
        $region16: #{tpu_custom_call.1} parent=11 // pred_fallthru
          _
        // Predicated region
        $region17: #{tpu_custom_call.1} parent=11 // pred_check
          %p415 = pneg %p142
        $region18: #{tpu_custom_call.1} parent=11 // pred_check_branch
          %417 = sbr.rel (%p415) target = $region20
        $region19: #{tpu_custom_call.1} parent=11 // pred_region
          _
        $region20: #{tpu_custom_call.1} parent=11 // pred_fallthru
          _
        // Predicated region
        $region21: #{tpu_custom_call.1} parent=11 // pred_check
          %p418 = pneg %p163
        $region22: #{tpu_custom_call.1} parent=11 // pred_check_branch
          %420 = sbr.rel (%p418) target = $region24
        $region23: #{tpu_custom_call.1} parent=11 // pred_region
          %s422 = ssub.s32 20480, 20480
          %423 = vsyncadd [#allocation7], %s422
          %s424 = sshll.u32 [#allocation6], 4
          %s425 = int_to_ptr.vmem [resolvable:$true] %s424
          %430 = dma.hbm_to_vmem [thread:$0]  %s4, 20480, %s425, [#allocation7], 128, 128, 8
        $region24: #{tpu_custom_call.1} parent=11 // pred_fallthru
          _
        // Predicated region
        $region25: #{tpu_custom_call.1} parent=11 // pred_check
          %p431 = pneg %p184
        $region26: #{tpu_custom_call.1} parent=11 // pred_check_branch
          %433 = sbr.rel (%p431) target = $region28
        $region27: #{tpu_custom_call.1} parent=11 // pred_region
          _
        $region28: #{tpu_custom_call.1} parent=11 // pred_fallthru
          _
        // Predicated region
        $region29: #{tpu_custom_call.1} parent=11 // pred_check
          %p434 = pneg %p205
        $region30: #{tpu_custom_call.1} parent=11 // pred_check_branch
          %436 = sbr.rel (%p434) target = $region32
        $region31: #{tpu_custom_call.1} parent=11 // pred_region
          %s438 = ssub.s32 2048, 2048
          %439 = vsyncadd [#allocation7], %s438
          %s440 = sshll.u32 [#allocation8], 4
          %s441 = int_to_ptr.vmem [resolvable:$true] %s440
          %446 = dma.hbm_to_vmem [thread:$0]  %s6, 2048, %s441, [#allocation7], 64, 64, 4
        $region32: #{tpu_custom_call.1} parent=11 // pred_fallthru
          _
        // Predicated region
        $region33: #{tpu_custom_call.1} parent=11 // pred_check
          %p447 = pneg %p226
        $region34: #{tpu_custom_call.1} parent=11 // pred_check_branch
          %449 = sbr.rel (%p447) target = $region36
        $region35: #{tpu_custom_call.1} parent=11 // pred_region
          _
        $region36: #{tpu_custom_call.1} parent=11 // pred_fallthru
          _
        // Predicated region
        $region37: #{tpu_custom_call.1} parent=11 // pred_check
          %p450 = pneg %p247
        $region38: #{tpu_custom_call.1} parent=11 // pred_check_branch
          %452 = sbr.rel (%p450) target = $region40
        $region39: #{tpu_custom_call.1} parent=11 // pred_region
          %s454 = ssub.s32 2048, 2048
          %455 = vsyncadd [#allocation10], %s454
          %s456 = sshll.u32 [#allocation9], 4
          %s457 = int_to_ptr.vmem [resolvable:$true] %s456
          %462 = dma.hbm_to_vmem [thread:$0]  %s8, 2048, %s457, [#allocation10], 64, 64, 4
        $region40: #{tpu_custom_call.1} parent=11 // pred_fallthru
          _
        // Predicated region
        $region41: #{tpu_custom_call.1} parent=11 // pred_check
          %p463 = pneg %p268
        $region42: #{tpu_custom_call.1} parent=11 // pred_check_branch
          %465 = sbr.rel (%p463) target = $region44
        $region43: #{tpu_custom_call.1} parent=11 // pred_region
          _
        $region44: #{tpu_custom_call.1} parent=11 // pred_fallthru
          _
        // Predicated region
        $region45: #{tpu_custom_call.1} parent=11 // pred_check
          %p466 = pneg %p289
        $region46: #{tpu_custom_call.1} parent=11 // pred_check_branch
          %468 = sbr.rel (%p466) target = $region48
        $region47: #{tpu_custom_call.1} parent=11 // pred_region
          _
        $region48: #{tpu_custom_call.1} parent=11 // pred_fallthru
          _
        // Predicated region
        $region49: #{tpu_custom_call.1} parent=11 // pred_check
          %p469 = pneg %p310
        $region50: #{tpu_custom_call.1} parent=11 // pred_check_branch
          %471 = sbr.rel (%p469) target = $region52
        $region51: #{tpu_custom_call.1} parent=11 // pred_region
          _
        $region52: #{tpu_custom_call.1} parent=11 // pred_fallthru
          _
        // Predicated region
        $region53: #{tpu_custom_call.1} parent=11 // pred_check
          %p472 = pneg %p331
        $region54: #{tpu_custom_call.1} parent=11 // pred_check_branch
          %474 = sbr.rel (%p472) target = $region56
        $region55: #{tpu_custom_call.1} parent=11 // pred_region
          _
        $region56: #{tpu_custom_call.1} parent=11 // pred_fallthru
          _
      $region12: #{tpu_custom_call.1} parent=5 // pred_fallthru
        _
      %p475 = scmp.lt.s32.totalorder %s28, 2
      // Predicated region
      $region57: #{tpu_custom_call.1} parent=5 // pred_check
        %p476 = pneg %p475
      $region58: #{tpu_custom_call.1} parent=5 // pred_check_branch
        %478 = sbr.rel (%p476) target = $region60
      $region59: #{tpu_custom_call.1} parent=5 // pred_region
        // Predicated region
        $region61: #{tpu_custom_call.1} parent=59 // pred_check
          %p479 = pneg %p62
        $region62: #{tpu_custom_call.1} parent=59 // pred_check_branch
          %481 = sbr.rel (%p479) target = $region64
        $region63: #{tpu_custom_call.1} parent=59 // pred_region
          %s482 = smul.u32 2, %s36
          %s483 = ssub.s32 3, %s482
          %p484 = scmp.lt.s32.totalorder %s483, 2
          %s485 = scalar_select %p484, %s483, 2
          %s486 = smul.u32 64, %s485
          %p487 = scmp.lt.s32.totalorder %s35, 1
          %s488 = scalar_select %p487, %s35, 1
          %p489 = scmp.lt.s32.totalorder %s482, 2
          %s490 = scalar_select %p489, %s482, 2
          %s491 = smul.addr %s488, 3
          %s492 = sadd.s32 %s490, %s491
          %s493 = smul.addr %s492, 4
          %s494 = scalar_lea.vmem %s0, %s493
          %s495 = smul.u32 2, %s36
          %s496 = ssub.s32 3, %s495
          %p497 = scmp.lt.s32.totalorder %s496, 2
          %s498 = scalar_select %p497, %s496, 2
          %s499 = smul.u32 64, %s498
        $region64: #{tpu_custom_call.1} parent=59 // pred_fallthru
          _
        // Predicated region
        $region65: #{tpu_custom_call.1} parent=59 // pred_check
          %p500 = pneg %p94
        $region66: #{tpu_custom_call.1} parent=59 // pred_check_branch
          %502 = sbr.rel (%p500) target = $region68
        $region67: #{tpu_custom_call.1} parent=59 // pred_region
          %s503 = sadd.s32 %s36, 1
          %s504 = smul.u32 %s503, 2
          %p505 = scmp.lt.s32.totalorder %s35, 1
          %s506 = scalar_select %p505, %s35, 1
          %p507 = scmp.lt.s32.totalorder %s504, 2
          %s508 = scalar_select %p507, %s504, 2
          %s509 = smul.addr %s506, 3
          %s510 = sadd.s32 %s508, %s509
          %s511 = smul.addr %s510, 4
          %s512 = scalar_lea.vmem %s1, %s511
          %s513 = sadd.s32 %s36, 1
          %s514 = smul.u32 %s513, 2
        $region68: #{tpu_custom_call.1} parent=59 // pred_fallthru
          _
      $region60: #{tpu_custom_call.1} parent=5 // pred_fallthru
        _
      %p515 = scmp.le.s32.totalorder 1, %s28
      %p516 = scmp.lt.s32.totalorder %s28, 3
      %p517 = pnand %p515, %p516
      %p518 = pneg %p517
      // Predicated region
      $region69: #{tpu_custom_call.1} parent=5 // pred_check
        _
      $region70: #{tpu_custom_call.1} parent=5 // pred_check_branch
        %520 = sbr.rel (%p517) target = $region72
      $region71: #{tpu_custom_call.1} parent=5 // pred_region
        %s521 = ssub.s32 %s28, 1
        // Predicated region
        $region73: #{tpu_custom_call.1} parent=71 // pred_check
          %p522 = pneg %p121
        $region74: #{tpu_custom_call.1} parent=71 // pred_check_branch
          %524 = sbr.rel (%p522) target = $region76
        $region75: #{tpu_custom_call.1} parent=71 // pred_region
          %525 = dma.done [#allocation4], 640
        $region76: #{tpu_custom_call.1} parent=71 // pred_fallthru
          _
        // Predicated region
        $region77: #{tpu_custom_call.1} parent=71 // pred_check
          %p526 = pneg %p163
        $region78: #{tpu_custom_call.1} parent=71 // pred_check_branch
          %528 = sbr.rel (%p526) target = $region80
        $region79: #{tpu_custom_call.1} parent=71 // pred_region
          %529 = dma.done [#allocation7], 20480
        $region80: #{tpu_custom_call.1} parent=71 // pred_fallthru
          _
        // Predicated region
        $region81: #{tpu_custom_call.1} parent=71 // pred_check
          %p530 = pneg %p205
        $region82: #{tpu_custom_call.1} parent=71 // pred_check_branch
          %532 = sbr.rel (%p530) target = $region84
        $region83: #{tpu_custom_call.1} parent=71 // pred_region
          %533 = dma.done [#allocation7], 2048
        $region84: #{tpu_custom_call.1} parent=71 // pred_fallthru
          _
        // Predicated region
        $region85: #{tpu_custom_call.1} parent=71 // pred_check
          %p534 = pneg %p247
        $region86: #{tpu_custom_call.1} parent=71 // pred_check_branch
          %536 = sbr.rel (%p534) target = $region88
        $region87: #{tpu_custom_call.1} parent=71 // pred_region
          %537 = dma.done [#allocation10], 2048
        $region88: #{tpu_custom_call.1} parent=71 // pred_fallthru
          _
        %s538 = smul.u32 2, %s38
        %s539 = ssub.s32 3, %s538
        %p540 = scmp.lt.s32.totalorder %s539, 2
        %s541 = scalar_select %p540, %s539, 2
        %s542 = smul.u32 64, %s541
        %p543 = scmp.lt.s32.totalorder %s37, 1
        %s544 = scalar_select %p543, %s37, 1
        %p545 = scmp.lt.s32.totalorder %s538, 2
        %s546 = scalar_select %p545, %s538, 2
        %s547 = smul.addr %s544, 3
        %s548 = sadd.s32 %s546, %s547
        %s549 = smul.addr %s548, 4
        %s550 = scalar_lea.vmem %s0, %s549
        %p551 = pneg %p68
        %p552 = pneg %p65
        %s553 = sadd.s32 %s38, 1
        %s554 = smul.u32 %s553, 2
        %p555 = scmp.lt.s32.totalorder %s37, 1
        %s556 = scalar_select %p555, %s37, 1
        %p557 = scmp.lt.s32.totalorder %s554, 2
        %s558 = scalar_select %p557, %s554, 2
        %s559 = smul.addr %s556, 3
        %s560 = sadd.s32 %s558, %s559
        %s561 = smul.addr %s560, 4
        %s562 = scalar_lea.vmem %s1, %s561
        %p563 = pneg %p100
        %p564 = pneg %p97
        %p565 = pneg %p121
        %p566 = pneg %p118
        %p567 = pneg %p142
        %p568 = pneg %p139
        %p569 = pneg %p163
        %p570 = pneg %p160
        %p571 = pneg %p184
        %p572 = pneg %p181
        %p573 = pneg %p205
        %p574 = pneg %p202
        %p575 = pneg %p226
        %p576 = pneg %p223
        %p577 = pneg %p247
        %p578 = pneg %p244
        %p579 = pneg %p268
        %p580 = pneg %p265
        %p581 = pneg %p289
        %p582 = pneg %p286
        %p583 = pneg %p310
        %p584 = pneg %p307
        %p585 = pneg %p331
        %p586 = pneg %p328
        %p587 = pneg %p359
        %p588 = pneg %p356
        %p589 = scmp.lt.s32.totalorder %s37, 1
        %s590 = scalar_select %p589, %s37, 1
        %p591 = scmp.lt.s32.totalorder %s38, 0
        %s592 = scalar_select %p591, %s38, 0
        %s593 = smul.addr %s590, 16
        %s594 = sadd.s32 %s592, %s593
        %s595 = smul.addr %s594, 8
        %s596 = scalar_lea.vmem %s13, %s595
        %p597 = pneg %p387
        %p598 = pneg %p384
        %s599 = sand.u32 %s374, 1
        %s600 = scalar_lea.sflag [#allocation5], %s599
        %s601 = sand.u32 %s374, 1
        %s602 = smul.addr %s601, 16
        %s603 = scalar_lea.vmem [#allocation11], %s602
        %s604 = smul.u32 2, %s38
        %s605 = ssub.s32 3, %s604
        %p606 = scmp.lt.s32.totalorder %s605, 2
        %s607 = scalar_select %p606, %s605, 2
        %s608 = smul.u32 64, %s607
        %p609 = scmp.lt.s32.totalorder %s37, 1
        %s610 = scalar_select %p609, %s37, 1
        %p611 = scmp.lt.s32.totalorder %s604, 2
        %s612 = scalar_select %p611, %s604, 2
        %s613 = smul.addr %s610, 3
        %s614 = sadd.s32 %s612, %s613
        %s615 = smul.addr %s614, 4
        %s616 = scalar_lea.vmem %s0, %s615
        %s617 = smul.u32 2, %s38
        %s618 = ssub.s32 3, %s617
        %p619 = scmp.lt.s32.totalorder %s618, 2
        %s620 = scalar_select %p619, %s618, 2
        %s621 = smul.u32 64, %s620
        %s622 = sadd.s32 %s38, 1
        %s623 = smul.u32 %s622, 2
        %p624 = scmp.lt.s32.totalorder %s37, 1
        %s625 = scalar_select %p624, %s37, 1
        %p626 = scmp.lt.s32.totalorder %s623, 2
        %s627 = scalar_select %p626, %s623, 2
        %s628 = smul.addr %s625, 3
        %s629 = sadd.s32 %s627, %s628
        %s630 = smul.addr %s629, 4
        %s631 = scalar_lea.vmem %s1, %s630
        %s632 = sadd.s32 %s38, 1
        %s633 = smul.u32 %s632, 2
        %p634 = scmp.lt.s32.totalorder %s37, 1
        %s635 = scalar_select %p634, %s37, 1
        %p636 = scmp.lt.s32.totalorder %s38, 0
        %s637 = scalar_select %p636, %s38, 0
        %s638 = smul.addr %s635, 16
        %s639 = sadd.s32 %s637, %s638
        %s640 = smul.addr %s639, 8
        %s641 = scalar_lea.vmem %s13, %s640
        %s642 = smul.u32 2, %s38
        %v644 = vld [vmem:[%s616] sm:$0xf]
        %v645 = vld [vmem:[%s616 + $0x4] sm:$0xf]
        %v646 = vld [vmem:[%s631] sm:$0xf]
        %v649 = vunpack.c.l.b16 %v644
        %v650 = vunpack.c.l.b16 %v645
        %v651 = vpack.c.b16 %v650, %v649
        %v652 = vld [vmem:[#allocation3] sm:$0x77]
        %s653 = scalar_lea.vmem [#allocation3], 8
        %v654 = vld [vmem:[%s653] sm:$0x77]
        %v656 = vunpack.c.l.b16 %v654
        %v657 = vunpack.c.h.b16 %v654
        %v658 = vpack.c.b16 %v656, %v656
        %v659 = vpack.c.b16 %v657, %v657
        %vm660 = vcmask 39936
        %v662 = vsel %vm660, %v651, 0
        %v665 = vsel %vm660, %v646, 0
        %vm667 = vcmask 1041408
        %vm668 = vcmask 1042432
        %v669 = vsel %vm667, 4294967295, 65535
        %v670 = vsel %vm668, %v669, 0
        %v672 = vand.u32 %v658, %v670
        %v675 = vand.u32 %v659, %v670
        %677 = vmatprep.subr.bf16.mxu0 %v675
        %678 = vmatpush1.bf16.msra.mxu0 %v672
        %679 = vmatprep.subr.bf16.mxu0 0
        %680 = vmatpush1.bf16.msra.mxu0 0
        %681 = vmatprep.subr.bf16.mxu0 0
        %682 = vmatpush1.bf16.msra.mxu0 0
        %683 = vmatprep.subr.bf16.mxu0 0
        %684 = vmatpush1.bf16.msra.mxu0 0
        %685 = vmatprep.subr.bf16.mxu0 0
        %686 = vmatpush1.bf16.msra.mxu0 0
        %687 = vmatprep.subr.bf16.mxu0 0
        %688 = vmatpush1.bf16.msra.mxu0 0
        %689 = vmatprep.subr.bf16.mxu0 0
        %690 = vmatpush1.bf16.msra.mxu0 0
        %691 = vmatprep.subr.bf16.mxu0 0
        %692 = vmatpush1.bf16.msra.mxu0 0
        %693 = vmatprep.subr.bf16.mxu0 0
        %694 = vmatpush1.bf16.msra.mxu0 0
        %695 = vmatprep.subr.bf16.mxu0 0
        %696 = vmatpush1.bf16.msra.mxu0 0
        %697 = vmatprep.subr.bf16.mxu0 0
        %698 = vmatpush1.bf16.msra.mxu0 0
        %699 = vmatprep.subr.bf16.mxu0 0
        %700 = vmatpush1.bf16.msra.mxu0 0
        %701 = vmatprep.subr.bf16.mxu0 0
        %702 = vmatpush1.bf16.msra.mxu0 0
        %703 = vmatprep.subr.bf16.mxu0 0
        %704 = vmatpush1.bf16.msra.mxu0 0
        %705 = vmatprep.subr.bf16.mxu0 0
        %706 = vmatpush1.bf16.msra.mxu0 0
        %707 = vmatprep.subr.bf16.mxu0 0
        %708 = vmatpush1.bf16.msra.mxu0 0
        %709 = vmatprep.mubr.bf16.mxu0 0
        %710 = vmatmul.mubr.bf16.gmra.mrb[0].mxu0 %v662
        %v711 = vpop.f32.mrb[0].mxu0
        %v712 = vadd.f32 0.0, %v711
        %v713 = vpop.f32.mrb[0].mxu0
        %v714 = vadd.f32 0.0, %v713
        %v715 = vpop.f32.mrb[0].mxu0
        %v716 = vadd.f32 0.0, %v715
        %v717 = vpop.f32.mrb[0].mxu0
        %v718 = vadd.f32 0.0, %v717
        %719 = vmatprep.mubr.bf16.mxu0 0
        %720 = vmatmul.mubr.bf16.gmra.mrb[0].mxu0 %v665
        %v721 = vpop.f32.mrb[0].mxu0
        %v722 = vadd.f32 0.0, %v721
        %v723 = vpop.f32.mrb[0].mxu0
        %v724 = vadd.f32 0.0, %v723
        %v725 = vpop.f32.mrb[0].mxu0
        %v726 = vpop.f32.mrb[0].mxu0
        %727 = vdwg.mxu0
        %v728 = vrot.slane %v712, 1
        %v729 = vrot.slane %v714, 1
        %v730 = vrot.slane %v716, 1
        %v731 = vrot.slane %v718, 1
        %v732 = vrot.slane %v722, 1
        %v733 = vrot.slane %v724, 1
        %v734 = vlaneseq
        %v735 = vshrl.u32 %v734, 7
        %vm736 = vcmp.lt.s32.totalorder %v735, 7
        %v737 = vsel %vm736, %v730, %v732
        %v738 = vsel %vm736, %v731, %v733
        %v739 = vsel %vm736, %v728, %v730
        %v740 = vsel %vm736, %v729, %v731
        %v741 = vsel %vm736, %v732, %v728
        %v742 = vsel %vm736, %v733, %v729
        %v744 = vunpack.c.l.b16 %v652
        %v745 = vunpack.c.h.b16 %v652
        %v746 = vpack.c.b16 %v744, %v744
        %v747 = vpack.c.b16 %v745, %v745
        %v749 = vand.u32 %v746, %v670
        %v752 = vand.u32 %v747, %v670
        %754 = vmatprep.subr.bf16.mxu0 %v752
        %755 = vmatpush1.bf16.msra.mxu0 %v749
        %756 = vmatprep.subr.bf16.mxu0 0
        %757 = vmatpush1.bf16.msra.mxu0 0
        %758 = vmatprep.subr.bf16.mxu0 0
        %759 = vmatpush1.bf16.msra.mxu0 0
        %760 = vmatprep.subr.bf16.mxu0 0
        %761 = vmatpush1.bf16.msra.mxu0 0
        %762 = vmatprep.subr.bf16.mxu0 0
        %763 = vmatpush1.bf16.msra.mxu0 0
        %764 = vmatprep.subr.bf16.mxu0 0
        %765 = vmatpush1.bf16.msra.mxu0 0
        %766 = vmatprep.subr.bf16.mxu0 0
        %767 = vmatpush1.bf16.msra.mxu0 0
        %768 = vmatprep.subr.bf16.mxu0 0
        %769 = vmatpush1.bf16.msra.mxu0 0
        %770 = vmatprep.subr.bf16.mxu0 0
        %771 = vmatpush1.bf16.msra.mxu0 0
        %772 = vmatprep.subr.bf16.mxu0 0
        %773 = vmatpush1.bf16.msra.mxu0 0
        %774 = vmatprep.subr.bf16.mxu0 0
        %775 = vmatpush1.bf16.msra.mxu0 0
        %776 = vmatprep.subr.bf16.mxu0 0
        %777 = vmatpush1.bf16.msra.mxu0 0
        %778 = vmatprep.subr.bf16.mxu0 0
        %779 = vmatpush1.bf16.msra.mxu0 0
        %780 = vmatprep.subr.bf16.mxu0 0
        %781 = vmatpush1.bf16.msra.mxu0 0
        %782 = vmatprep.subr.bf16.mxu0 0
        %783 = vmatpush1.bf16.msra.mxu0 0
        %784 = vmatprep.subr.bf16.mxu0 0
        %785 = vmatpush1.bf16.msra.mxu0 0
        %786 = vmatprep.mubr.bf16.mxu0 0
        %787 = vmatmul.mubr.bf16.gmra.mrb[0].mxu0 %v662
        %v788 = vpop.f32.mrb[0].mxu0
        %v789 = vadd.f32 %v739, %v788
        %v790 = vpop.f32.mrb[0].mxu0
        %v791 = vadd.f32 %v740, %v790
        %v792 = vpop.f32.mrb[0].mxu0
        %v793 = vadd.f32 %v737, %v792
        %v794 = vpop.f32.mrb[0].mxu0
        %v795 = vadd.f32 %v738, %v794
        %796 = vmatprep.mubr.bf16.mxu0 0
        %797 = vmatmul.mubr.bf16.gmra.mrb[0].mxu0 %v665
        %v798 = vpop.f32.mrb[0].mxu0
        %v799 = vadd.f32 %v741, %v798
        %v800 = vpop.f32.mrb[0].mxu0
        %v801 = vadd.f32 %v742, %v800
        %v802 = vpop.f32.mrb[0].mxu0
        %v803 = vpop.f32.mrb[0].mxu0
        %804 = vdwg.mxu0
        %s805 = scalar_lea.vmem [#allocation3], 16
        %v806 = vld [vmem:[%s805] sm:$0x77]
        %v808 = vunpack.c.l.b16 %v806
        %v809 = vunpack.c.h.b16 %v806
        %v810 = vpack.c.b16 %v808, %v808
        %v811 = vpack.c.b16 %v809, %v809
        %v813 = vand.u32 %v810, %v670
        %v816 = vand.u32 %v811, %v670
        %818 = vmatprep.subr.bf16.mxu0 %v816
        %819 = vmatpush1.bf16.msra.mxu0 %v813
        %820 = vmatprep.subr.bf16.mxu0 0
        %821 = vmatpush1.bf16.msra.mxu0 0
        %822 = vmatprep.subr.bf16.mxu0 0
        %823 = vmatpush1.bf16.msra.mxu0 0
        %824 = vmatprep.subr.bf16.mxu0 0
        %825 = vmatpush1.bf16.msra.mxu0 0
        %826 = vmatprep.subr.bf16.mxu0 0
        %827 = vmatpush1.bf16.msra.mxu0 0
        %828 = vmatprep.subr.bf16.mxu0 0
        %829 = vmatpush1.bf16.msra.mxu0 0
        %830 = vmatprep.subr.bf16.mxu0 0
        %831 = vmatpush1.bf16.msra.mxu0 0
        %832 = vmatprep.subr.bf16.mxu0 0
        %833 = vmatpush1.bf16.msra.mxu0 0
        %834 = vmatprep.subr.bf16.mxu0 0
        %835 = vmatpush1.bf16.msra.mxu0 0
        %836 = vmatprep.subr.bf16.mxu0 0
        %837 = vmatpush1.bf16.msra.mxu0 0
        %838 = vmatprep.subr.bf16.mxu0 0
        %839 = vmatpush1.bf16.msra.mxu0 0
        %840 = vmatprep.subr.bf16.mxu0 0
        %841 = vmatpush1.bf16.msra.mxu0 0
        %842 = vmatprep.subr.bf16.mxu0 0
        %843 = vmatpush1.bf16.msra.mxu0 0
        %844 = vmatprep.subr.bf16.mxu0 0
        %845 = vmatpush1.bf16.msra.mxu0 0
        %846 = vmatprep.subr.bf16.mxu0 0
        %847 = vmatpush1.bf16.msra.mxu0 0
        %848 = vmatprep.subr.bf16.mxu0 0
        %849 = vmatpush1.bf16.msra.mxu0 0
        %850 = vmatprep.mubr.bf16.mxu0 0
        %851 = vmatmul.mubr.bf16.gmra.mrb[0].mxu0 %v662
        %v852 = vpop.f32.mrb[0].mxu0
        %v853 = vadd.f32 0.0, %v852
        %v854 = vpop.f32.mrb[0].mxu0
        %v855 = vadd.f32 0.0, %v854
        %v856 = vpop.f32.mrb[0].mxu0
        %v857 = vadd.f32 0.0, %v856
        %v858 = vpop.f32.mrb[0].mxu0
        %v859 = vadd.f32 0.0, %v858
        %860 = vmatprep.mubr.bf16.mxu0 0
        %861 = vmatmul.mubr.bf16.gmra.mrb[0].mxu0 %v665
        %v862 = vpop.f32.mrb[0].mxu0
        %v863 = vadd.f32 0.0, %v862
        %v864 = vpop.f32.mrb[0].mxu0
        %v865 = vadd.f32 0.0, %v864
        %v866 = vpop.f32.mrb[0].mxu0
        %v867 = vpop.f32.mrb[0].mxu0
        %868 = vdwg.mxu0
        %v869 = vrot.slane %v853, 2
        %v870 = vrot.slane %v855, 2
        %v871 = vrot.slane %v857, 2
        %v872 = vrot.slane %v859, 2
        %v873 = vrot.slane %v863, 2
        %v874 = vrot.slane %v865, 2
        %vm875 = vcmp.lt.s32.totalorder %v735, 6
        %v876 = vsel %vm875, %v871, %v873
        %v877 = vsel %vm875, %v872, %v874
        %v878 = vsel %vm875, %v869, %v871
        %v879 = vsel %vm875, %v870, %v872
        %v880 = vsel %vm875, %v873, %v869
        %v881 = vsel %vm875, %v874, %v870
        %v882 = vadd.f32 %v789, %v878
        %v883 = vadd.f32 %v791, %v879
        %v884 = vadd.f32 %v793, %v876
        %v885 = vadd.f32 %v795, %v877
        %v886 = vadd.f32 %v799, %v880
        %v887 = vadd.f32 %v801, %v881
        %s888 = scalar_lea.vmem [#allocation3], 24
        %v889 = vld [vmem:[%s888] sm:$0x77]
        %v891 = vunpack.c.l.b16 %v889
        %v892 = vunpack.c.h.b16 %v889
        %v893 = vpack.c.b16 %v891, %v891
        %v894 = vpack.c.b16 %v892, %v892
        %v896 = vand.u32 %v893, %v670
        %v899 = vand.u32 %v894, %v670
        %901 = vmatprep.subr.bf16.mxu0 %v899
        %902 = vmatpush1.bf16.msra.mxu0 %v896
        %903 = vmatprep.subr.bf16.mxu0 0
        %904 = vmatpush1.bf16.msra.mxu0 0
        %905 = vmatprep.subr.bf16.mxu0 0
        %906 = vmatpush1.bf16.msra.mxu0 0
        %907 = vmatprep.subr.bf16.mxu0 0
        %908 = vmatpush1.bf16.msra.mxu0 0
        %909 = vmatprep.subr.bf16.mxu0 0
        %910 = vmatpush1.bf16.msra.mxu0 0
        %911 = vmatprep.subr.bf16.mxu0 0
        %912 = vmatpush1.bf16.msra.mxu0 0
        %913 = vmatprep.subr.bf16.mxu0 0
        %914 = vmatpush1.bf16.msra.mxu0 0
        %915 = vmatprep.subr.bf16.mxu0 0
        %916 = vmatpush1.bf16.msra.mxu0 0
        %917 = vmatprep.subr.bf16.mxu0 0
        %918 = vmatpush1.bf16.msra.mxu0 0
        %919 = vmatprep.subr.bf16.mxu0 0
        %920 = vmatpush1.bf16.msra.mxu0 0
        %921 = vmatprep.subr.bf16.mxu0 0
        %922 = vmatpush1.bf16.msra.mxu0 0
        %923 = vmatprep.subr.bf16.mxu0 0
        %924 = vmatpush1.bf16.msra.mxu0 0
        %925 = vmatprep.subr.bf16.mxu0 0
        %926 = vmatpush1.bf16.msra.mxu0 0
        %927 = vmatprep.subr.bf16.mxu0 0
        %928 = vmatpush1.bf16.msra.mxu0 0
        %929 = vmatprep.subr.bf16.mxu0 0
        %930 = vmatpush1.bf16.msra.mxu0 0
        %931 = vmatprep.subr.bf16.mxu0 0
        %932 = vmatpush1.bf16.msra.mxu0 0
        %933 = vmatprep.mubr.bf16.mxu0 0
        %934 = vmatmul.mubr.bf16.gmra.mrb[0].mxu0 %v662
        %v935 = vpop.f32.mrb[0].mxu0
        %v936 = vadd.f32 0.0, %v935
        %v937 = vpop.f32.mrb[0].mxu0
        %v938 = vadd.f32 0.0, %v937
        %v939 = vpop.f32.mrb[0].mxu0
        %v940 = vadd.f32 0.0, %v939
        %v941 = vpop.f32.mrb[0].mxu0
        %v942 = vadd.f32 0.0, %v941
        %943 = vmatprep.mubr.bf16.mxu0 0
        %944 = vmatmul.mubr.bf16.gmra.mrb[0].mxu0 %v665
        %v945 = vpop.f32.mrb[0].mxu0
        %v946 = vadd.f32 0.0, %v945
        %v947 = vpop.f32.mrb[0].mxu0
        %v948 = vadd.f32 0.0, %v947
        %v949 = vpop.f32.mrb[0].mxu0
        %v950 = vpop.f32.mrb[0].mxu0
        %951 = vdwg.mxu0
        %v952 = vrot.slane %v936, 3
        %v953 = vrot.slane %v938, 3
        %v954 = vrot.slane %v940, 3
        %v955 = vrot.slane %v942, 3
        %v956 = vrot.slane %v946, 3
        %v957 = vrot.slane %v948, 3
        %vm958 = vcmp.lt.s32.totalorder %v735, 5
        %v959 = vsel %vm958, %v954, %v956
        %v960 = vsel %vm958, %v955, %v957
        %v961 = vsel %vm958, %v952, %v954
        %v962 = vsel %vm958, %v953, %v955
        %v963 = vsel %vm958, %v956, %v952
        %v964 = vsel %vm958, %v957, %v953
        %v965 = vadd.f32 %v882, %v961
        %v966 = vadd.f32 %v883, %v962
        %v967 = vadd.f32 %v884, %v959
        %v968 = vadd.f32 %v885, %v960
        %v969 = vadd.f32 %v886, %v963
        %v970 = vadd.f32 %v887, %v964
        %s971 = scalar_lea.vmem [#allocation3], 32
        %v972 = vld [vmem:[%s971] sm:$0x77]
        %v974 = vunpack.c.l.b16 %v972
        %v975 = vunpack.c.h.b16 %v972
        %v976 = vpack.c.b16 %v974, %v974
        %v977 = vpack.c.b16 %v975, %v975
        %v979 = vand.u32 %v976, %v670
        %v982 = vand.u32 %v977, %v670
        %984 = vmatprep.subr.bf16.mxu0 %v982
        %985 = vmatpush1.bf16.msra.mxu0 %v979
        %986 = vmatprep.subr.bf16.mxu0 0
        %987 = vmatpush1.bf16.msra.mxu0 0
        %988 = vmatprep.subr.bf16.mxu0 0
        %989 = vmatpush1.bf16.msra.mxu0 0
        %990 = vmatprep.subr.bf16.mxu0 0
        %991 = vmatpush1.bf16.msra.mxu0 0
        %992 = vmatprep.subr.bf16.mxu0 0
        %993 = vmatpush1.bf16.msra.mxu0 0
        %994 = vmatprep.subr.bf16.mxu0 0
        %995 = vmatpush1.bf16.msra.mxu0 0
        %996 = vmatprep.subr.bf16.mxu0 0
        %997 = vmatpush1.bf16.msra.mxu0 0
        %998 = vmatprep.subr.bf16.mxu0 0
        %999 = vmatpush1.bf16.msra.mxu0 0
        %1000 = vmatprep.subr.bf16.mxu0 0
        %1001 = vmatpush1.bf16.msra.mxu0 0
        %1002 = vmatprep.subr.bf16.mxu0 0
        %1003 = vmatpush1.bf16.msra.mxu0 0
        %1004 = vmatprep.subr.bf16.mxu0 0
        %1005 = vmatpush1.bf16.msra.mxu0 0
        %1006 = vmatprep.subr.bf16.mxu0 0
        %1007 = vmatpush1.bf16.msra.mxu0 0
        %1008 = vmatprep.subr.bf16.mxu0 0
        %1009 = vmatpush1.bf16.msra.mxu0 0
        %1010 = vmatprep.subr.bf16.mxu0 0
        %1011 = vmatpush1.bf16.msra.mxu0 0
        %1012 = vmatprep.subr.bf16.mxu0 0
        %1013 = vmatpush1.bf16.msra.mxu0 0
        %1014 = vmatprep.subr.bf16.mxu0 0
        %1015 = vmatpush1.bf16.msra.mxu0 0
        %1016 = vmatprep.mubr.bf16.mxu0 0
        %1017 = vmatmul.mubr.bf16.gmra.mrb[0].mxu0 %v662
        %v1018 = vpop.f32.mrb[0].mxu0
        %v1019 = vadd.f32 0.0, %v1018
        %v1020 = vpop.f32.mrb[0].mxu0
        %v1021 = vadd.f32 0.0, %v1020
        %v1022 = vpop.f32.mrb[0].mxu0
        %v1023 = vadd.f32 0.0, %v1022
        %v1024 = vpop.f32.mrb[0].mxu0
        %v1025 = vadd.f32 0.0, %v1024
        %1026 = vmatprep.mubr.bf16.mxu0 0
        %1027 = vmatmul.mubr.bf16.gmra.mrb[0].mxu0 %v665
        %v1028 = vpop.f32.mrb[0].mxu0
        %v1029 = vadd.f32 0.0, %v1028
        %v1030 = vpop.f32.mrb[0].mxu0
        %v1031 = vadd.f32 0.0, %v1030
        %v1032 = vpop.f32.mrb[0].mxu0
        %v1033 = vpop.f32.mrb[0].mxu0
        %1034 = vdwg.mxu0
        %v1035 = vrot.slane %v1019, 4
        %v1036 = vrot.slane %v1021, 4
        %v1037 = vrot.slane %v1023, 4
        %v1038 = vrot.slane %v1025, 4
        %v1039 = vrot.slane %v1029, 4
        %v1040 = vrot.slane %v1031, 4
        %vm1041 = vcmp.lt.s32.totalorder %v735, 4
        %v1042 = vsel %vm1041, %v1037, %v1039
        %v1043 = vsel %vm1041, %v1038, %v1040
        %v1044 = vsel %vm1041, %v1035, %v1037
        %v1045 = vsel %vm1041, %v1036, %v1038
        %v1046 = vsel %vm1041, %v1039, %v1035
        %v1047 = vsel %vm1041, %v1040, %v1036
        %v1048 = vadd.f32 %v965, %v1044
        %v1049 = vadd.f32 %v966, %v1045
        %v1050 = vadd.f32 %v967, %v1042
        %v1051 = vadd.f32 %v968, %v1043
        %v1052 = vadd.f32 %v969, %v1046
        %v1053 = vadd.f32 %v970, %v1047
        %v1054 = vld [vmem:[%s3] sm:$0x3]
        %v1056 = vlaneseq
        %v1057 = vshrl.u32 %v1056, 7
        %v1058 = vsub.s32 0, %v1057
        %v1059 = vrot.slane %v1054, %v1058
        %v1060 = vlaneseq
        %v1061 = vshrl.u32 %v1060, 7
        %v1062 = vsub.s32 1, %v1061
        %v1063 = vrot.slane %v1054, %v1062
        %v1066 = vadd.f32 %v1048, %v1059
        %v1067 = vadd.f32 %v1049, %v1063
        %v1068 = vadd.f32 %v1050, %v1059
        %v1069 = vadd.f32 %v1051, %v1063
        %v1070 = vadd.f32 %v1052, %v1059
        %v1071 = vadd.f32 %v1053, %v1063
        %v1072 = vmul.f32 %v1066, 0.01
        %v1073 = vmul.f32 %v1067, 0.01
        %v1074 = vmul.f32 %v1068, 0.01
        %v1075 = vmul.f32 %v1069, 0.01
        %v1076 = vmul.f32 %v1070, 0.01
        %v1077 = vmul.f32 %v1071, 0.01
        %v1078 = vmax.f32 %v1066, %v1072
        %v1079 = vmax.f32 %v1067, %v1073
        %v1080 = vmax.f32 %v1068, %v1074
        %v1081 = vmax.f32 %v1069, %v1075
        %v1082 = vmax.f32 %v1070, %v1076
        %v1083 = vmax.f32 %v1071, %v1077
        %s1084 = smul.u32 %s38, 16
        %s1085 = ssub.s32 %s1084, 2
        %v1086 = vadd.s32 %v735, 8
        %v1087 = vadd.s32 %v735, 16
        %v1088 = vstv %s1085
        %v1089 = vadd.s32 %v1088, %v735
        %v1090 = vadd.s32 %v1088, %v1086
        %v1091 = vadd.s32 %v1088, %v1087
        %vm1092 = vcmp.ge.s32.totalorder %v1089, 0
        %vm1093 = vcmp.ge.s32.totalorder %v1090, 0
        %vm1094 = vcmp.ge.s32.totalorder %v1091, 0
        %vm1095 = vcmp.lt.s32.totalorder %v1089, 16
        %vm1096 = vcmp.lt.s32.totalorder %v1090, 16
        %vm1097 = vcmp.lt.s32.totalorder %v1091, 16
        %vm1098 = vmand %vm1092, %vm1095
        %vm1099 = vmand %vm1093, %vm1096
        %vm1100 = vmand %vm1094, %vm1097
        %v1101 = vsel %vm1098, 1, 0
        %v1102 = vsel %vm1099, 1, 0
        %v1103 = vsel %vm1100, 1, 0
        %vm1104 = vcmp.eq.s32.totalorder %v1101, 1
        %vm1105 = vcmp.eq.s32.totalorder %v1102, 1
        %vm1106 = vcmp.eq.s32.totalorder %v1103, 1
        %v1107 = vsel %vm1104, %v1078, 0.0
        %v1108 = vsel %vm1104, %v1079, 0.0
        %v1109 = vsel %vm1105, %v1080, 0.0
        %v1110 = vsel %vm1105, %v1081, 0.0
        %v1111 = vsel %vm1106, %v1082, 0.0
        %v1112 = vsel %vm1106, %v1083, 0.0
        %v1113 = vpack.c.bf16 %v1109, %v1107
        %v1114 = vpack.c.bf16 %v1110, %v1108
        %v1115 = vpack.c.bf16 %v1111, %v1111
        %v1116 = vpack.c.bf16 %v1112, %v1112
        %v1117 = vld [vmem:[#allocation6] sm:$0xff]
        %v1118 = vld [vmem:[#allocation6 + $0x8] sm:$0xff]
        %v1119 = vld [vmem:[#allocation6 + $0x10] sm:$0xff]
        %v1120 = vld [vmem:[#allocation6 + $0x18] sm:$0xff]
        %v1121 = vld [vmem:[#allocation6 + $0x20] sm:$0xff]
        %v1122 = vld [vmem:[#allocation6 + $0x28] sm:$0xff]
        %v1123 = vld [vmem:[#allocation6 + $0x30] sm:$0xff]
        %v1124 = vld [vmem:[#allocation6 + $0x38] sm:$0xff]
        %v1125 = vld [vmem:[#allocation6 + $0x40] sm:$0xff]
        %v1126 = vld [vmem:[#allocation6 + $0x48] sm:$0xff]
        %v1127 = vld [vmem:[#allocation6 + $0x50] sm:$0xff]
        %v1128 = vld [vmem:[#allocation6 + $0x58] sm:$0xff]
        %v1129 = vld [vmem:[#allocation6 + $0x60] sm:$0xff]
        %v1130 = vld [vmem:[#allocation6 + $0x68] sm:$0xff]
        %v1131 = vld [vmem:[#allocation6 + $0x70] sm:$0xff]
        %v1132 = vld [vmem:[#allocation6 + $0x78] sm:$0xff]
        %v1133 = vld [vmem:[#allocation6 + $0x80] sm:$0xff]
        %v1134 = vld [vmem:[#allocation6 + $0x88] sm:$0xff]
        %v1135 = vld [vmem:[#allocation6 + $0x90] sm:$0xff]
        %v1136 = vld [vmem:[#allocation6 + $0x98] sm:$0xff]
        %v1137 = vld [vmem:[#allocation6 + $0xa0] sm:$0xff]
        %v1138 = vld [vmem:[#allocation6 + $0xa8] sm:$0xff]
        %v1139 = vld [vmem:[#allocation6 + $0xb0] sm:$0xff]
        %v1140 = vld [vmem:[#allocation6 + $0xb8] sm:$0xff]
        %v1141 = vld [vmem:[#allocation6 + $0xc0] sm:$0xff]
        %v1142 = vld [vmem:[#allocation6 + $0xc8] sm:$0xff]
        %v1143 = vld [vmem:[#allocation6 + $0xd0] sm:$0xff]
        %v1144 = vld [vmem:[#allocation6 + $0xd8] sm:$0xff]
        %v1145 = vld [vmem:[#allocation6 + $0xe0] sm:$0xff]
        %v1146 = vld [vmem:[#allocation6 + $0xe8] sm:$0xff]
        %v1147 = vld [vmem:[#allocation6 + $0xf0] sm:$0xff]
        %v1148 = vld [vmem:[#allocation6 + $0xf8] sm:$0xff]
        %s1149 = scalar_lea.vmem [#allocation6], 256
        %v1150 = vld [vmem:[%s1149] sm:$0xff]
        %v1151 = vld [vmem:[%s1149 + $0x8] sm:$0xff]
        %v1152 = vld [vmem:[%s1149 + $0x10] sm:$0xff]
        %v1153 = vld [vmem:[%s1149 + $0x18] sm:$0xff]
        %v1154 = vld [vmem:[%s1149 + $0x20] sm:$0xff]
        %v1155 = vld [vmem:[%s1149 + $0x28] sm:$0xff]
        %v1156 = vld [vmem:[%s1149 + $0x30] sm:$0xff]
        %v1157 = vld [vmem:[%s1149 + $0x38] sm:$0xff]
        %v1158 = vld [vmem:[%s1149 + $0x40] sm:$0xff]
        %v1159 = vld [vmem:[%s1149 + $0x48] sm:$0xff]
        %v1160 = vld [vmem:[%s1149 + $0x50] sm:$0xff]
        %v1161 = vld [vmem:[%s1149 + $0x58] sm:$0xff]
        %v1162 = vld [vmem:[%s1149 + $0x60] sm:$0xff]
        %v1163 = vld [vmem:[%s1149 + $0x68] sm:$0xff]
        %v1164 = vld [vmem:[%s1149 + $0x70] sm:$0xff]
        %v1165 = vld [vmem:[%s1149 + $0x78] sm:$0xff]
        %v1166 = vld [vmem:[%s1149 + $0x80] sm:$0xff]
        %v1167 = vld [vmem:[%s1149 + $0x88] sm:$0xff]
        %v1168 = vld [vmem:[%s1149 + $0x90] sm:$0xff]
        %v1169 = vld [vmem:[%s1149 + $0x98] sm:$0xff]
        %v1170 = vld [vmem:[%s1149 + $0xa0] sm:$0xff]
        %v1171 = vld [vmem:[%s1149 + $0xa8] sm:$0xff]
        %v1172 = vld [vmem:[%s1149 + $0xb0] sm:$0xff]
        %v1173 = vld [vmem:[%s1149 + $0xb8] sm:$0xff]
        %v1174 = vld [vmem:[%s1149 + $0xc0] sm:$0xff]
        %v1175 = vld [vmem:[%s1149 + $0xc8] sm:$0xff]
        %v1176 = vld [vmem:[%s1149 + $0xd0] sm:$0xff]
        %v1177 = vld [vmem:[%s1149 + $0xd8] sm:$0xff]
        %v1178 = vld [vmem:[%s1149 + $0xe0] sm:$0xff]
        %v1179 = vld [vmem:[%s1149 + $0xe8] sm:$0xff]
        %v1180 = vld [vmem:[%s1149 + $0xf0] sm:$0xff]
        %v1181 = vld [vmem:[%s1149 + $0xf8] sm:$0xff]
        %v1214 = vunpack.c.l.b16 %v1150
        %v1215 = vunpack.c.h.b16 %v1150
        %v1216 = vunpack.c.l.b16 %v1151
        %v1217 = vunpack.c.h.b16 %v1151
        %v1218 = vunpack.c.l.b16 %v1152
        %v1219 = vunpack.c.h.b16 %v1152
        %v1220 = vunpack.c.l.b16 %v1153
        %v1221 = vunpack.c.h.b16 %v1153
        %v1222 = vunpack.c.l.b16 %v1154
        %v1223 = vunpack.c.h.b16 %v1154
        %v1224 = vunpack.c.l.b16 %v1155
        %v1225 = vunpack.c.h.b16 %v1155
        %v1226 = vunpack.c.l.b16 %v1156
        %v1227 = vunpack.c.h.b16 %v1156
        %v1228 = vunpack.c.l.b16 %v1157
        %v1229 = vunpack.c.h.b16 %v1157
        %v1230 = vunpack.c.l.b16 %v1158
        %v1231 = vunpack.c.h.b16 %v1158
        %v1232 = vunpack.c.l.b16 %v1159
        %v1233 = vunpack.c.h.b16 %v1159
        %v1234 = vunpack.c.l.b16 %v1160
        %v1235 = vunpack.c.h.b16 %v1160
        %v1236 = vunpack.c.l.b16 %v1161
        %v1237 = vunpack.c.h.b16 %v1161
        %v1238 = vunpack.c.l.b16 %v1162
        %v1239 = vunpack.c.h.b16 %v1162
        %v1240 = vunpack.c.l.b16 %v1163
        %v1241 = vunpack.c.h.b16 %v1163
        %v1242 = vunpack.c.l.b16 %v1164
        %v1243 = vunpack.c.h.b16 %v1164
        %v1244 = vunpack.c.l.b16 %v1165
        %v1245 = vunpack.c.h.b16 %v1165
        %v1246 = vunpack.c.l.b16 %v1166
        %v1247 = vunpack.c.h.b16 %v1166
        %v1248 = vunpack.c.l.b16 %v1167
        %v1249 = vunpack.c.h.b16 %v1167
        %v1250 = vunpack.c.l.b16 %v1168
        %v1251 = vunpack.c.h.b16 %v1168
        %v1252 = vunpack.c.l.b16 %v1169
        %v1253 = vunpack.c.h.b16 %v1169
        %v1254 = vunpack.c.l.b16 %v1170
        %v1255 = vunpack.c.h.b16 %v1170
        %v1256 = vunpack.c.l.b16 %v1171
        %v1257 = vunpack.c.h.b16 %v1171
        %v1258 = vunpack.c.l.b16 %v1172
        %v1259 = vunpack.c.h.b16 %v1172
        %v1260 = vunpack.c.l.b16 %v1173
        %v1261 = vunpack.c.h.b16 %v1173
        %v1262 = vunpack.c.l.b16 %v1174
        %v1263 = vunpack.c.h.b16 %v1174
        %v1264 = vunpack.c.l.b16 %v1175
        %v1265 = vunpack.c.h.b16 %v1175
        %v1266 = vunpack.c.l.b16 %v1176
        %v1267 = vunpack.c.h.b16 %v1176
        %v1268 = vunpack.c.l.b16 %v1177
        %v1269 = vunpack.c.h.b16 %v1177
        %v1270 = vunpack.c.l.b16 %v1178
        %v1271 = vunpack.c.h.b16 %v1178
        %v1272 = vunpack.c.l.b16 %v1179
        %v1273 = vunpack.c.h.b16 %v1179
        %v1274 = vunpack.c.l.b16 %v1180
        %v1275 = vunpack.c.h.b16 %v1180
        %v1276 = vunpack.c.l.b16 %v1181
        %v1277 = vunpack.c.h.b16 %v1181
        %v1278 = vpack.c.b16 %v1216, %v1214
        %v1279 = vpack.c.b16 %v1217, %v1215
        %v1280 = vpack.c.b16 %v1220, %v1218
        %v1281 = vpack.c.b16 %v1221, %v1219
        %v1282 = vpack.c.b16 %v1224, %v1222
        %v1283 = vpack.c.b16 %v1225, %v1223
        %v1284 = vpack.c.b16 %v1228, %v1226
        %v1285 = vpack.c.b16 %v1229, %v1227
        %v1286 = vpack.c.b16 %v1232, %v1230
        %v1287 = vpack.c.b16 %v1233, %v1231
        %v1288 = vpack.c.b16 %v1236, %v1234
        %v1289 = vpack.c.b16 %v1237, %v1235
        %v1290 = vpack.c.b16 %v1240, %v1238
        %v1291 = vpack.c.b16 %v1241, %v1239
        %v1292 = vpack.c.b16 %v1244, %v1242
        %v1293 = vpack.c.b16 %v1245, %v1243
        %v1294 = vpack.c.b16 %v1248, %v1246
        %v1295 = vpack.c.b16 %v1249, %v1247
        %v1296 = vpack.c.b16 %v1252, %v1250
        %v1297 = vpack.c.b16 %v1253, %v1251
        %v1298 = vpack.c.b16 %v1256, %v1254
        %v1299 = vpack.c.b16 %v1257, %v1255
        %v1300 = vpack.c.b16 %v1260, %v1258
        %v1301 = vpack.c.b16 %v1261, %v1259
        %v1302 = vpack.c.b16 %v1264, %v1262
        %v1303 = vpack.c.b16 %v1265, %v1263
        %v1304 = vpack.c.b16 %v1268, %v1266
        %v1305 = vpack.c.b16 %v1269, %v1267
        %v1306 = vpack.c.b16 %v1272, %v1270
        %v1307 = vpack.c.b16 %v1273, %v1271
        %v1308 = vpack.c.b16 %v1276, %v1274
        %v1309 = vpack.c.b16 %v1277, %v1275
        %1342 = vmatprep.subr.bf16.mxu0 %v1279
        %1343 = vmatpush1.bf16.msra.mxu0 %v1278
        %1344 = vmatprep.subr.bf16.mxu0 %v1281
        %1345 = vmatpush1.bf16.msra.mxu0 %v1280
        %1346 = vmatprep.subr.bf16.mxu0 %v1283
        %1347 = vmatpush1.bf16.msra.mxu0 %v1282
        %1348 = vmatprep.subr.bf16.mxu0 %v1285
        %1349 = vmatpush1.bf16.msra.mxu0 %v1284
        %1350 = vmatprep.subr.bf16.mxu0 %v1287
        %1351 = vmatpush1.bf16.msra.mxu0 %v1286
        %1352 = vmatprep.subr.bf16.mxu0 %v1289
        %1353 = vmatpush1.bf16.msra.mxu0 %v1288
        %1354 = vmatprep.subr.bf16.mxu0 %v1291
        %1355 = vmatpush1.bf16.msra.mxu0 %v1290
        %1356 = vmatprep.subr.bf16.mxu0 %v1293
        %1357 = vmatpush1.bf16.msra.mxu0 %v1292
        %1358 = vmatprep.subr.bf16.mxu0 %v1295
        %1359 = vmatpush1.bf16.msra.mxu0 %v1294
        %1360 = vmatprep.subr.bf16.mxu0 %v1297
        %1361 = vmatpush1.bf16.msra.mxu0 %v1296
        %1362 = vmatprep.subr.bf16.mxu0 %v1299
        %1363 = vmatpush1.bf16.msra.mxu0 %v1298
        %1364 = vmatprep.subr.bf16.mxu0 %v1301
        %1365 = vmatpush1.bf16.msra.mxu0 %v1300
        %1366 = vmatprep.subr.bf16.mxu0 %v1303
        %1367 = vmatpush1.bf16.msra.mxu0 %v1302
        %1368 = vmatprep.subr.bf16.mxu0 %v1305
        %1369 = vmatpush1.bf16.msra.mxu0 %v1304
        %1370 = vmatprep.subr.bf16.mxu0 %v1307
        %1371 = vmatpush1.bf16.msra.mxu0 %v1306
        %1372 = vmatprep.subr.bf16.mxu0 %v1309
        %1373 = vmatpush1.bf16.msra.mxu0 %v1308
        %1374 = vmatprep.mubr.bf16.mxu0 %v1114
        %1375 = vmatmul.mubr.bf16.gmra.mrb[0].mxu0 %v1113
        %v1376 = vpop.f32.mrb[0].mxu0
        %v1377 = vadd.f32 0.0, %v1376
        %v1378 = vpop.f32.mrb[0].mxu0
        %v1379 = vadd.f32 0.0, %v1378
        %v1380 = vpop.f32.mrb[0].mxu0
        %v1381 = vadd.f32 0.0, %v1380
        %v1382 = vpop.f32.mrb[0].mxu0
        %v1383 = vadd.f32 0.0, %v1382
        %1384 = vmatprep.mubr.bf16.mxu0 %v1116
        %1385 = vmatmul.mubr.bf16.gmra.mrb[0].mxu0 %v1115
        %v1386 = vpop.f32.mrb[0].mxu0
        %v1387 = vadd.f32 0.0, %v1386
        %v1388 = vpop.f32.mrb[0].mxu0
        %v1389 = vadd.f32 0.0, %v1388
        %v1390 = vpop.f32.mrb[0].mxu0
        %v1391 = vpop.f32.mrb[0].mxu0
        %1392 = vdwg.mxu0
        %v1393 = vrot.slane %v1377, 1
        %v1394 = vrot.slane %v1379, 1
        %v1395 = vrot.slane %v1381, 1
        %v1396 = vrot.slane %v1383, 1
        %v1397 = vrot.slane %v1387, 1
        %v1398 = vrot.slane %v1389, 1
        %v1399 = vsel %vm736, %v1395, %v1397
        %v1400 = vsel %vm736, %v1396, %v1398
        %v1401 = vsel %vm736, %v1393, %v1395
        %v1402 = vsel %vm736, %v1394, %v1396
        %v1435 = vunpack.c.l.b16 %v1117
        %v1436 = vunpack.c.h.b16 %v1117
        %v1437 = vunpack.c.l.b16 %v1118
        %v1438 = vunpack.c.h.b16 %v1118
        %v1439 = vunpack.c.l.b16 %v1119
        %v1440 = vunpack.c.h.b16 %v1119
        %v1441 = vunpack.c.l.b16 %v1120
        %v1442 = vunpack.c.h.b16 %v1120
        %v1443 = vunpack.c.l.b16 %v1121
        %v1444 = vunpack.c.h.b16 %v1121
        %v1445 = vunpack.c.l.b16 %v1122
        %v1446 = vunpack.c.h.b16 %v1122
        %v1447 = vunpack.c.l.b16 %v1123
        %v1448 = vunpack.c.h.b16 %v1123
        %v1449 = vunpack.c.l.b16 %v1124
        %v1450 = vunpack.c.h.b16 %v1124
        %v1451 = vunpack.c.l.b16 %v1125
        %v1452 = vunpack.c.h.b16 %v1125
        %v1453 = vunpack.c.l.b16 %v1126
        %v1454 = vunpack.c.h.b16 %v1126
        %v1455 = vunpack.c.l.b16 %v1127
        %v1456 = vunpack.c.h.b16 %v1127
        %v1457 = vunpack.c.l.b16 %v1128
        %v1458 = vunpack.c.h.b16 %v1128
        %v1459 = vunpack.c.l.b16 %v1129
        %v1460 = vunpack.c.h.b16 %v1129
        %v1461 = vunpack.c.l.b16 %v1130
        %v1462 = vunpack.c.h.b16 %v1130
        %v1463 = vunpack.c.l.b16 %v1131
        %v1464 = vunpack.c.h.b16 %v1131
        %v1465 = vunpack.c.l.b16 %v1132
        %v1466 = vunpack.c.h.b16 %v1132
        %v1467 = vunpack.c.l.b16 %v1133
        %v1468 = vunpack.c.h.b16 %v1133
        %v1469 = vunpack.c.l.b16 %v1134
        %v1470 = vunpack.c.h.b16 %v1134
        %v1471 = vunpack.c.l.b16 %v1135
        %v1472 = vunpack.c.h.b16 %v1135
        %v1473 = vunpack.c.l.b16 %v1136
        %v1474 = vunpack.c.h.b16 %v1136
        %v1475 = vunpack.c.l.b16 %v1137
        %v1476 = vunpack.c.h.b16 %v1137
        %v1477 = vunpack.c.l.b16 %v1138
        %v1478 = vunpack.c.h.b16 %v1138
        %v1479 = vunpack.c.l.b16 %v1139
        %v1480 = vunpack.c.h.b16 %v1139
        %v1481 = vunpack.c.l.b16 %v1140
        %v1482 = vunpack.c.h.b16 %v1140
        %v1483 = vunpack.c.l.b16 %v1141
        %v1484 = vunpack.c.h.b16 %v1141
        %v1485 = vunpack.c.l.b16 %v1142
        %v1486 = vunpack.c.h.b16 %v1142
        %v1487 = vunpack.c.l.b16 %v1143
        %v1488 = vunpack.c.h.b16 %v1143
        %v1489 = vunpack.c.l.b16 %v1144
        %v1490 = vunpack.c.h.b16 %v1144
        %v1491 = vunpack.c.l.b16 %v1145
        %v1492 = vunpack.c.h.b16 %v1145
        %v1493 = vunpack.c.l.b16 %v1146
        %v1494 = vunpack.c.h.b16 %v1146
        %v1495 = vunpack.c.l.b16 %v1147
        %v1496 = vunpack.c.h.b16 %v1147
        %v1497 = vunpack.c.l.b16 %v1148
        %v1498 = vunpack.c.h.b16 %v1148
        %v1499 = vpack.c.b16 %v1437, %v1435
        %v1500 = vpack.c.b16 %v1438, %v1436
        %v1501 = vpack.c.b16 %v1441, %v1439
        %v1502 = vpack.c.b16 %v1442, %v1440
        %v1503 = vpack.c.b16 %v1445, %v1443
        %v1504 = vpack.c.b16 %v1446, %v1444
        %v1505 = vpack.c.b16 %v1449, %v1447
        %v1506 = vpack.c.b16 %v1450, %v1448
        %v1507 = vpack.c.b16 %v1453, %v1451
        %v1508 = vpack.c.b16 %v1454, %v1452
        %v1509 = vpack.c.b16 %v1457, %v1455
        %v1510 = vpack.c.b16 %v1458, %v1456
        %v1511 = vpack.c.b16 %v1461, %v1459
        %v1512 = vpack.c.b16 %v1462, %v1460
        %v1513 = vpack.c.b16 %v1465, %v1463
        %v1514 = vpack.c.b16 %v1466, %v1464
        %v1515 = vpack.c.b16 %v1469, %v1467
        %v1516 = vpack.c.b16 %v1470, %v1468
        %v1517 = vpack.c.b16 %v1473, %v1471
        %v1518 = vpack.c.b16 %v1474, %v1472
        %v1519 = vpack.c.b16 %v1477, %v1475
        %v1520 = vpack.c.b16 %v1478, %v1476
        %v1521 = vpack.c.b16 %v1481, %v1479
        %v1522 = vpack.c.b16 %v1482, %v1480
        %v1523 = vpack.c.b16 %v1485, %v1483
        %v1524 = vpack.c.b16 %v1486, %v1484
        %v1525 = vpack.c.b16 %v1489, %v1487
        %v1526 = vpack.c.b16 %v1490, %v1488
        %v1527 = vpack.c.b16 %v1493, %v1491
        %v1528 = vpack.c.b16 %v1494, %v1492
        %v1529 = vpack.c.b16 %v1497, %v1495
        %v1530 = vpack.c.b16 %v1498, %v1496
        %1563 = vmatprep.subr.bf16.mxu0 %v1500
        %1564 = vmatpush1.bf16.msra.mxu0 %v1499
        %1565 = vmatprep.subr.bf16.mxu0 %v1502
        %1566 = vmatpush1.bf16.msra.mxu0 %v1501
        %1567 = vmatprep.subr.bf16.mxu0 %v1504
        %1568 = vmatpush1.bf16.msra.mxu0 %v1503
        %1569 = vmatprep.subr.bf16.mxu0 %v1506
        %1570 = vmatpush1.bf16.msra.mxu0 %v1505
        %1571 = vmatprep.subr.bf16.mxu0 %v1508
        %1572 = vmatpush1.bf16.msra.mxu0 %v1507
        %1573 = vmatprep.subr.bf16.mxu0 %v1510
        %1574 = vmatpush1.bf16.msra.mxu0 %v1509
        %1575 = vmatprep.subr.bf16.mxu0 %v1512
        %1576 = vmatpush1.bf16.msra.mxu0 %v1511
        %1577 = vmatprep.subr.bf16.mxu0 %v1514
        %1578 = vmatpush1.bf16.msra.mxu0 %v1513
        %1579 = vmatprep.subr.bf16.mxu0 %v1516
        %1580 = vmatpush1.bf16.msra.mxu0 %v1515
        %1581 = vmatprep.subr.bf16.mxu0 %v1518
        %1582 = vmatpush1.bf16.msra.mxu0 %v1517
        %1583 = vmatprep.subr.bf16.mxu0 %v1520
        %1584 = vmatpush1.bf16.msra.mxu0 %v1519
        %1585 = vmatprep.subr.bf16.mxu0 %v1522
        %1586 = vmatpush1.bf16.msra.mxu0 %v1521
        %1587 = vmatprep.subr.bf16.mxu0 %v1524
        %1588 = vmatpush1.bf16.msra.mxu0 %v1523
        %1589 = vmatprep.subr.bf16.mxu0 %v1526
        %1590 = vmatpush1.bf16.msra.mxu0 %v1525
        %1591 = vmatprep.subr.bf16.mxu0 %v1528
        %1592 = vmatpush1.bf16.msra.mxu0 %v1527
        %1593 = vmatprep.subr.bf16.mxu0 %v1530
        %1594 = vmatpush1.bf16.msra.mxu0 %v1529
        %1595 = vmatprep.mubr.bf16.mxu0 %v1114
        %1596 = vmatmul.mubr.bf16.gmra.mrb[0].mxu0 %v1113
        %v1597 = vpop.f32.mrb[0].mxu0
        %v1598 = vadd.f32 %v1401, %v1597
        %v1599 = vpop.f32.mrb[0].mxu0
        %v1600 = vadd.f32 %v1402, %v1599
        %v1601 = vpop.f32.mrb[0].mxu0
        %v1602 = vadd.f32 %v1399, %v1601
        %v1603 = vpop.f32.mrb[0].mxu0
        %v1604 = vadd.f32 %v1400, %v1603
        %1605 = vmatprep.mubr.bf16.mxu0 %v1116
        %1606 = vmatmul.mubr.bf16.gmra.mrb[0].mxu0 %v1115
        %v1607 = vpop.f32.mrb[0].mxu0
        %v1608 = vpop.f32.mrb[0].mxu0
        %v1609 = vpop.f32.mrb[0].mxu0
        %v1610 = vpop.f32.mrb[0].mxu0
        %1611 = vdwg.mxu0
        %s1612 = scalar_lea.vmem [#allocation6], 512
        %v1613 = vld [vmem:[%s1612] sm:$0xff]
        %v1614 = vld [vmem:[%s1612 + $0x8] sm:$0xff]
        %v1615 = vld [vmem:[%s1612 + $0x10] sm:$0xff]
        %v1616 = vld [vmem:[%s1612 + $0x18] sm:$0xff]
        %v1617 = vld [vmem:[%s1612 + $0x20] sm:$0xff]
        %v1618 = vld [vmem:[%s1612 + $0x28] sm:$0xff]
        %v1619 = vld [vmem:[%s1612 + $0x30] sm:$0xff]
        %v1620 = vld [vmem:[%s1612 + $0x38] sm:$0xff]
        %v1621 = vld [vmem:[%s1612 + $0x40] sm:$0xff]
        %v1622 = vld [vmem:[%s1612 + $0x48] sm:$0xff]
        %v1623 = vld [vmem:[%s1612 + $0x50] sm:$0xff]
        %v1624 = vld [vmem:[%s1612 + $0x58] sm:$0xff]
        %v1625 = vld [vmem:[%s1612 + $0x60] sm:$0xff]
        %v1626 = vld [vmem:[%s1612 + $0x68] sm:$0xff]
        %v1627 = vld [vmem:[%s1612 + $0x70] sm:$0xff]
        %v1628 = vld [vmem:[%s1612 + $0x78] sm:$0xff]
        %v1629 = vld [vmem:[%s1612 + $0x80] sm:$0xff]
        %v1630 = vld [vmem:[%s1612 + $0x88] sm:$0xff]
        %v1631 = vld [vmem:[%s1612 + $0x90] sm:$0xff]
        %v1632 = vld [vmem:[%s1612 + $0x98] sm:$0xff]
        %v1633 = vld [vmem:[%s1612 + $0xa0] sm:$0xff]
        %v1634 = vld [vmem:[%s1612 + $0xa8] sm:$0xff]
        %v1635 = vld [vmem:[%s1612 + $0xb0] sm:$0xff]
        %v1636 = vld [vmem:[%s1612 + $0xb8] sm:$0xff]
        %v1637 = vld [vmem:[%s1612 + $0xc0] sm:$0xff]
        %v1638 = vld [vmem:[%s1612 + $0xc8] sm:$0xff]
        %v1639 = vld [vmem:[%s1612 + $0xd0] sm:$0xff]
        %v1640 = vld [vmem:[%s1612 + $0xd8] sm:$0xff]
        %v1641 = vld [vmem:[%s1612 + $0xe0] sm:$0xff]
        %v1642 = vld [vmem:[%s1612 + $0xe8] sm:$0xff]
        %v1643 = vld [vmem:[%s1612 + $0xf0] sm:$0xff]
        %v1644 = vld [vmem:[%s1612 + $0xf8] sm:$0xff]
        %v1677 = vunpack.c.l.b16 %v1613
        %v1678 = vunpack.c.h.b16 %v1613
        %v1679 = vunpack.c.l.b16 %v1614
        %v1680 = vunpack.c.h.b16 %v1614
        %v1681 = vunpack.c.l.b16 %v1615
        %v1682 = vunpack.c.h.b16 %v1615
        %v1683 = vunpack.c.l.b16 %v1616
        %v1684 = vunpack.c.h.b16 %v1616
        %v1685 = vunpack.c.l.b16 %v1617
        %v1686 = vunpack.c.h.b16 %v1617
        %v1687 = vunpack.c.l.b16 %v1618
        %v1688 = vunpack.c.h.b16 %v1618
        %v1689 = vunpack.c.l.b16 %v1619
        %v1690 = vunpack.c.h.b16 %v1619
        %v1691 = vunpack.c.l.b16 %v1620
        %v1692 = vunpack.c.h.b16 %v1620
        %v1693 = vunpack.c.l.b16 %v1621
        %v1694 = vunpack.c.h.b16 %v1621
        %v1695 = vunpack.c.l.b16 %v1622
        %v1696 = vunpack.c.h.b16 %v1622
        %v1697 = vunpack.c.l.b16 %v1623
        %v1698 = vunpack.c.h.b16 %v1623
        %v1699 = vunpack.c.l.b16 %v1624
        %v1700 = vunpack.c.h.b16 %v1624
        %v1701 = vunpack.c.l.b16 %v1625
        %v1702 = vunpack.c.h.b16 %v1625
        %v1703 = vunpack.c.l.b16 %v1626
        %v1704 = vunpack.c.h.b16 %v1626
        %v1705 = vunpack.c.l.b16 %v1627
        %v1706 = vunpack.c.h.b16 %v1627
        %v1707 = vunpack.c.l.b16 %v1628
        %v1708 = vunpack.c.h.b16 %v1628
        %v1709 = vunpack.c.l.b16 %v1629
        %v1710 = vunpack.c.h.b16 %v1629
        %v1711 = vunpack.c.l.b16 %v1630
        %v1712 = vunpack.c.h.b16 %v1630
        %v1713 = vunpack.c.l.b16 %v1631
        %v1714 = vunpack.c.h.b16 %v1631
        %v1715 = vunpack.c.l.b16 %v1632
        %v1716 = vunpack.c.h.b16 %v1632
        %v1717 = vunpack.c.l.b16 %v1633
        %v1718 = vunpack.c.h.b16 %v1633
        %v1719 = vunpack.c.l.b16 %v1634
        %v1720 = vunpack.c.h.b16 %v1634
        %v1721 = vunpack.c.l.b16 %v1635
        %v1722 = vunpack.c.h.b16 %v1635
        %v1723 = vunpack.c.l.b16 %v1636
        %v1724 = vunpack.c.h.b16 %v1636
        %v1725 = vunpack.c.l.b16 %v1637
        %v1726 = vunpack.c.h.b16 %v1637
        %v1727 = vunpack.c.l.b16 %v1638
        %v1728 = vunpack.c.h.b16 %v1638
        %v1729 = vunpack.c.l.b16 %v1639
        %v1730 = vunpack.c.h.b16 %v1639
        %v1731 = vunpack.c.l.b16 %v1640
        %v1732 = vunpack.c.h.b16 %v1640
        %v1733 = vunpack.c.l.b16 %v1641
        %v1734 = vunpack.c.h.b16 %v1641
        %v1735 = vunpack.c.l.b16 %v1642
        %v1736 = vunpack.c.h.b16 %v1642
        %v1737 = vunpack.c.l.b16 %v1643
        %v1738 = vunpack.c.h.b16 %v1643
        %v1739 = vunpack.c.l.b16 %v1644
        %v1740 = vunpack.c.h.b16 %v1644
        %v1741 = vpack.c.b16 %v1679, %v1677
        %v1742 = vpack.c.b16 %v1680, %v1678
        %v1743 = vpack.c.b16 %v1683, %v1681
        %v1744 = vpack.c.b16 %v1684, %v1682
        %v1745 = vpack.c.b16 %v1687, %v1685
        %v1746 = vpack.c.b16 %v1688, %v1686
        %v1747 = vpack.c.b16 %v1691, %v1689
        %v1748 = vpack.c.b16 %v1692, %v1690
        %v1749 = vpack.c.b16 %v1695, %v1693
        %v1750 = vpack.c.b16 %v1696, %v1694
        %v1751 = vpack.c.b16 %v1699, %v1697
        %v1752 = vpack.c.b16 %v1700, %v1698
        %v1753 = vpack.c.b16 %v1703, %v1701
        %v1754 = vpack.c.b16 %v1704, %v1702
        %v1755 = vpack.c.b16 %v1707, %v1705
        %v1756 = vpack.c.b16 %v1708, %v1706
        %v1757 = vpack.c.b16 %v1711, %v1709
        %v1758 = vpack.c.b16 %v1712, %v1710
        %v1759 = vpack.c.b16 %v1715, %v1713
        %v1760 = vpack.c.b16 %v1716, %v1714
        %v1761 = vpack.c.b16 %v1719, %v1717
        %v1762 = vpack.c.b16 %v1720, %v1718
        %v1763 = vpack.c.b16 %v1723, %v1721
        %v1764 = vpack.c.b16 %v1724, %v1722
        %v1765 = vpack.c.b16 %v1727, %v1725
        %v1766 = vpack.c.b16 %v1728, %v1726
        %v1767 = vpack.c.b16 %v1731, %v1729
        %v1768 = vpack.c.b16 %v1732, %v1730
        %v1769 = vpack.c.b16 %v1735, %v1733
        %v1770 = vpack.c.b16 %v1736, %v1734
        %v1771 = vpack.c.b16 %v1739, %v1737
        %v1772 = vpack.c.b16 %v1740, %v1738
        %1805 = vmatprep.subr.bf16.mxu0 %v1742
        %1806 = vmatpush1.bf16.msra.mxu0 %v1741
        %1807 = vmatprep.subr.bf16.mxu0 %v1744
        %1808 = vmatpush1.bf16.msra.mxu0 %v1743
        %1809 = vmatprep.subr.bf16.mxu0 %v1746
        %1810 = vmatpush1.bf16.msra.mxu0 %v1745
        %1811 = vmatprep.subr.bf16.mxu0 %v1748
        %1812 = vmatpush1.bf16.msra.mxu0 %v1747
        %1813 = vmatprep.subr.bf16.mxu0 %v1750
        %1814 = vmatpush1.bf16.msra.mxu0 %v1749
        %1815 = vmatprep.subr.bf16.mxu0 %v1752
        %1816 = vmatpush1.bf16.msra.mxu0 %v1751
        %1817 = vmatprep.subr.bf16.mxu0 %v1754
        %1818 = vmatpush1.bf16.msra.mxu0 %v1753
        %1819 = vmatprep.subr.bf16.mxu0 %v1756
        %1820 = vmatpush1.bf16.msra.mxu0 %v1755
        %1821 = vmatprep.subr.bf16.mxu0 %v1758
        %1822 = vmatpush1.bf16.msra.mxu0 %v1757
        %1823 = vmatprep.subr.bf16.mxu0 %v1760
        %1824 = vmatpush1.bf16.msra.mxu0 %v1759
        %1825 = vmatprep.subr.bf16.mxu0 %v1762
        %1826 = vmatpush1.bf16.msra.mxu0 %v1761
        %1827 = vmatprep.subr.bf16.mxu0 %v1764
        %1828 = vmatpush1.bf16.msra.mxu0 %v1763
        %1829 = vmatprep.subr.bf16.mxu0 %v1766
        %1830 = vmatpush1.bf16.msra.mxu0 %v1765
        %1831 = vmatprep.subr.bf16.mxu0 %v1768
        %1832 = vmatpush1.bf16.msra.mxu0 %v1767
        %1833 = vmatprep.subr.bf16.mxu0 %v1770
        %1834 = vmatpush1.bf16.msra.mxu0 %v1769
        %1835 = vmatprep.subr.bf16.mxu0 %v1772
        %1836 = vmatpush1.bf16.msra.mxu0 %v1771
        %1837 = vmatprep.mubr.bf16.mxu0 %v1114
        %1838 = vmatmul.mubr.bf16.gmra.mrb[0].mxu0 %v1113
        %v1839 = vpop.f32.mrb[0].mxu0
        %v1840 = vadd.f32 0.0, %v1839
        %v1841 = vpop.f32.mrb[0].mxu0
        %v1842 = vadd.f32 0.0, %v1841
        %v1843 = vpop.f32.mrb[0].mxu0
        %v1844 = vadd.f32 0.0, %v1843
        %v1845 = vpop.f32.mrb[0].mxu0
        %v1846 = vadd.f32 0.0, %v1845
        %1847 = vmatprep.mubr.bf16.mxu0 %v1116
        %1848 = vmatmul.mubr.bf16.gmra.mrb[0].mxu0 %v1115
        %v1849 = vpop.f32.mrb[0].mxu0
        %v1850 = vadd.f32 0.0, %v1849
        %v1851 = vpop.f32.mrb[0].mxu0
        %v1852 = vadd.f32 0.0, %v1851
        %v1853 = vpop.f32.mrb[0].mxu0
        %v1854 = vpop.f32.mrb[0].mxu0
        %1855 = vdwg.mxu0
        %v1856 = vrot.slane %v1840, 2
        %v1857 = vrot.slane %v1842, 2
        %v1858 = vrot.slane %v1844, 2
        %v1859 = vrot.slane %v1846, 2
        %v1860 = vrot.slane %v1850, 2
        %v1861 = vrot.slane %v1852, 2
        %v1862 = vsel %vm875, %v1858, %v1860
        %v1863 = vsel %vm875, %v1859, %v1861
        %v1864 = vsel %vm875, %v1856, %v1858
        %v1865 = vsel %vm875, %v1857, %v1859
        %v1866 = vadd.f32 %v1598, %v1864
        %v1867 = vadd.f32 %v1600, %v1865
        %v1868 = vadd.f32 %v1602, %v1862
        %v1869 = vadd.f32 %v1604, %v1863
        %s1870 = scalar_lea.vmem [#allocation6], 768
        %v1871 = vld [vmem:[%s1870] sm:$0xff]
        %v1872 = vld [vmem:[%s1870 + $0x8] sm:$0xff]
        %v1873 = vld [vmem:[%s1870 + $0x10] sm:$0xff]
        %v1874 = vld [vmem:[%s1870 + $0x18] sm:$0xff]
        %v1875 = vld [vmem:[%s1870 + $0x20] sm:$0xff]
        %v1876 = vld [vmem:[%s1870 + $0x28] sm:$0xff]
        %v1877 = vld [vmem:[%s1870 + $0x30] sm:$0xff]
        %v1878 = vld [vmem:[%s1870 + $0x38] sm:$0xff]
        %v1879 = vld [vmem:[%s1870 + $0x40] sm:$0xff]
        %v1880 = vld [vmem:[%s1870 + $0x48] sm:$0xff]
        %v1881 = vld [vmem:[%s1870 + $0x50] sm:$0xff]
        %v1882 = vld [vmem:[%s1870 + $0x58] sm:$0xff]
        %v1883 = vld [vmem:[%s1870 + $0x60] sm:$0xff]
        %v1884 = vld [vmem:[%s1870 + $0x68] sm:$0xff]
        %v1885 = vld [vmem:[%s1870 + $0x70] sm:$0xff]
        %v1886 = vld [vmem:[%s1870 + $0x78] sm:$0xff]
        %v1887 = vld [vmem:[%s1870 + $0x80] sm:$0xff]
        %v1888 = vld [vmem:[%s1870 + $0x88] sm:$0xff]
        %v1889 = vld [vmem:[%s1870 + $0x90] sm:$0xff]
        %v1890 = vld [vmem:[%s1870 + $0x98] sm:$0xff]
        %v1891 = vld [vmem:[%s1870 + $0xa0] sm:$0xff]
        %v1892 = vld [vmem:[%s1870 + $0xa8] sm:$0xff]
        %v1893 = vld [vmem:[%s1870 + $0xb0] sm:$0xff]
        %v1894 = vld [vmem:[%s1870 + $0xb8] sm:$0xff]
        %v1895 = vld [vmem:[%s1870 + $0xc0] sm:$0xff]
        %v1896 = vld [vmem:[%s1870 + $0xc8] sm:$0xff]
        %v1897 = vld [vmem:[%s1870 + $0xd0] sm:$0xff]
        %v1898 = vld [vmem:[%s1870 + $0xd8] sm:$0xff]
        %v1899 = vld [vmem:[%s1870 + $0xe0] sm:$0xff]
        %v1900 = vld [vmem:[%s1870 + $0xe8] sm:$0xff]
        %v1901 = vld [vmem:[%s1870 + $0xf0] sm:$0xff]
        %v1902 = vld [vmem:[%s1870 + $0xf8] sm:$0xff]
        %v1935 = vunpack.c.l.b16 %v1871
        %v1936 = vunpack.c.h.b16 %v1871
        %v1937 = vunpack.c.l.b16 %v1872
        %v1938 = vunpack.c.h.b16 %v1872
        %v1939 = vunpack.c.l.b16 %v1873
        %v1940 = vunpack.c.h.b16 %v1873
        %v1941 = vunpack.c.l.b16 %v1874
        %v1942 = vunpack.c.h.b16 %v1874
        %v1943 = vunpack.c.l.b16 %v1875
        %v1944 = vunpack.c.h.b16 %v1875
        %v1945 = vunpack.c.l.b16 %v1876
        %v1946 = vunpack.c.h.b16 %v1876
        %v1947 = vunpack.c.l.b16 %v1877
        %v1948 = vunpack.c.h.b16 %v1877
        %v1949 = vunpack.c.l.b16 %v1878
        %v1950 = vunpack.c.h.b16 %v1878
        %v1951 = vunpack.c.l.b16 %v1879
        %v1952 = vunpack.c.h.b16 %v1879
        %v1953 = vunpack.c.l.b16 %v1880
        %v1954 = vunpack.c.h.b16 %v1880
        %v1955 = vunpack.c.l.b16 %v1881
        %v1956 = vunpack.c.h.b16 %v1881
        %v1957 = vunpack.c.l.b16 %v1882
        %v1958 = vunpack.c.h.b16 %v1882
        %v1959 = vunpack.c.l.b16 %v1883
        %v1960 = vunpack.c.h.b16 %v1883
        %v1961 = vunpack.c.l.b16 %v1884
        %v1962 = vunpack.c.h.b16 %v1884
        %v1963 = vunpack.c.l.b16 %v1885
        %v1964 = vunpack.c.h.b16 %v1885
        %v1965 = vunpack.c.l.b16 %v1886
        %v1966 = vunpack.c.h.b16 %v1886
        %v1967 = vunpack.c.l.b16 %v1887
        %v1968 = vunpack.c.h.b16 %v1887
        %v1969 = vunpack.c.l.b16 %v1888
        %v1970 = vunpack.c.h.b16 %v1888
        %v1971 = vunpack.c.l.b16 %v1889
        %v1972 = vunpack.c.h.b16 %v1889
        %v1973 = vunpack.c.l.b16 %v1890
        %v1974 = vunpack.c.h.b16 %v1890
        %v1975 = vunpack.c.l.b16 %v1891
        %v1976 = vunpack.c.h.b16 %v1891
        %v1977 = vunpack.c.l.b16 %v1892
        %v1978 = vunpack.c.h.b16 %v1892
        %v1979 = vunpack.c.l.b16 %v1893
        %v1980 = vunpack.c.h.b16 %v1893
        %v1981 = vunpack.c.l.b16 %v1894
        %v1982 = vunpack.c.h.b16 %v1894
        %v1983 = vunpack.c.l.b16 %v1895
        %v1984 = vunpack.c.h.b16 %v1895
        %v1985 = vunpack.c.l.b16 %v1896
        %v1986 = vunpack.c.h.b16 %v1896
        %v1987 = vunpack.c.l.b16 %v1897
        %v1988 = vunpack.c.h.b16 %v1897
        %v1989 = vunpack.c.l.b16 %v1898
        %v1990 = vunpack.c.h.b16 %v1898
        %v1991 = vunpack.c.l.b16 %v1899
        %v1992 = vunpack.c.h.b16 %v1899
        %v1993 = vunpack.c.l.b16 %v1900
        %v1994 = vunpack.c.h.b16 %v1900
        %v1995 = vunpack.c.l.b16 %v1901
        %v1996 = vunpack.c.h.b16 %v1901
        %v1997 = vunpack.c.l.b16 %v1902
        %v1998 = vunpack.c.h.b16 %v1902
        %v1999 = vpack.c.b16 %v1937, %v1935
        %v2000 = vpack.c.b16 %v1938, %v1936
        %v2001 = vpack.c.b16 %v1941, %v1939
        %v2002 = vpack.c.b16 %v1942, %v1940
        %v2003 = vpack.c.b16 %v1945, %v1943
        %v2004 = vpack.c.b16 %v1946, %v1944
        %v2005 = vpack.c.b16 %v1949, %v1947
        %v2006 = vpack.c.b16 %v1950, %v1948
        %v2007 = vpack.c.b16 %v1953, %v1951
        %v2008 = vpack.c.b16 %v1954, %v1952
        %v2009 = vpack.c.b16 %v1957, %v1955
        %v2010 = vpack.c.b16 %v1958, %v1956
        %v2011 = vpack.c.b16 %v1961, %v1959
        %v2012 = vpack.c.b16 %v1962, %v1960
        %v2013 = vpack.c.b16 %v1965, %v1963
        %v2014 = vpack.c.b16 %v1966, %v1964
        %v2015 = vpack.c.b16 %v1969, %v1967
        %v2016 = vpack.c.b16 %v1970, %v1968
        %v2017 = vpack.c.b16 %v1973, %v1971
        %v2018 = vpack.c.b16 %v1974, %v1972
        %v2019 = vpack.c.b16 %v1977, %v1975
        %v2020 = vpack.c.b16 %v1978, %v1976
        %v2021 = vpack.c.b16 %v1981, %v1979
        %v2022 = vpack.c.b16 %v1982, %v1980
        %v2023 = vpack.c.b16 %v1985, %v1983
        %v2024 = vpack.c.b16 %v1986, %v1984
        %v2025 = vpack.c.b16 %v1989, %v1987
        %v2026 = vpack.c.b16 %v1990, %v1988
        %v2027 = vpack.c.b16 %v1993, %v1991
        %v2028 = vpack.c.b16 %v1994, %v1992
        %v2029 = vpack.c.b16 %v1997, %v1995
        %v2030 = vpack.c.b16 %v1998, %v1996
        %2063 = vmatprep.subr.bf16.mxu0 %v2000
        %2064 = vmatpush1.bf16.msra.mxu0 %v1999
        %2065 = vmatprep.subr.bf16.mxu0 %v2002
        %2066 = vmatpush1.bf16.msra.mxu0 %v2001
        %2067 = vmatprep.subr.bf16.mxu0 %v2004
        %2068 = vmatpush1.bf16.msra.mxu0 %v2003
        %2069 = vmatprep.subr.bf16.mxu0 %v2006
        %2070 = vmatpush1.bf16.msra.mxu0 %v2005
        %2071 = vmatprep.subr.bf16.mxu0 %v2008
        %2072 = vmatpush1.bf16.msra.mxu0 %v2007
        %2073 = vmatprep.subr.bf16.mxu0 %v2010
        %2074 = vmatpush1.bf16.msra.mxu0 %v2009
        %2075 = vmatprep.subr.bf16.mxu0 %v2012
        %2076 = vmatpush1.bf16.msra.mxu0 %v2011
        %2077 = vmatprep.subr.bf16.mxu0 %v2014
        %2078 = vmatpush1.bf16.msra.mxu0 %v2013
        %2079 = vmatprep.subr.bf16.mxu0 %v2016
        %2080 = vmatpush1.bf16.msra.mxu0 %v2015
        %2081 = vmatprep.subr.bf16.mxu0 %v2018
        %2082 = vmatpush1.bf16.msra.mxu0 %v2017
        %2083 = vmatprep.subr.bf16.mxu0 %v2020
        %2084 = vmatpush1.bf16.msra.mxu0 %v2019
        %2085 = vmatprep.subr.bf16.mxu0 %v2022
        %2086 = vmatpush1.bf16.msra.mxu0 %v2021
        %2087 = vmatprep.subr.bf16.mxu0 %v2024
        %2088 = vmatpush1.bf16.msra.mxu0 %v2023
        %2089 = vmatprep.subr.bf16.mxu0 %v2026
        %2090 = vmatpush1.bf16.msra.mxu0 %v2025
        %2091 = vmatprep.subr.bf16.mxu0 %v2028
        %2092 = vmatpush1.bf16.msra.mxu0 %v2027
        %2093 = vmatprep.subr.bf16.mxu0 %v2030
        %2094 = vmatpush1.bf16.msra.mxu0 %v2029
        %2095 = vmatprep.mubr.bf16.mxu0 %v1114
        %2096 = vmatmul.mubr.bf16.gmra.mrb[0].mxu0 %v1113
        %v2097 = vpop.f32.mrb[0].mxu0
        %v2098 = vadd.f32 0.0, %v2097
        %v2099 = vpop.f32.mrb[0].mxu0
        %v2100 = vadd.f32 0.0, %v2099
        %v2101 = vpop.f32.mrb[0].mxu0
        %v2102 = vadd.f32 0.0, %v2101
        %v2103 = vpop.f32.mrb[0].mxu0
        %v2104 = vadd.f32 0.0, %v2103
        %2105 = vmatprep.mubr.bf16.mxu0 %v1116
        %2106 = vmatmul.mubr.bf16.gmra.mrb[0].mxu0 %v1115
        %v2107 = vpop.f32.mrb[0].mxu0
        %v2108 = vadd.f32 0.0, %v2107
        %v2109 = vpop.f32.mrb[0].mxu0
        %v2110 = vadd.f32 0.0, %v2109
        %v2111 = vpop.f32.mrb[0].mxu0
        %v2112 = vpop.f32.mrb[0].mxu0
        %2113 = vdwg.mxu0
        %v2114 = vrot.slane %v2098, 3
        %v2115 = vrot.slane %v2100, 3
        %v2116 = vrot.slane %v2102, 3
        %v2117 = vrot.slane %v2104, 3
        %v2118 = vrot.slane %v2108, 3
        %v2119 = vrot.slane %v2110, 3
        %v2120 = vsel %vm958, %v2116, %v2118
        %v2121 = vsel %vm958, %v2117, %v2119
        %v2122 = vsel %vm958, %v2114, %v2116
        %v2123 = vsel %vm958, %v2115, %v2117
        %v2124 = vadd.f32 %v1866, %v2122
        %v2125 = vadd.f32 %v1867, %v2123
        %v2126 = vadd.f32 %v1868, %v2120
        %v2127 = vadd.f32 %v1869, %v2121
        %s2128 = scalar_lea.vmem [#allocation6], 1024
        %v2129 = vld [vmem:[%s2128] sm:$0xff]
        %v2130 = vld [vmem:[%s2128 + $0x8] sm:$0xff]
        %v2131 = vld [vmem:[%s2128 + $0x10] sm:$0xff]
        %v2132 = vld [vmem:[%s2128 + $0x18] sm:$0xff]
        %v2133 = vld [vmem:[%s2128 + $0x20] sm:$0xff]
        %v2134 = vld [vmem:[%s2128 + $0x28] sm:$0xff]
        %v2135 = vld [vmem:[%s2128 + $0x30] sm:$0xff]
        %v2136 = vld [vmem:[%s2128 + $0x38] sm:$0xff]
        %v2137 = vld [vmem:[%s2128 + $0x40] sm:$0xff]
        %v2138 = vld [vmem:[%s2128 + $0x48] sm:$0xff]
        %v2139 = vld [vmem:[%s2128 + $0x50] sm:$0xff]
        %v2140 = vld [vmem:[%s2128 + $0x58] sm:$0xff]
        %v2141 = vld [vmem:[%s2128 + $0x60] sm:$0xff]
        %v2142 = vld [vmem:[%s2128 + $0x68] sm:$0xff]
        %v2143 = vld [vmem:[%s2128 + $0x70] sm:$0xff]
        %v2144 = vld [vmem:[%s2128 + $0x78] sm:$0xff]
        %v2145 = vld [vmem:[%s2128 + $0x80] sm:$0xff]
        %v2146 = vld [vmem:[%s2128 + $0x88] sm:$0xff]
        %v2147 = vld [vmem:[%s2128 + $0x90] sm:$0xff]
        %v2148 = vld [vmem:[%s2128 + $0x98] sm:$0xff]
        %v2149 = vld [vmem:[%s2128 + $0xa0] sm:$0xff]
        %v2150 = vld [vmem:[%s2128 + $0xa8] sm:$0xff]
        %v2151 = vld [vmem:[%s2128 + $0xb0] sm:$0xff]
        %v2152 = vld [vmem:[%s2128 + $0xb8] sm:$0xff]
        %v2153 = vld [vmem:[%s2128 + $0xc0] sm:$0xff]
        %v2154 = vld [vmem:[%s2128 + $0xc8] sm:$0xff]
        %v2155 = vld [vmem:[%s2128 + $0xd0] sm:$0xff]
        %v2156 = vld [vmem:[%s2128 + $0xd8] sm:$0xff]
        %v2157 = vld [vmem:[%s2128 + $0xe0] sm:$0xff]
        %v2158 = vld [vmem:[%s2128 + $0xe8] sm:$0xff]
        %v2159 = vld [vmem:[%s2128 + $0xf0] sm:$0xff]
        %v2160 = vld [vmem:[%s2128 + $0xf8] sm:$0xff]
        %v2193 = vunpack.c.l.b16 %v2129
        %v2194 = vunpack.c.h.b16 %v2129
        %v2195 = vunpack.c.l.b16 %v2130
        %v2196 = vunpack.c.h.b16 %v2130
        %v2197 = vunpack.c.l.b16 %v2131
        %v2198 = vunpack.c.h.b16 %v2131
        %v2199 = vunpack.c.l.b16 %v2132
        %v2200 = vunpack.c.h.b16 %v2132
        %v2201 = vunpack.c.l.b16 %v2133
        %v2202 = vunpack.c.h.b16 %v2133
        %v2203 = vunpack.c.l.b16 %v2134
        %v2204 = vunpack.c.h.b16 %v2134
        %v2205 = vunpack.c.l.b16 %v2135
        %v2206 = vunpack.c.h.b16 %v2135
        %v2207 = vunpack.c.l.b16 %v2136
        %v2208 = vunpack.c.h.b16 %v2136
        %v2209 = vunpack.c.l.b16 %v2137
        %v2210 = vunpack.c.h.b16 %v2137
        %v2211 = vunpack.c.l.b16 %v2138
        %v2212 = vunpack.c.h.b16 %v2138
        %v2213 = vunpack.c.l.b16 %v2139
        %v2214 = vunpack.c.h.b16 %v2139
        %v2215 = vunpack.c.l.b16 %v2140
        %v2216 = vunpack.c.h.b16 %v2140
        %v2217 = vunpack.c.l.b16 %v2141
        %v2218 = vunpack.c.h.b16 %v2141
        %v2219 = vunpack.c.l.b16 %v2142
        %v2220 = vunpack.c.h.b16 %v2142
        %v2221 = vunpack.c.l.b16 %v2143
        %v2222 = vunpack.c.h.b16 %v2143
        %v2223 = vunpack.c.l.b16 %v2144
        %v2224 = vunpack.c.h.b16 %v2144
        %v2225 = vunpack.c.l.b16 %v2145
        %v2226 = vunpack.c.h.b16 %v2145
        %v2227 = vunpack.c.l.b16 %v2146
        %v2228 = vunpack.c.h.b16 %v2146
        %v2229 = vunpack.c.l.b16 %v2147
        %v2230 = vunpack.c.h.b16 %v2147
        %v2231 = vunpack.c.l.b16 %v2148
        %v2232 = vunpack.c.h.b16 %v2148
        %v2233 = vunpack.c.l.b16 %v2149
        %v2234 = vunpack.c.h.b16 %v2149
        %v2235 = vunpack.c.l.b16 %v2150
        %v2236 = vunpack.c.h.b16 %v2150
        %v2237 = vunpack.c.l.b16 %v2151
        %v2238 = vunpack.c.h.b16 %v2151
        %v2239 = vunpack.c.l.b16 %v2152
        %v2240 = vunpack.c.h.b16 %v2152
        %v2241 = vunpack.c.l.b16 %v2153
        %v2242 = vunpack.c.h.b16 %v2153
        %v2243 = vunpack.c.l.b16 %v2154
        %v2244 = vunpack.c.h.b16 %v2154
        %v2245 = vunpack.c.l.b16 %v2155
        %v2246 = vunpack.c.h.b16 %v2155
        %v2247 = vunpack.c.l.b16 %v2156
        %v2248 = vunpack.c.h.b16 %v2156
        %v2249 = vunpack.c.l.b16 %v2157
        %v2250 = vunpack.c.h.b16 %v2157
        %v2251 = vunpack.c.l.b16 %v2158
        %v2252 = vunpack.c.h.b16 %v2158
        %v2253 = vunpack.c.l.b16 %v2159
        %v2254 = vunpack.c.h.b16 %v2159
        %v2255 = vunpack.c.l.b16 %v2160
        %v2256 = vunpack.c.h.b16 %v2160
        %v2257 = vpack.c.b16 %v2195, %v2193
        %v2258 = vpack.c.b16 %v2196, %v2194
        %v2259 = vpack.c.b16 %v2199, %v2197
        %v2260 = vpack.c.b16 %v2200, %v2198
        %v2261 = vpack.c.b16 %v2203, %v2201
        %v2262 = vpack.c.b16 %v2204, %v2202
        %v2263 = vpack.c.b16 %v2207, %v2205
        %v2264 = vpack.c.b16 %v2208, %v2206
        %v2265 = vpack.c.b16 %v2211, %v2209
        %v2266 = vpack.c.b16 %v2212, %v2210
        %v2267 = vpack.c.b16 %v2215, %v2213
        %v2268 = vpack.c.b16 %v2216, %v2214
        %v2269 = vpack.c.b16 %v2219, %v2217
        %v2270 = vpack.c.b16 %v2220, %v2218
        %v2271 = vpack.c.b16 %v2223, %v2221
        %v2272 = vpack.c.b16 %v2224, %v2222
        %v2273 = vpack.c.b16 %v2227, %v2225
        %v2274 = vpack.c.b16 %v2228, %v2226
        %v2275 = vpack.c.b16 %v2231, %v2229
        %v2276 = vpack.c.b16 %v2232, %v2230
        %v2277 = vpack.c.b16 %v2235, %v2233
        %v2278 = vpack.c.b16 %v2236, %v2234
        %v2279 = vpack.c.b16 %v2239, %v2237
        %v2280 = vpack.c.b16 %v2240, %v2238
        %v2281 = vpack.c.b16 %v2243, %v2241
        %v2282 = vpack.c.b16 %v2244, %v2242
        %v2283 = vpack.c.b16 %v2247, %v2245
        %v2284 = vpack.c.b16 %v2248, %v2246
        %v2285 = vpack.c.b16 %v2251, %v2249
        %v2286 = vpack.c.b16 %v2252, %v2250
        %v2287 = vpack.c.b16 %v2255, %v2253
        %v2288 = vpack.c.b16 %v2256, %v2254
        %2321 = vmatprep.subr.bf16.mxu0 %v2258
        %2322 = vmatpush1.bf16.msra.mxu0 %v2257
        %2323 = vmatprep.subr.bf16.mxu0 %v2260
        %2324 = vmatpush1.bf16.msra.mxu0 %v2259
        %2325 = vmatprep.subr.bf16.mxu0 %v2262
        %2326 = vmatpush1.bf16.msra.mxu0 %v2261
        %2327 = vmatprep.subr.bf16.mxu0 %v2264
        %2328 = vmatpush1.bf16.msra.mxu0 %v2263
        %2329 = vmatprep.subr.bf16.mxu0 %v2266
        %2330 = vmatpush1.bf16.msra.mxu0 %v2265
        %2331 = vmatprep.subr.bf16.mxu0 %v2268
        %2332 = vmatpush1.bf16.msra.mxu0 %v2267
        %2333 = vmatprep.subr.bf16.mxu0 %v2270
        %2334 = vmatpush1.bf16.msra.mxu0 %v2269
        %2335 = vmatprep.subr.bf16.mxu0 %v2272
        %2336 = vmatpush1.bf16.msra.mxu0 %v2271
        %2337 = vmatprep.subr.bf16.mxu0 %v2274
        %2338 = vmatpush1.bf16.msra.mxu0 %v2273
        %2339 = vmatprep.subr.bf16.mxu0 %v2276
        %2340 = vmatpush1.bf16.msra.mxu0 %v2275
        %2341 = vmatprep.subr.bf16.mxu0 %v2278
        %2342 = vmatpush1.bf16.msra.mxu0 %v2277
        %2343 = vmatprep.subr.bf16.mxu0 %v2280
        %2344 = vmatpush1.bf16.msra.mxu0 %v2279
        %2345 = vmatprep.subr.bf16.mxu0 %v2282
        %2346 = vmatpush1.bf16.msra.mxu0 %v2281
        %2347 = vmatprep.subr.bf16.mxu0 %v2284
        %2348 = vmatpush1.bf16.msra.mxu0 %v2283
        %2349 = vmatprep.subr.bf16.mxu0 %v2286
        %2350 = vmatpush1.bf16.msra.mxu0 %v2285
        %2351 = vmatprep.subr.bf16.mxu0 %v2288
        %2352 = vmatpush1.bf16.msra.mxu0 %v2287
        %2353 = vmatprep.mubr.bf16.mxu0 %v1114
        %2354 = vmatmul.mubr.bf16.gmra.mrb[0].mxu0 %v1113
        %v2355 = vpop.f32.mrb[0].mxu0
        %v2356 = vadd.f32 0.0, %v2355
        %v2357 = vpop.f32.mrb[0].mxu0
        %v2358 = vadd.f32 0.0, %v2357
        %v2359 = vpop.f32.mrb[0].mxu0
        %v2360 = vadd.f32 0.0, %v2359
        %v2361 = vpop.f32.mrb[0].mxu0
        %v2362 = vadd.f32 0.0, %v2361
        %2363 = vmatprep.mubr.bf16.mxu0 %v1116
        %2364 = vmatmul.mubr.bf16.gmra.mrb[0].mxu0 %v1115
        %v2365 = vpop.f32.mrb[0].mxu0
        %v2366 = vadd.f32 0.0, %v2365
        %v2367 = vpop.f32.mrb[0].mxu0
        %v2368 = vadd.f32 0.0, %v2367
        %v2369 = vpop.f32.mrb[0].mxu0
        %v2370 = vpop.f32.mrb[0].mxu0
        %2371 = vdwg.mxu0
        %v2372 = vrot.slane %v2356, 4
        %v2373 = vrot.slane %v2358, 4
        %v2374 = vrot.slane %v2360, 4
        %v2375 = vrot.slane %v2362, 4
        %v2376 = vrot.slane %v2366, 4
        %v2377 = vrot.slane %v2368, 4
        %v2378 = vsel %vm1041, %v2374, %v2376
        %v2379 = vsel %vm1041, %v2375, %v2377
        %v2380 = vsel %vm1041, %v2372, %v2374
        %v2381 = vsel %vm1041, %v2373, %v2375
        %v2382 = vadd.f32 %v2124, %v2380
        %v2383 = vadd.f32 %v2125, %v2381
        %v2384 = vadd.f32 %v2126, %v2378
        %v2385 = vadd.f32 %v2127, %v2379
        %v2386 = vld [vmem:[%s5] sm:$0x3]
        %v2388 = vlaneseq
        %v2389 = vshrl.u32 %v2388, 7
        %v2390 = vsub.s32 0, %v2389
        %v2391 = vrot.slane %v2386, %v2390
        %v2392 = vlaneseq
        %v2393 = vshrl.u32 %v2392, 7
        %v2394 = vsub.s32 1, %v2393
        %v2395 = vrot.slane %v2386, %v2394
        %v2398 = vadd.f32 %v2382, %v2391
        %v2399 = vadd.f32 %v2383, %v2395
        %v2400 = vadd.f32 %v2384, %v2391
        %v2401 = vadd.f32 %v2385, %v2395
        %v2402 = vmul.f32 %v2398, 0.01
        %v2403 = vmul.f32 %v2399, 0.01
        %v2404 = vmul.f32 %v2400, 0.01
        %v2405 = vmul.f32 %v2401, 0.01
        %v2406 = vmax.f32 %v2398, %v2402
        %v2407 = vmax.f32 %v2399, %v2403
        %v2408 = vmax.f32 %v2400, %v2404
        %v2409 = vmax.f32 %v2401, %v2405
        %v2410 = vpack.c.bf16 %v2408, %v2406
        %v2411 = vpack.c.bf16 %v2409, %v2407
        %s2412 = sld [smem:[#allocation2]]
        %v2413 = vstv %s2412
        %v2414 = vrcp.pop %v2413
        %s2415 = vtos %v2414
        %v2416 = vld [vmem:[#allocation8] sm:$0xf]
        %v2417 = vld [vmem:[#allocation8 + $0x4] sm:$0xf]
        %v2418 = vld [vmem:[#allocation8 + $0x8] sm:$0xf]
        %v2419 = vld [vmem:[#allocation8 + $0xc] sm:$0xf]
        %v2420 = vld [vmem:[#allocation8 + $0x10] sm:$0xf]
        %v2421 = vld [vmem:[#allocation8 + $0x14] sm:$0xf]
        %v2422 = vld [vmem:[#allocation8 + $0x18] sm:$0xf]
        %v2423 = vld [vmem:[#allocation8 + $0x1c] sm:$0xf]
        %v2424 = vld [vmem:[#allocation8 + $0x20] sm:$0xf]
        %v2425 = vld [vmem:[#allocation8 + $0x24] sm:$0xf]
        %v2426 = vld [vmem:[#allocation8 + $0x28] sm:$0xf]
        %v2427 = vld [vmem:[#allocation8 + $0x2c] sm:$0xf]
        %v2428 = vld [vmem:[#allocation8 + $0x30] sm:$0xf]
        %v2429 = vld [vmem:[#allocation8 + $0x34] sm:$0xf]
        %v2430 = vld [vmem:[#allocation8 + $0x38] sm:$0xf]
        %v2431 = vld [vmem:[#allocation8 + $0x3c] sm:$0xf]
        %v2432 = vld [vmem:[#allocation8 + $0x40] sm:$0xf]
        %v2433 = vld [vmem:[#allocation8 + $0x44] sm:$0xf]
        %v2434 = vld [vmem:[#allocation8 + $0x48] sm:$0xf]
        %v2435 = vld [vmem:[#allocation8 + $0x4c] sm:$0xf]
        %v2436 = vld [vmem:[#allocation8 + $0x50] sm:$0xf]
        %v2437 = vld [vmem:[#allocation8 + $0x54] sm:$0xf]
        %v2438 = vld [vmem:[#allocation8 + $0x58] sm:$0xf]
        %v2439 = vld [vmem:[#allocation8 + $0x5c] sm:$0xf]
        %v2440 = vld [vmem:[#allocation8 + $0x60] sm:$0xf]
        %v2441 = vld [vmem:[#allocation8 + $0x64] sm:$0xf]
        %v2442 = vld [vmem:[#allocation8 + $0x68] sm:$0xf]
        %v2443 = vld [vmem:[#allocation8 + $0x6c] sm:$0xf]
        %v2444 = vld [vmem:[#allocation8 + $0x70] sm:$0xf]
        %v2445 = vld [vmem:[#allocation8 + $0x74] sm:$0xf]
        %v2446 = vld [vmem:[#allocation8 + $0x78] sm:$0xf]
        %v2447 = vld [vmem:[#allocation8 + $0x7c] sm:$0xf]
        %v2448 = vld [vmem:[%s7] sm:$0x1]
        %v2450 = vlaneseq
        %v2451 = vshrl.u32 %v2450, 7
        %v2452 = vsub.s32 0, %v2451
        %v2453 = vrot.slane %v2448, %v2452
        %v2487 = vunpack.c.l.b16 %v2416
        %v2488 = vunpack.c.l.b16 %v2417
        %v2489 = vunpack.c.l.b16 %v2418
        %v2490 = vunpack.c.l.b16 %v2419
        %v2491 = vunpack.c.l.b16 %v2420
        %v2492 = vunpack.c.l.b16 %v2421
        %v2493 = vunpack.c.l.b16 %v2422
        %v2494 = vunpack.c.l.b16 %v2423
        %v2495 = vunpack.c.l.b16 %v2424
        %v2496 = vunpack.c.l.b16 %v2425
        %v2497 = vunpack.c.l.b16 %v2426
        %v2498 = vunpack.c.l.b16 %v2427
        %v2499 = vunpack.c.l.b16 %v2428
        %v2500 = vunpack.c.l.b16 %v2429
        %v2501 = vunpack.c.l.b16 %v2430
        %v2502 = vunpack.c.l.b16 %v2431
        %v2503 = vunpack.c.l.b16 %v2432
        %v2504 = vunpack.c.l.b16 %v2433
        %v2505 = vunpack.c.l.b16 %v2434
        %v2506 = vunpack.c.l.b16 %v2435
        %v2507 = vunpack.c.l.b16 %v2436
        %v2508 = vunpack.c.l.b16 %v2437
        %v2509 = vunpack.c.l.b16 %v2438
        %v2510 = vunpack.c.l.b16 %v2439
        %v2511 = vunpack.c.l.b16 %v2440
        %v2512 = vunpack.c.l.b16 %v2441
        %v2513 = vunpack.c.l.b16 %v2442
        %v2514 = vunpack.c.l.b16 %v2443
        %v2515 = vunpack.c.l.b16 %v2444
        %v2516 = vunpack.c.l.b16 %v2445
        %v2517 = vunpack.c.l.b16 %v2446
        %v2518 = vunpack.c.l.b16 %v2447
        %v2519 = vpack.c.b16 %v2488, %v2487
        %v2520 = vpack.c.b16 %v2490, %v2489
        %v2521 = vpack.c.b16 %v2492, %v2491
        %v2522 = vpack.c.b16 %v2494, %v2493
        %v2523 = vpack.c.b16 %v2496, %v2495
        %v2524 = vpack.c.b16 %v2498, %v2497
        %v2525 = vpack.c.b16 %v2500, %v2499
        %v2526 = vpack.c.b16 %v2502, %v2501
        %v2527 = vpack.c.b16 %v2504, %v2503
        %v2528 = vpack.c.b16 %v2506, %v2505
        %v2529 = vpack.c.b16 %v2508, %v2507
        %v2530 = vpack.c.b16 %v2510, %v2509
        %v2531 = vpack.c.b16 %v2512, %v2511
        %v2532 = vpack.c.b16 %v2514, %v2513
        %v2533 = vpack.c.b16 %v2516, %v2515
        %v2534 = vpack.c.b16 %v2518, %v2517
        %2551 = vmatprep.subr.bf16.mxu0 0
        %2552 = vmatpush1.bf16.msra.mxu0 %v2519
        %2553 = vmatprep.subr.bf16.mxu0 0
        %2554 = vmatpush1.bf16.msra.mxu0 %v2520
        %2555 = vmatprep.subr.bf16.mxu0 0
        %2556 = vmatpush1.bf16.msra.mxu0 %v2521
        %2557 = vmatprep.subr.bf16.mxu0 0
        %2558 = vmatpush1.bf16.msra.mxu0 %v2522
        %2559 = vmatprep.subr.bf16.mxu0 0
        %2560 = vmatpush1.bf16.msra.mxu0 %v2523
        %2561 = vmatprep.subr.bf16.mxu0 0
        %2562 = vmatpush1.bf16.msra.mxu0 %v2524
        %2563 = vmatprep.subr.bf16.mxu0 0
        %2564 = vmatpush1.bf16.msra.mxu0 %v2525
        %2565 = vmatprep.subr.bf16.mxu0 0
        %2566 = vmatpush1.bf16.msra.mxu0 %v2526
        %2567 = vmatprep.subr.bf16.mxu0 0
        %2568 = vmatpush1.bf16.msra.mxu0 %v2527
        %2569 = vmatprep.subr.bf16.mxu0 0
        %2570 = vmatpush1.bf16.msra.mxu0 %v2528
        %2571 = vmatprep.subr.bf16.mxu0 0
        %2572 = vmatpush1.bf16.msra.mxu0 %v2529
        %2573 = vmatprep.subr.bf16.mxu0 0
        %2574 = vmatpush1.bf16.msra.mxu0 %v2530
        %2575 = vmatprep.subr.bf16.mxu0 0
        %2576 = vmatpush1.bf16.msra.mxu0 %v2531
        %2577 = vmatprep.subr.bf16.mxu0 0
        %2578 = vmatpush1.bf16.msra.mxu0 %v2532
        %2579 = vmatprep.subr.bf16.mxu0 0
        %2580 = vmatpush1.bf16.msra.mxu0 %v2533
        %2581 = vmatprep.subr.bf16.mxu0 0
        %2582 = vmatpush1.bf16.msra.mxu0 %v2534
        %2583 = vmatprep.mubr.bf16.mxu0 %v2411
        %2584 = vmatmul.mubr.bf16.gmra.mrb[0].mxu0 %v2410
        %v2585 = vpop.f32.mrb[0].mxu0
        %v2586 = vadd.f32 %v2453, %v2585
        %v2587 = vpop.f32.mrb[0].mxu0
        %v2588 = vpop.f32.mrb[0].mxu0
        %v2589 = vadd.f32 %v2453, %v2588
        %v2590 = vpop.f32.mrb[0].mxu0
        %2591 = vdwg.mxu0
        %v2592 = vstv %s2412
        %v2593 = vmul.f32 %v2592, %v2586
        %v2594 = vmul.f32 %v2592, %v2589
        %v2595 = vand.u32 2147483647, %v2593
        %vm2596 = vcmp.le.f32.partialorder %v2595, 0.7853982
        %vm2597 = vcmp.lt.s32.totalorder %v2593, 0
        %v2598 = vand.u32 %v2593, 2139095040
        %v2599 = vshrl.u32 %v2598, 23
        %v2600 = vsub.s32 %v2599, 127
        %v2601 = vand.u32 2147483647, %v2593
        %v2602 = vand.u32 %v2601, 8388607
        %v2603 = vor.u32 %v2602, 8388608
        %v2604 = vsub.s32 0, %v2603
        %v2605 = vadd.s32 %v2600, 1
        %vm2606 = vcmp.gt.s32.totalorder %v2605, 0
        %v2607 = vsel %vm2606, %v2605, 0
        %v2608 = vshrl.u32 %v2607, 5
        %v2609 = vand.u32 %v2607, 31
        %v2610 = vsub.s32 32, %v2609
        %v2611 = vshrl.u32 683565275, %v2610
        %v2612 = vshll.u32 683565275, %v2609
        %v2613 = vshrl.u32 2475754826, %v2610
        %v2614 = vor.u32 %v2612, %v2613
        %v2615 = vshll.u32 2475754826, %v2609
        %v2616 = vshrl.u32 2131351028, %v2610
        %v2617 = vor.u32 %v2615, %v2616
        %v2618 = vshll.u32 2131351028, %v2609
        %v2619 = vshrl.u32 2102212464, %v2610
        %v2620 = vor.u32 %v2618, %v2619
        %v2621 = vshll.u32 2102212464, %v2609
        %v2622 = vshrl.u32 920167782, %v2610
        %v2623 = vor.u32 %v2621, %v2622
        %v2624 = vshll.u32 920167782, %v2609
        %v2625 = vshrl.u32 1326507024, %v2610
        %v2626 = vor.u32 %v2624, %v2625
        %vm2627 = vcmp.lt.s32.totalorder %v2608, 1
        %vm2628 = vcmp.lt.s32.totalorder %v2608, 2
        %vm2629 = vcmp.lt.s32.totalorder %v2608, 3
        %vm2630 = vcmp.lt.s32.totalorder %v2608, 4
        %v2631 = vsel %vm2627, %v2611, %v2614
        %v2632 = vsel %vm2630, %v2620, 2102212464
        %v2633 = vsel %vm2629, %v2617, %v2632
        %v2634 = vsel %vm2628, %v2631, %v2633
        %v2635 = vsel %vm2627, %v2614, %v2617
        %v2636 = vsel %vm2630, %v2623, 920167782
        %v2637 = vsel %vm2629, %v2620, %v2636
        %v2638 = vsel %vm2628, %v2635, %v2637
        %v2639 = vsel %vm2627, %v2617, %v2620
        %v2640 = vsel %vm2630, %v2626, 1326507024
        %v2641 = vsel %vm2629, %v2623, %v2640
        %v2642 = vsel %vm2628, %v2639, %v2641
        %v2643 = vshll.u32 %v2603, 8
        %v2644 = vmul.u32.u64.compose %v2643, %v2642
        %v2645 = vextract.low.u32 %v2644
        %v2646 = vextract.high.u32 %v2644
        %v2647 = vmul.u32.u64.compose %v2643, %v2638
        %v2648 = vextract.low.u32 %v2647
        %v2649 = vextract.high.u32 %v2647
        %v2650 = vmul.u32 %v2643, %v2634
        %v2651 = vadd.s32 %v2646, %v2648
        %vm2652 = vc.u32 %v2646, %v2648
        %v2653 = vadd.s32 %v2649, 1
        %v2654 = vsel %vm2652, %v2653, %v2649
        %v2655 = vadd.s32 %v2650, %v2654
        %v2656 = vadd.s32 %v2655, 536870912
        %v2657 = vshrl.u32 %v2656, 30
        %v2658 = vshll.u32 %v2657, 30
        %v2659 = vsub.s32 %v2655, %v2658
        %vm2660 = vcmp.lt.s32.totalorder %v2659, 0
        %v2661 = vsub.s32 0, %v2659
        %v2662 = vsel %vm2660, %v2661, %v2659
        %v2663 = vclz %v2662
        %v2664 = vsub.s32 %v2663, 2
        %vm2665 = vcmp.gt.s32.totalorder 0, %v2664
        %v2666 = vsel %vm2665, 0, %v2664
        %v2667 = vsub.s32 32, %v2666
        %v2668 = vshll.u32 %v2659, %v2666
        %v2669 = vshrl.u32 %v2651, %v2667
        %v2670 = vor.u32 %v2668, %v2669
        %v2671 = vsub.s32 4294967266, %v2666
        %v2672 = vadd.s32 %v2671, 127
        %v2673 = vshll.u32 %v2672, 23
        %v2674 = vor.u32 4788187, %v2673
        %v2675 = vand.u32 2147483647, %v2674
        %v2677 = vcvt.s32.f32 %v2670
        %v2678 = vmul.f32 %v2677, %v2675
        %v2679 = vxor.u32 %v2678, 2147483648
        %v2680 = vsel %vm2597, %v2679, %v2678
        %v2681 = vsub.s32 4, %v2657
        %v2682 = vsel %vm2597, %v2681, %v2657
        %v2683 = vsel %vm2596, %v2593, %v2680
        %v2684 = vsel %vm2596, 0, %v2682
        %v2685 = vcosq.f32.pop %v2683
        %v2686 = vsinq.f32.pop %v2683
        %vm2687 = vweird.f32 %v2593
        %v2688 = vadd.s32 %v2684, 3
        %v2689 = vand.u32 %v2688, 3
        %vm2690 = vcmp.lt.s32.totalorder %v2689, 2
        %vm2691 = vcmp.eq.s32.totalorder %v2689, 0
        %v2692 = vxor.u32 %v2686, 2147483648
        %v2693 = vsel %vm2691, %v2685, %v2692
        %vm2694 = vcmp.eq.s32.totalorder %v2689, 2
        %v2695 = vxor.u32 %v2685, 2147483648
        %v2696 = vsel %vm2694, %v2695, %v2686
        %v2697 = vsel %vm2690, %v2693, %v2696
        %v2698 = vsel %vm2687, nan, %v2697
        %v2699 = vand.u32 2147483647, %v2594
        %vm2700 = vcmp.le.f32.partialorder %v2699, 0.7853982
        %vm2701 = vcmp.lt.s32.totalorder %v2594, 0
        %v2702 = vand.u32 %v2594, 2139095040
        %v2703 = vshrl.u32 %v2702, 23
        %v2704 = vsub.s32 %v2703, 127
        %v2705 = vand.u32 2147483647, %v2594
        %v2706 = vand.u32 %v2705, 8388607
        %v2707 = vor.u32 %v2706, 8388608
        %v2708 = vsub.s32 0, %v2707
        %v2709 = vadd.s32 %v2704, 1
        %vm2710 = vcmp.gt.s32.totalorder %v2709, 0
        %v2711 = vsel %vm2710, %v2709, 0
        %v2712 = vshrl.u32 %v2711, 5
        %v2713 = vand.u32 %v2711, 31
        %v2714 = vsub.s32 32, %v2713
        %v2715 = vshrl.u32 683565275, %v2714
        %v2716 = vshll.u32 683565275, %v2713
        %v2717 = vshrl.u32 2475754826, %v2714
        %v2718 = vor.u32 %v2716, %v2717
        %v2719 = vshll.u32 2475754826, %v2713
        %v2720 = vshrl.u32 2131351028, %v2714
        %v2721 = vor.u32 %v2719, %v2720
        %v2722 = vshll.u32 2131351028, %v2713
        %v2723 = vshrl.u32 2102212464, %v2714
        %v2724 = vor.u32 %v2722, %v2723
        %v2725 = vshll.u32 2102212464, %v2713
        %v2726 = vshrl.u32 920167782, %v2714
        %v2727 = vor.u32 %v2725, %v2726
        %v2728 = vshll.u32 920167782, %v2713
        %v2729 = vshrl.u32 1326507024, %v2714
        %v2730 = vor.u32 %v2728, %v2729
        %vm2731 = vcmp.lt.s32.totalorder %v2712, 1
        %vm2732 = vcmp.lt.s32.totalorder %v2712, 2
        %vm2733 = vcmp.lt.s32.totalorder %v2712, 3
        %vm2734 = vcmp.lt.s32.totalorder %v2712, 4
        %v2735 = vsel %vm2731, %v2715, %v2718
        %v2736 = vsel %vm2734, %v2724, 2102212464
        %v2737 = vsel %vm2733, %v2721, %v2736
        %v2738 = vsel %vm2732, %v2735, %v2737
        %v2739 = vsel %vm2731, %v2718, %v2721
        %v2740 = vsel %vm2734, %v2727, 920167782
        %v2741 = vsel %vm2733, %v2724, %v2740
        %v2742 = vsel %vm2732, %v2739, %v2741
        %v2743 = vsel %vm2731, %v2721, %v2724
        %v2744 = vsel %vm2734, %v2730, 1326507024
        %v2745 = vsel %vm2733, %v2727, %v2744
        %v2746 = vsel %vm2732, %v2743, %v2745
        %v2747 = vshll.u32 %v2707, 8
        %v2748 = vmul.u32.u64.compose %v2747, %v2746
        %v2749 = vextract.low.u32 %v2748
        %v2750 = vextract.high.u32 %v2748
        %v2751 = vmul.u32.u64.compose %v2747, %v2742
        %v2752 = vextract.low.u32 %v2751
        %v2753 = vextract.high.u32 %v2751
        %v2754 = vmul.u32 %v2747, %v2738
        %v2755 = vadd.s32 %v2750, %v2752
        %vm2756 = vc.u32 %v2750, %v2752
        %v2757 = vadd.s32 %v2753, 1
        %v2758 = vsel %vm2756, %v2757, %v2753
        %v2759 = vadd.s32 %v2754, %v2758
        %v2760 = vadd.s32 %v2759, 536870912
        %v2761 = vshrl.u32 %v2760, 30
        %v2762 = vshll.u32 %v2761, 30
        %v2763 = vsub.s32 %v2759, %v2762
        %vm2764 = vcmp.lt.s32.totalorder %v2763, 0
        %v2765 = vsub.s32 0, %v2763
        %v2766 = vsel %vm2764, %v2765, %v2763
        %v2767 = vclz %v2766
        %v2768 = vsub.s32 %v2767, 2
        %vm2769 = vcmp.gt.s32.totalorder 0, %v2768
        %v2770 = vsel %vm2769, 0, %v2768
        %v2771 = vsub.s32 32, %v2770
        %v2772 = vshll.u32 %v2763, %v2770
        %v2773 = vshrl.u32 %v2755, %v2771
        %v2774 = vor.u32 %v2772, %v2773
        %v2775 = vsub.s32 4294967266, %v2770
        %v2776 = vadd.s32 %v2775, 127
        %v2777 = vshll.u32 %v2776, 23
        %v2778 = vor.u32 4788187, %v2777
        %v2779 = vand.u32 2147483647, %v2778
        %v2781 = vcvt.s32.f32 %v2774
        %v2782 = vmul.f32 %v2781, %v2779
        %v2783 = vxor.u32 %v2782, 2147483648
        %v2784 = vsel %vm2701, %v2783, %v2782
        %v2785 = vsub.s32 4, %v2761
        %v2786 = vsel %vm2701, %v2785, %v2761
        %v2787 = vsel %vm2700, %v2594, %v2784
        %v2788 = vsel %vm2700, 0, %v2786
        %v2789 = vcosq.f32.pop %v2787
        %v2790 = vsinq.f32.pop %v2787
        %vm2791 = vweird.f32 %v2594
        %v2792 = vadd.s32 %v2788, 3
        %v2793 = vand.u32 %v2792, 3
        %vm2794 = vcmp.lt.s32.totalorder %v2793, 2
        %vm2795 = vcmp.eq.s32.totalorder %v2793, 0
        %v2796 = vxor.u32 %v2790, 2147483648
        %v2797 = vsel %vm2795, %v2789, %v2796
        %vm2798 = vcmp.eq.s32.totalorder %v2793, 2
        %v2799 = vxor.u32 %v2789, 2147483648
        %v2800 = vsel %vm2798, %v2799, %v2790
        %v2801 = vsel %vm2794, %v2797, %v2800
        %v2802 = vsel %vm2791, nan, %v2801
        %v2803 = vmul.f32 %v2698, %v2698
        %v2804 = vmul.f32 %v2802, %v2802
        %v2805 = vstv %s2415
        %v2806 = vmul.f32 %v2805, %v2803
        %v2807 = vmul.f32 %v2805, %v2804
        %v2808 = vadd.f32 %v2586, %v2806
        %v2809 = vadd.f32 %v2589, %v2807
        %2810 = vxpose.xlu0.b32.start [1/16] %v2808, 128
        %2811 = vxpose.xlu0.b32.cont [2/16] %v2809, 128
        %2812 = vxpose.xlu0.b32.cont [3/16] 0.0, 128
        %2813 = vxpose.xlu0.b32.cont [4/16] 0.0, 128
        %2814 = vxpose.xlu0.b32.cont [5/16] 0.0, 128
        %2815 = vxpose.xlu0.b32.cont [6/16] 0.0, 128
        %2816 = vxpose.xlu0.b32.cont [7/16] 0.0, 128
        %2817 = vxpose.xlu0.b32.cont [8/16] 0.0, 128
        %2818 = vxpose.xlu0.b32.cont [9/16] 0.0, 128
        %2819 = vxpose.xlu0.b32.cont [10/16] 0.0, 128
        %2820 = vxpose.xlu0.b32.cont [11/16] 0.0, 128
        %2821 = vxpose.xlu0.b32.cont [12/16] 0.0, 128
        %2822 = vxpose.xlu0.b32.cont [13/16] 0.0, 128
        %2823 = vxpose.xlu0.b32.cont [14/16] 0.0, 128
        %2824 = vxpose.xlu0.b32.cont [15/16] 0.0, 128
        %2825 = vxpose.xlu0.b32.end [16/16] 0.0, 128
        %v2826 = vpop.trf.xlu0
        %v2827 = vpop.trf.xlu0
        %v2828 = vpop.trf.xlu0
        %v2829 = vpop.trf.xlu0
        %v2830 = vpop.trf.xlu0
        %v2831 = vpop.trf.xlu0
        %v2832 = vpop.trf.xlu0
        %v2833 = vpop.trf.xlu0
        %v2834 = vpop.trf.xlu0
        %v2835 = vpop.trf.xlu0
        %v2836 = vpop.trf.xlu0
        %v2837 = vpop.trf.xlu0
        %v2838 = vpop.trf.xlu0
        %v2839 = vpop.trf.xlu0
        %v2840 = vpop.trf.xlu0
        %v2841 = vpop.trf.xlu0
        %vm2842 = vcmask 130048
        %2843 = vst.msk [vmem:[%s641] sm:$0xff] %vm2842, %v2826
        %2844 = vst.msk [vmem:[%s641 + $0x8] sm:$0xff] %vm2842, %v2827
        %2845 = vst.msk [vmem:[%s641 + $0x10] sm:$0xff] %vm2842, %v2828
        %2846 = vst.msk [vmem:[%s641 + $0x18] sm:$0xff] %vm2842, %v2829
        %2847 = vst.msk [vmem:[%s641 + $0x20] sm:$0xff] %vm2842, %v2830
        %2848 = vst.msk [vmem:[%s641 + $0x28] sm:$0xff] %vm2842, %v2831
        %2849 = vst.msk [vmem:[%s641 + $0x30] sm:$0xff] %vm2842, %v2832
        %2850 = vst.msk [vmem:[%s641 + $0x38] sm:$0xff] %vm2842, %v2833
        %2851 = vst.msk [vmem:[%s641 + $0x40] sm:$0xff] %vm2842, %v2834
        %2852 = vst.msk [vmem:[%s641 + $0x48] sm:$0xff] %vm2842, %v2835
        %2853 = vst.msk [vmem:[%s641 + $0x50] sm:$0xff] %vm2842, %v2836
        %2854 = vst.msk [vmem:[%s641 + $0x58] sm:$0xff] %vm2842, %v2837
        %2855 = vst.msk [vmem:[%s641 + $0x60] sm:$0xff] %vm2842, %v2838
        %2856 = vst.msk [vmem:[%s641 + $0x68] sm:$0xff] %vm2842, %v2839
        %2857 = vst.msk [vmem:[%s641 + $0x70] sm:$0xff] %vm2842, %v2840
        %2858 = vst.msk [vmem:[%s641 + $0x78] sm:$0xff] %vm2842, %v2841
        %v2859 = vld [vmem:[#allocation9] sm:$0xf]
        %v2860 = vld [vmem:[#allocation9 + $0x4] sm:$0xf]
        %v2861 = vld [vmem:[#allocation9 + $0x8] sm:$0xf]
        %v2862 = vld [vmem:[#allocation9 + $0xc] sm:$0xf]
        %v2863 = vld [vmem:[#allocation9 + $0x10] sm:$0xf]
        %v2864 = vld [vmem:[#allocation9 + $0x14] sm:$0xf]
        %v2865 = vld [vmem:[#allocation9 + $0x18] sm:$0xf]
        %v2866 = vld [vmem:[#allocation9 + $0x1c] sm:$0xf]
        %v2867 = vld [vmem:[#allocation9 + $0x20] sm:$0xf]
        %v2868 = vld [vmem:[#allocation9 + $0x24] sm:$0xf]
        %v2869 = vld [vmem:[#allocation9 + $0x28] sm:$0xf]
        %v2870 = vld [vmem:[#allocation9 + $0x2c] sm:$0xf]
        %v2871 = vld [vmem:[#allocation9 + $0x30] sm:$0xf]
        %v2872 = vld [vmem:[#allocation9 + $0x34] sm:$0xf]
        %v2873 = vld [vmem:[#allocation9 + $0x38] sm:$0xf]
        %v2874 = vld [vmem:[#allocation9 + $0x3c] sm:$0xf]
        %v2875 = vld [vmem:[#allocation9 + $0x40] sm:$0xf]
        %v2876 = vld [vmem:[#allocation9 + $0x44] sm:$0xf]
        %v2877 = vld [vmem:[#allocation9 + $0x48] sm:$0xf]
        %v2878 = vld [vmem:[#allocation9 + $0x4c] sm:$0xf]
        %v2879 = vld [vmem:[#allocation9 + $0x50] sm:$0xf]
        %v2880 = vld [vmem:[#allocation9 + $0x54] sm:$0xf]
        %v2881 = vld [vmem:[#allocation9 + $0x58] sm:$0xf]
        %v2882 = vld [vmem:[#allocation9 + $0x5c] sm:$0xf]
        %v2883 = vld [vmem:[#allocation9 + $0x60] sm:$0xf]
        %v2884 = vld [vmem:[#allocation9 + $0x64] sm:$0xf]
        %v2885 = vld [vmem:[#allocation9 + $0x68] sm:$0xf]
        %v2886 = vld [vmem:[#allocation9 + $0x6c] sm:$0xf]
        %v2887 = vld [vmem:[#allocation9 + $0x70] sm:$0xf]
        %v2888 = vld [vmem:[#allocation9 + $0x74] sm:$0xf]
        %v2889 = vld [vmem:[#allocation9 + $0x78] sm:$0xf]
        %v2890 = vld [vmem:[#allocation9 + $0x7c] sm:$0xf]
        %v2891 = vld [vmem:[%s9] sm:$0x1]
        %v2893 = vlaneseq
        %v2894 = vshrl.u32 %v2893, 7
        %v2895 = vsub.s32 0, %v2894
        %v2896 = vrot.slane %v2891, %v2895
        %v2930 = vunpack.c.l.b16 %v2859
        %v2931 = vunpack.c.l.b16 %v2860
        %v2932 = vunpack.c.l.b16 %v2861
        %v2933 = vunpack.c.l.b16 %v2862
        %v2934 = vunpack.c.l.b16 %v2863
        %v2935 = vunpack.c.l.b16 %v2864
        %v2936 = vunpack.c.l.b16 %v2865
        %v2937 = vunpack.c.l.b16 %v2866
        %v2938 = vunpack.c.l.b16 %v2867
        %v2939 = vunpack.c.l.b16 %v2868
        %v2940 = vunpack.c.l.b16 %v2869
        %v2941 = vunpack.c.l.b16 %v2870
        %v2942 = vunpack.c.l.b16 %v2871
        %v2943 = vunpack.c.l.b16 %v2872
        %v2944 = vunpack.c.l.b16 %v2873
        %v2945 = vunpack.c.l.b16 %v2874
        %v2946 = vunpack.c.l.b16 %v2875
        %v2947 = vunpack.c.l.b16 %v2876
        %v2948 = vunpack.c.l.b16 %v2877
        %v2949 = vunpack.c.l.b16 %v2878
        %v2950 = vunpack.c.l.b16 %v2879
        %v2951 = vunpack.c.l.b16 %v2880
        %v2952 = vunpack.c.l.b16 %v2881
        %v2953 = vunpack.c.l.b16 %v2882
        %v2954 = vunpack.c.l.b16 %v2883
        %v2955 = vunpack.c.l.b16 %v2884
        %v2956 = vunpack.c.l.b16 %v2885
        %v2957 = vunpack.c.l.b16 %v2886
        %v2958 = vunpack.c.l.b16 %v2887
        %v2959 = vunpack.c.l.b16 %v2888
        %v2960 = vunpack.c.l.b16 %v2889
        %v2961 = vunpack.c.l.b16 %v2890
        %v2962 = vpack.c.b16 %v2931, %v2930
        %v2963 = vpack.c.b16 %v2933, %v2932
        %v2964 = vpack.c.b16 %v2935, %v2934
        %v2965 = vpack.c.b16 %v2937, %v2936
        %v2966 = vpack.c.b16 %v2939, %v2938
        %v2967 = vpack.c.b16 %v2941, %v2940
        %v2968 = vpack.c.b16 %v2943, %v2942
        %v2969 = vpack.c.b16 %v2945, %v2944
        %v2970 = vpack.c.b16 %v2947, %v2946
        %v2971 = vpack.c.b16 %v2949, %v2948
        %v2972 = vpack.c.b16 %v2951, %v2950
        %v2973 = vpack.c.b16 %v2953, %v2952
        %v2974 = vpack.c.b16 %v2955, %v2954
        %v2975 = vpack.c.b16 %v2957, %v2956
        %v2976 = vpack.c.b16 %v2959, %v2958
        %v2977 = vpack.c.b16 %v2961, %v2960
        %2994 = vmatprep.subr.bf16.mxu0 0
        %2995 = vmatpush1.bf16.msra.mxu0 %v2962
        %2996 = vmatprep.subr.bf16.mxu0 0
        %2997 = vmatpush1.bf16.msra.mxu0 %v2963
        %2998 = vmatprep.subr.bf16.mxu0 0
        %2999 = vmatpush1.bf16.msra.mxu0 %v2964
        %3000 = vmatprep.subr.bf16.mxu0 0
        %3001 = vmatpush1.bf16.msra.mxu0 %v2965
        %3002 = vmatprep.subr.bf16.mxu0 0
        %3003 = vmatpush1.bf16.msra.mxu0 %v2966
        %3004 = vmatprep.subr.bf16.mxu0 0
        %3005 = vmatpush1.bf16.msra.mxu0 %v2967
        %3006 = vmatprep.subr.bf16.mxu0 0
        %3007 = vmatpush1.bf16.msra.mxu0 %v2968
        %3008 = vmatprep.subr.bf16.mxu0 0
        %3009 = vmatpush1.bf16.msra.mxu0 %v2969
        %3010 = vmatprep.subr.bf16.mxu0 0
        %3011 = vmatpush1.bf16.msra.mxu0 %v2970
        %3012 = vmatprep.subr.bf16.mxu0 0
        %3013 = vmatpush1.bf16.msra.mxu0 %v2971
        %3014 = vmatprep.subr.bf16.mxu0 0
        %3015 = vmatpush1.bf16.msra.mxu0 %v2972
        %3016 = vmatprep.subr.bf16.mxu0 0
        %3017 = vmatpush1.bf16.msra.mxu0 %v2973
        %3018 = vmatprep.subr.bf16.mxu0 0
        %3019 = vmatpush1.bf16.msra.mxu0 %v2974
        %3020 = vmatprep.subr.bf16.mxu0 0
        %3021 = vmatpush1.bf16.msra.mxu0 %v2975
        %3022 = vmatprep.subr.bf16.mxu0 0
        %3023 = vmatpush1.bf16.msra.mxu0 %v2976
        %3024 = vmatprep.subr.bf16.mxu0 0
        %3025 = vmatpush1.bf16.msra.mxu0 %v2977
        %3026 = vmatprep.mubr.bf16.mxu0 %v2411
        %3027 = vmatmul.mubr.bf16.gmra.mrb[0].mxu0 %v2410
        %v3028 = vpop.f32.mrb[0].mxu0
        %v3029 = vadd.f32 %v2896, %v3028
        %v3030 = vpop.f32.mrb[0].mxu0
        %v3031 = vpop.f32.mrb[0].mxu0
        %v3032 = vadd.f32 %v2896, %v3031
        %v3033 = vpop.f32.mrb[0].mxu0
        %3034 = vdwg.mxu0
        %v3035 = vpack.c.bf16 %v3032, %v3029
        %v3036 = vld [vmem:[%s10] sm:$0xf]
        %v3037 = vld [vmem:[%s10 + $0x4] sm:$0xf]
        %v3038 = vld [vmem:[%s10 + $0x8] sm:$0xf]
        %v3039 = vld [vmem:[%s10 + $0xc] sm:$0xf]
        %v3040 = vld [vmem:[%s10 + $0x10] sm:$0xf]
        %v3041 = vld [vmem:[%s10 + $0x14] sm:$0xf]
        %v3042 = vld [vmem:[%s10 + $0x18] sm:$0xf]
        %v3043 = vld [vmem:[%s10 + $0x1c] sm:$0xf]
        %v3044 = vld [vmem:[%s10 + $0x20] sm:$0xf]
        %v3045 = vld [vmem:[%s10 + $0x24] sm:$0xf]
        %v3046 = vld [vmem:[%s10 + $0x28] sm:$0xf]
        %v3047 = vld [vmem:[%s10 + $0x2c] sm:$0xf]
        %v3048 = vld [vmem:[%s10 + $0x30] sm:$0xf]
        %v3049 = vld [vmem:[%s10 + $0x34] sm:$0xf]
        %v3050 = vld [vmem:[%s10 + $0x38] sm:$0xf]
        %v3051 = vld [vmem:[%s10 + $0x3c] sm:$0xf]
        %v3052 = vld [vmem:[%s11] sm:$0x1]
        %v3054 = vlaneseq
        %v3055 = vshrl.u32 %v3054, 7
        %v3056 = vsub.s32 0, %v3055
        %v3057 = vrot.slane %v3052, %v3056
        %v3075 = vunpack.c.l.b16 %v3036
        %v3076 = vunpack.c.l.b16 %v3037
        %v3077 = vunpack.c.l.b16 %v3038
        %v3078 = vunpack.c.l.b16 %v3039
        %v3079 = vunpack.c.l.b16 %v3040
        %v3080 = vunpack.c.l.b16 %v3041
        %v3081 = vunpack.c.l.b16 %v3042
        %v3082 = vunpack.c.l.b16 %v3043
        %v3083 = vunpack.c.l.b16 %v3044
        %v3084 = vunpack.c.l.b16 %v3045
        %v3085 = vunpack.c.l.b16 %v3046
        %v3086 = vunpack.c.l.b16 %v3047
        %v3087 = vunpack.c.l.b16 %v3048
        %v3088 = vunpack.c.l.b16 %v3049
        %v3089 = vunpack.c.l.b16 %v3050
        %v3090 = vunpack.c.l.b16 %v3051
        %v3091 = vpack.c.b16 %v3076, %v3075
        %v3092 = vpack.c.b16 %v3078, %v3077
        %v3093 = vpack.c.b16 %v3080, %v3079
        %v3094 = vpack.c.b16 %v3082, %v3081
        %v3095 = vpack.c.b16 %v3084, %v3083
        %v3096 = vpack.c.b16 %v3086, %v3085
        %v3097 = vpack.c.b16 %v3088, %v3087
        %v3098 = vpack.c.b16 %v3090, %v3089
        %3107 = vmatprep.subr.bf16.mxu0 0
        %3108 = vmatpush1.bf16.msra.mxu0 %v3091
        %3109 = vmatprep.subr.bf16.mxu0 0
        %3110 = vmatpush1.bf16.msra.mxu0 %v3092
        %3111 = vmatprep.subr.bf16.mxu0 0
        %3112 = vmatpush1.bf16.msra.mxu0 %v3093
        %3113 = vmatprep.subr.bf16.mxu0 0
        %3114 = vmatpush1.bf16.msra.mxu0 %v3094
        %3115 = vmatprep.subr.bf16.mxu0 0
        %3116 = vmatpush1.bf16.msra.mxu0 %v3095
        %3117 = vmatprep.subr.bf16.mxu0 0
        %3118 = vmatpush1.bf16.msra.mxu0 %v3096
        %3119 = vmatprep.subr.bf16.mxu0 0
        %3120 = vmatpush1.bf16.msra.mxu0 %v3097
        %3121 = vmatprep.subr.bf16.mxu0 0
        %3122 = vmatpush1.bf16.msra.mxu0 %v3098
        %3123 = vmatprep.subr.bf16.mxu0 0
        %3124 = vmatpush1.bf16.msra.mxu0 0
        %3125 = vmatprep.subr.bf16.mxu0 0
        %3126 = vmatpush1.bf16.msra.mxu0 0
        %3127 = vmatprep.subr.bf16.mxu0 0
        %3128 = vmatpush1.bf16.msra.mxu0 0
        %3129 = vmatprep.subr.bf16.mxu0 0
        %3130 = vmatpush1.bf16.msra.mxu0 0
        %3131 = vmatprep.subr.bf16.mxu0 0
        %3132 = vmatpush1.bf16.msra.mxu0 0
        %3133 = vmatprep.subr.bf16.mxu0 0
        %3134 = vmatpush1.bf16.msra.mxu0 0
        %3135 = vmatprep.subr.bf16.mxu0 0
        %3136 = vmatpush1.bf16.msra.mxu0 0
        %3137 = vmatprep.subr.bf16.mxu0 0
        %3138 = vmatpush1.bf16.msra.mxu0 0
        %3139 = vmatprep.mubr.bf16.mxu0 0
        %3140 = vmatmul.mubr.bf16.gmra.mrb[0].mxu0 %v3035
        %v3141 = vpop.f32.mrb[0].mxu0
        %v3142 = vadd.f32 %v3057, %v3141
        %v3143 = vpop.f32.mrb[0].mxu0
        %v3144 = vpop.f32.mrb[0].mxu0
        %v3145 = vadd.f32 %v3057, %v3144
        %v3146 = vpop.f32.mrb[0].mxu0
        %3147 = vdwg.mxu0
        %v3148 = vmul.f32 %v2592, %v3142
        %v3149 = vmul.f32 %v2592, %v3145
        %v3150 = vand.u32 2147483647, %v3148
        %vm3151 = vcmp.le.f32.partialorder %v3150, 0.7853982
        %vm3152 = vcmp.lt.s32.totalorder %v3148, 0
        %v3153 = vand.u32 %v3148, 2139095040
        %v3154 = vshrl.u32 %v3153, 23
        %v3155 = vsub.s32 %v3154, 127
        %v3156 = vand.u32 2147483647, %v3148
        %v3157 = vand.u32 %v3156, 8388607
        %v3158 = vor.u32 %v3157, 8388608
        %v3159 = vsub.s32 0, %v3158
        %v3160 = vadd.s32 %v3155, 1
        %vm3161 = vcmp.gt.s32.totalorder %v3160, 0
        %v3162 = vsel %vm3161, %v3160, 0
        %v3163 = vshrl.u32 %v3162, 5
        %v3164 = vand.u32 %v3162, 31
        %v3165 = vsub.s32 32, %v3164
        %v3166 = vshrl.u32 683565275, %v3165
        %v3167 = vshll.u32 683565275, %v3164
        %v3168 = vshrl.u32 2475754826, %v3165
        %v3169 = vor.u32 %v3167, %v3168
        %v3170 = vshll.u32 2475754826, %v3164
        %v3171 = vshrl.u32 2131351028, %v3165
        %v3172 = vor.u32 %v3170, %v3171
        %v3173 = vshll.u32 2131351028, %v3164
        %v3174 = vshrl.u32 2102212464, %v3165
        %v3175 = vor.u32 %v3173, %v3174
        %v3176 = vshll.u32 2102212464, %v3164
        %v3177 = vshrl.u32 920167782, %v3165
        %v3178 = vor.u32 %v3176, %v3177
        %v3179 = vshll.u32 920167782, %v3164
        %v3180 = vshrl.u32 1326507024, %v3165
        %v3181 = vor.u32 %v3179, %v3180
        %vm3182 = vcmp.lt.s32.totalorder %v3163, 1
        %vm3183 = vcmp.lt.s32.totalorder %v3163, 2
        %vm3184 = vcmp.lt.s32.totalorder %v3163, 3
        %vm3185 = vcmp.lt.s32.totalorder %v3163, 4
        %v3186 = vsel %vm3182, %v3166, %v3169
        %v3187 = vsel %vm3185, %v3175, 2102212464
        %v3188 = vsel %vm3184, %v3172, %v3187
        %v3189 = vsel %vm3183, %v3186, %v3188
        %v3190 = vsel %vm3182, %v3169, %v3172
        %v3191 = vsel %vm3185, %v3178, 920167782
        %v3192 = vsel %vm3184, %v3175, %v3191
        %v3193 = vsel %vm3183, %v3190, %v3192
        %v3194 = vsel %vm3182, %v3172, %v3175
        %v3195 = vsel %vm3185, %v3181, 1326507024
        %v3196 = vsel %vm3184, %v3178, %v3195
        %v3197 = vsel %vm3183, %v3194, %v3196
        %v3198 = vshll.u32 %v3158, 8
        %v3199 = vmul.u32.u64.compose %v3198, %v3197
        %v3200 = vextract.low.u32 %v3199
        %v3201 = vextract.high.u32 %v3199
        %v3202 = vmul.u32.u64.compose %v3198, %v3193
        %v3203 = vextract.low.u32 %v3202
        %v3204 = vextract.high.u32 %v3202
        %v3205 = vmul.u32 %v3198, %v3189
        %v3206 = vadd.s32 %v3201, %v3203
        %vm3207 = vc.u32 %v3201, %v3203
        %v3208 = vadd.s32 %v3204, 1
        %v3209 = vsel %vm3207, %v3208, %v3204
        %v3210 = vadd.s32 %v3205, %v3209
        %v3211 = vadd.s32 %v3210, 536870912
        %v3212 = vshrl.u32 %v3211, 30
        %v3213 = vshll.u32 %v3212, 30
        %v3214 = vsub.s32 %v3210, %v3213
        %vm3215 = vcmp.lt.s32.totalorder %v3214, 0
        %v3216 = vsub.s32 0, %v3214
        %v3217 = vsel %vm3215, %v3216, %v3214
        %v3218 = vclz %v3217
        %v3219 = vsub.s32 %v3218, 2
        %vm3220 = vcmp.gt.s32.totalorder 0, %v3219
        %v3221 = vsel %vm3220, 0, %v3219
        %v3222 = vsub.s32 32, %v3221
        %v3223 = vshll.u32 %v3214, %v3221
        %v3224 = vshrl.u32 %v3206, %v3222
        %v3225 = vor.u32 %v3223, %v3224
        %v3226 = vsub.s32 4294967266, %v3221
        %v3227 = vadd.s32 %v3226, 127
        %v3228 = vshll.u32 %v3227, 23
        %v3229 = vor.u32 4788187, %v3228
        %v3230 = vand.u32 2147483647, %v3229
        %v3232 = vcvt.s32.f32 %v3225
        %v3233 = vmul.f32 %v3232, %v3230
        %v3234 = vxor.u32 %v3233, 2147483648
        %v3235 = vsel %vm3152, %v3234, %v3233
        %v3236 = vsub.s32 4, %v3212
        %v3237 = vsel %vm3152, %v3236, %v3212
        %v3238 = vsel %vm3151, %v3148, %v3235
        %v3239 = vsel %vm3151, 0, %v3237
        %v3240 = vcosq.f32.pop %v3238
        %v3241 = vsinq.f32.pop %v3238
        %vm3242 = vweird.f32 %v3148
        %v3243 = vadd.s32 %v3239, 3
        %v3244 = vand.u32 %v3243, 3
        %vm3245 = vcmp.lt.s32.totalorder %v3244, 2
        %vm3246 = vcmp.eq.s32.totalorder %v3244, 0
        %v3247 = vxor.u32 %v3241, 2147483648
        %v3248 = vsel %vm3246, %v3240, %v3247
        %vm3249 = vcmp.eq.s32.totalorder %v3244, 2
        %v3250 = vxor.u32 %v3240, 2147483648
        %v3251 = vsel %vm3249, %v3250, %v3241
        %v3252 = vsel %vm3245, %v3248, %v3251
        %v3253 = vsel %vm3242, nan, %v3252
        %v3254 = vand.u32 2147483647, %v3149
        %vm3255 = vcmp.le.f32.partialorder %v3254, 0.7853982
        %vm3256 = vcmp.lt.s32.totalorder %v3149, 0
        %v3257 = vand.u32 %v3149, 2139095040
        %v3258 = vshrl.u32 %v3257, 23
        %v3259 = vsub.s32 %v3258, 127
        %v3260 = vand.u32 2147483647, %v3149
        %v3261 = vand.u32 %v3260, 8388607
        %v3262 = vor.u32 %v3261, 8388608
        %v3263 = vsub.s32 0, %v3262
        %v3264 = vadd.s32 %v3259, 1
        %vm3265 = vcmp.gt.s32.totalorder %v3264, 0
        %v3266 = vsel %vm3265, %v3264, 0
        %v3267 = vshrl.u32 %v3266, 5
        %v3268 = vand.u32 %v3266, 31
        %v3269 = vsub.s32 32, %v3268
        %v3270 = vshrl.u32 683565275, %v3269
        %v3271 = vshll.u32 683565275, %v3268
        %v3272 = vshrl.u32 2475754826, %v3269
        %v3273 = vor.u32 %v3271, %v3272
        %v3274 = vshll.u32 2475754826, %v3268
        %v3275 = vshrl.u32 2131351028, %v3269
        %v3276 = vor.u32 %v3274, %v3275
        %v3277 = vshll.u32 2131351028, %v3268
        %v3278 = vshrl.u32 2102212464, %v3269
        %v3279 = vor.u32 %v3277, %v3278
        %v3280 = vshll.u32 2102212464, %v3268
        %v3281 = vshrl.u32 920167782, %v3269
        %v3282 = vor.u32 %v3280, %v3281
        %v3283 = vshll.u32 920167782, %v3268
        %v3284 = vshrl.u32 1326507024, %v3269
        %v3285 = vor.u32 %v3283, %v3284
        %vm3286 = vcmp.lt.s32.totalorder %v3267, 1
        %vm3287 = vcmp.lt.s32.totalorder %v3267, 2
        %vm3288 = vcmp.lt.s32.totalorder %v3267, 3
        %vm3289 = vcmp.lt.s32.totalorder %v3267, 4
        %v3290 = vsel %vm3286, %v3270, %v3273
        %v3291 = vsel %vm3289, %v3279, 2102212464
        %v3292 = vsel %vm3288, %v3276, %v3291
        %v3293 = vsel %vm3287, %v3290, %v3292
        %v3294 = vsel %vm3286, %v3273, %v3276
        %v3295 = vsel %vm3289, %v3282, 920167782
        %v3296 = vsel %vm3288, %v3279, %v3295
        %v3297 = vsel %vm3287, %v3294, %v3296
        %v3298 = vsel %vm3286, %v3276, %v3279
        %v3299 = vsel %vm3289, %v3285, 1326507024
        %v3300 = vsel %vm3288, %v3282, %v3299
        %v3301 = vsel %vm3287, %v3298, %v3300
        %v3302 = vshll.u32 %v3262, 8
        %v3303 = vmul.u32.u64.compose %v3302, %v3301
        %v3304 = vextract.low.u32 %v3303
        %v3305 = vextract.high.u32 %v3303
        %v3306 = vmul.u32.u64.compose %v3302, %v3297
        %v3307 = vextract.low.u32 %v3306
        %v3308 = vextract.high.u32 %v3306
        %v3309 = vmul.u32 %v3302, %v3293
        %v3310 = vadd.s32 %v3305, %v3307
        %vm3311 = vc.u32 %v3305, %v3307
        %v3312 = vadd.s32 %v3308, 1
        %v3313 = vsel %vm3311, %v3312, %v3308
        %v3314 = vadd.s32 %v3309, %v3313
        %v3315 = vadd.s32 %v3314, 536870912
        %v3316 = vshrl.u32 %v3315, 30
        %v3317 = vshll.u32 %v3316, 30
        %v3318 = vsub.s32 %v3314, %v3317
        %vm3319 = vcmp.lt.s32.totalorder %v3318, 0
        %v3320 = vsub.s32 0, %v3318
        %v3321 = vsel %vm3319, %v3320, %v3318
        %v3322 = vclz %v3321
        %v3323 = vsub.s32 %v3322, 2
        %vm3324 = vcmp.gt.s32.totalorder 0, %v3323
        %v3325 = vsel %vm3324, 0, %v3323
        %v3326 = vsub.s32 32, %v3325
        %v3327 = vshll.u32 %v3318, %v3325
        %v3328 = vshrl.u32 %v3310, %v3326
        %v3329 = vor.u32 %v3327, %v3328
        %v3330 = vsub.s32 4294967266, %v3325
        %v3331 = vadd.s32 %v3330, 127
        %v3332 = vshll.u32 %v3331, 23
        %v3333 = vor.u32 4788187, %v3332
        %v3334 = vand.u32 2147483647, %v3333
        %v3336 = vcvt.s32.f32 %v3329
        %v3337 = vmul.f32 %v3336, %v3334
        %v3338 = vxor.u32 %v3337, 2147483648
        %v3339 = vsel %vm3256, %v3338, %v3337
        %v3340 = vsub.s32 4, %v3316
        %v3341 = vsel %vm3256, %v3340, %v3316
        %v3342 = vsel %vm3255, %v3149, %v3339
        %v3343 = vsel %vm3255, 0, %v3341
        %v3344 = vcosq.f32.pop %v3342
        %v3345 = vsinq.f32.pop %v3342
        %vm3346 = vweird.f32 %v3149
        %v3347 = vadd.s32 %v3343, 3
        %v3348 = vand.u32 %v3347, 3
        %vm3349 = vcmp.lt.s32.totalorder %v3348, 2
        %vm3350 = vcmp.eq.s32.totalorder %v3348, 0
        %v3351 = vxor.u32 %v3345, 2147483648
        %v3352 = vsel %vm3350, %v3344, %v3351
        %vm3353 = vcmp.eq.s32.totalorder %v3348, 2
        %v3354 = vxor.u32 %v3344, 2147483648
        %v3355 = vsel %vm3353, %v3354, %v3345
        %v3356 = vsel %vm3349, %v3352, %v3355
        %v3357 = vsel %vm3346, nan, %v3356
        %v3358 = vmul.f32 %v3253, %v3253
        %v3359 = vmul.f32 %v3357, %v3357
        %v3360 = vmul.f32 %v2805, %v3358
        %v3361 = vmul.f32 %v2805, %v3359
        %v3362 = vadd.f32 %v3142, %v3360
        %v3363 = vadd.f32 %v3145, %v3361
        %3364 = vst [vmem:[%s603] sm:$0xff] %v3362
        %3365 = vst [vmem:[%s603 + $0x8] sm:$0xff] %v3363
        %p3366 = scmp.lt.s32.totalorder %s37, 1
        %s3367 = scalar_select %p3366, %s37, 1
        %p3368 = scmp.lt.s32.totalorder %s38, 0
        %s3369 = scalar_select %p3368, %s38, 0
        %s3370 = smul.addr %s3367, 16
        %s3371 = sadd.s32 %s3369, %s3370
        %s3372 = smul.addr %s3371, 8
        %s3373 = scalar_lea.vmem %s13, %s3372
        %s3374 = sand.u32 %s374, 1
        %s3375 = scalar_lea.sflag [#allocation5], %s3374
        %s3376 = sand.u32 %s374, 1
        %s3377 = smul.addr %s3376, 16
        %s3378 = scalar_lea.vmem [#allocation11], %s3377
        // Predicated region
        $region89: #{tpu_custom_call.1} parent=71 // pred_check
          %p3379 = pneg %p356
        $region90: #{tpu_custom_call.1} parent=71 // pred_check_branch
          %3381 = sbr.rel (%p3379) target = $region92
        $region91: #{tpu_custom_call.1} parent=71 // pred_region
          _
        $region92: #{tpu_custom_call.1} parent=71 // pred_fallthru
          _
        // Predicated region
        $region93: #{tpu_custom_call.1} parent=71 // pred_check
          %p3382 = pneg %p384
        $region94: #{tpu_custom_call.1} parent=71 // pred_check_branch
          %3384 = sbr.rel (%p3382) target = $region96
        $region95: #{tpu_custom_call.1} parent=71 // pred_region
          %s3385 = smul.u32 2, %s38
          %s3387 = ssub.s32 256, 256
          %3388 = vsyncadd %s3375, %s3387
          %s3389 = smul.addr %s37, 2
          %s3390 = sadd.s32 %s3385, %s3389
          %s3391 = smul.addr %s3390, 128
          %s3392 = scalar_lea.hbm %s14, %s3391
          %s3393 = sshll.u32 %s3378, 4
          %s3394 = int_to_ptr.vmem [resolvable:$true] %s3393
          %3399 = dma.vmem_to_hbm [thread:$0]  %s3394, 256, %s3392, %s3375, 128, 128, 8
        $region96: #{tpu_custom_call.1} parent=71 // pred_fallthru
          _
      $region72: #{tpu_custom_call.1} parent=5 // pred_fallthru
        _
      %p3400 = scmp.le.s32.totalorder 2, %s28
      // Predicated region
      $region97: #{tpu_custom_call.1} parent=5 // pred_check
        %p3401 = pneg %p3400
      $region98: #{tpu_custom_call.1} parent=5 // pred_check_branch
        %3403 = sbr.rel (%p3401) target = $region100
      $region99: #{tpu_custom_call.1} parent=5 // pred_region
        %s3404 = ssub.s32 %s28, 2
        // Predicated region
        $region101: #{tpu_custom_call.1} parent=99 // pred_check
          %p3405 = pneg %p362
        $region102: #{tpu_custom_call.1} parent=99 // pred_check_branch
          %3407 = sbr.rel (%p3405) target = $region104
        $region103: #{tpu_custom_call.1} parent=99 // pred_region
          %p3408 = scmp.lt.s32.totalorder %s39, 1
          %s3409 = scalar_select %p3408, %s39, 1
          %p3410 = scmp.lt.s32.totalorder %s40, 0
          %s3411 = scalar_select %p3410, %s40, 0
          %s3412 = smul.addr %s3409, 16
          %s3413 = sadd.s32 %s3411, %s3412
          %s3414 = smul.addr %s3413, 8
          %s3415 = scalar_lea.vmem %s13, %s3414
        $region104: #{tpu_custom_call.1} parent=99 // pred_fallthru
          _
        // Predicated region
        $region105: #{tpu_custom_call.1} parent=99 // pred_check
          %p3416 = pneg %p390
        $region106: #{tpu_custom_call.1} parent=99 // pred_check_branch
          %3418 = sbr.rel (%p3416) target = $region108
        $region107: #{tpu_custom_call.1} parent=99 // pred_region
          %s3419 = sand.u32 %s375, 1
          %s3420 = scalar_lea.sflag [#allocation5], %s3419
          %s3421 = sand.u32 %s375, 1
          %s3422 = smul.addr %s3421, 16
          %s3423 = scalar_lea.vmem [#allocation11], %s3422
          %3424 = dma.done %s3420, 256
        $region108: #{tpu_custom_call.1} parent=99 // pred_fallthru
          _
      $region100: #{tpu_custom_call.1} parent=5 // pred_fallthru
        _
    $region6: #{tpu_custom_call.1} parent=1 // loop_footer
      %s32 = sadd.s32 1, %s28
    $region7: #{tpu_custom_call.1} parent=1 // loop_footer_branch
      %27 = sbr.rel target = $region3
    $region8: #{tpu_custom_call.1} parent=1 // loop_exit
      _
    %3425 = vsyncpa [#allocation4], 1
    %s3426 = scalar_lea.sflag [#allocation4], 1
    %3427 = vsyncpa %s3426, 1
    %3428 = vsyncpa [#allocation7], 1
    %3429 = vsyncpa [#allocation10], 1
    %3430 = vsyncpa [#allocation5], 1
    %s3431 = scalar_lea.sflag [#allocation5], 1
    %3432 = vsyncpa %s3431, 1

</llo_original>
